<compile_context>
chip_gen: v7x
topology: tpu7x:2x2x1
jax: 0.10.0
libtpu: 0.0.40
codegen_flags: <defaults>
</compile_context>

<pallas_src>
import functools

import jax
import jax.numpy as jnp
from jax.experimental import pallas as pl
from jax.experimental.pallas import tpu as pltpu


# ----------------------------------------------------------------------------
# Fused conv layer kernel:
#   out[m, c] = max over 4 pool taps t of
#               BN( PReLU( A[t, m, :] @ W[:, c] + bias[c] ) )
# A is the tap-ordered im2col matrix for ONE image (grid iterates over batch).
# ----------------------------------------------------------------------------
def _conv_prelu_bn_pool_kernel(a_ref, w_ref, b_ref, s_ref, t_ref, alpha_ref,
                               o_ref):
    # a_ref: (1, 4, M, K) bf16; w_ref: (K, C) bf16
    # b_ref/s_ref/t_ref: (1, C) f32 (conv bias, BN scale, BN shift)
    # alpha_ref: (1,) f32 in SMEM (PReLU slope); o_ref: (1, M, C) bf16
    w = w_ref[...]
    bias = b_ref[...]
    scale = s_ref[...]
    shift = t_ref[...]
    alpha = alpha_ref[0]

    def tap(t):
        y = jnp.dot(a_ref[0, t], w, preferred_element_type=jnp.float32)
        y = y + bias                                            # conv bias
        y = jnp.maximum(y, 0.0) + alpha * jnp.minimum(y, 0.0)   # PReLU
        return y * scale + shift                                # BatchNorm (eval)

    r = tap(0)
    for t in range(1, 4):                                       # 2x2 max-pool
        r = jnp.maximum(r, tap(t))
    o_ref[0] = r.astype(o_ref.dtype)


def conv_prelu_bn_pool(a_taps, w2d, bias, scale, shift, alpha):
    # a_taps: (N, 4, M, K) tap-ordered im2col; w2d: (K, C)
    n, _, m, k = a_taps.shape
    c = w2d.shape[1]
    return pl.pallas_call(
        _conv_prelu_bn_pool_kernel,
        grid=(n,),
        in_specs=[
            pl.BlockSpec((1, 4, m, k), lambda i: (i, 0, 0, 0)),
            pl.BlockSpec((k, c), lambda i: (0, 0)),
            pl.BlockSpec((1, c), lambda i: (0, 0)),
            pl.BlockSpec((1, c), lambda i: (0, 0)),
            pl.BlockSpec((1, c), lambda i: (0, 0)),
            pl.BlockSpec(memory_space=pltpu.MemorySpace.SMEM),
        ],
        out_specs=pl.BlockSpec((1, m, c), lambda i: (i, 0, 0)),
        out_shape=jax.ShapeDtypeStruct((n, m, c), jnp.bfloat16),
        compiler_params=pltpu.CompilerParams(
            dimension_semantics=("parallel",)),   # one image per core (v7x)
    )(a_taps.astype(jnp.bfloat16), w2d.astype(jnp.bfloat16),
      bias.reshape(1, c).astype(jnp.float32),
      scale.reshape(1, c).astype(jnp.float32),
      shift.reshape(1, c).astype(jnp.float32),
      jnp.asarray(alpha, jnp.float32).reshape(1,))


# ----------------------------------------------------------------------------
# Fused FC head: out = L2_normalize(x @ W + b, dim=1)   (matches F.normalize)
# ----------------------------------------------------------------------------
def _fc_l2norm_kernel(a_ref, w_ref, b_ref, o_ref):
    y = jnp.dot(a_ref[...], w_ref[...], preferred_element_type=jnp.float32)
    y = y + b_ref[...]
    nrm = jnp.sqrt(jnp.sum(y * y, axis=-1, keepdims=True))
    o_ref[...] = y / jnp.maximum(nrm, 1e-12)       # F.normalize eps = 1e-12


def fc_l2_normalize(x, w, bias):
    m, k = x.shape
    n = w.shape[1]
    return pl.pallas_call(
        _fc_l2norm_kernel,
        grid=(1,),
        in_specs=[
            pl.BlockSpec((m, k), lambda i: (0, 0)),
            pl.BlockSpec((k, n), lambda i: (0, 0)),
            pl.BlockSpec((1, n), lambda i: (0, 0)),
        ],
        out_specs=pl.BlockSpec((m, n), lambda i: (0, 0)),
        out_shape=jax.ShapeDtypeStruct((m, n), jnp.float32),
    )(x.astype(jnp.bfloat16), w.astype(jnp.bfloat16),
      bias.reshape(1, n).astype(jnp.float32))


# ----------------------------------------------------------------------------
# Glue: im2col grouped by the 4 pooling taps.  Row m of tap (dy,dx) is the
# conv patch for output pixel (2*hp+dy, 2*wp+dx); the kernel max-reduces taps,
# so the un-pooled conv activation is never materialized in HBM.
# ----------------------------------------------------------------------------
def im2col_pooled(x, k, pad):
    # x: (N, H, W, C) NHWC -> (N, 4, Hp*Wp, k*k*C), feature order (kh, kw, c)
    n, h, w, c = x.shape
    ho = h + 2 * pad - k + 1
    wo = w + 2 * pad - k + 1
    hp, wp = ho // 2, wo // 2                       # floor-mode MaxPool2d(2)
    xp = jnp.pad(x, ((0, 0), (pad, pad), (pad, pad), (0, 0)))
    taps = []
    for dy in range(2):
        for dx in range(2):
            cols = []
            for i in range(k):
                for j in range(k):
                    cols.append(xp[:, dy + i:dy + i + 2 * hp:2,
                                   dx + j:dx + j + 2 * wp:2, :])
            patch = jnp.stack(cols, axis=3)          # (N, Hp, Wp, k*k, C)
            taps.append(patch.reshape(n, hp * wp, k * k * c))
    return jnp.stack(taps, axis=1), (hp, wp)


# ----------------------------------------------------------------------------
# Parameters (deterministic, synthetic).  BatchNorm at default init
# (gamma=1, beta=0, running stats 0/1, eps=1e-5); PReLU slope 0.25.
# ----------------------------------------------------------------------------
def init_params(key):
    ks = jax.random.split(key, 6)
    eps = 1e-5

    def bn_affine(c):
        gamma, beta = jnp.ones((c,), jnp.float32), jnp.zeros((c,), jnp.float32)
        mean, var = jnp.zeros((c,), jnp.float32), jnp.ones((c,), jnp.float32)
        scale = gamma / jnp.sqrt(var + eps)
        shift = beta - mean * scale
        return scale, shift

    bn1_scale, bn1_shift = bn_affine(64)
    bn2_scale, bn2_shift = bn_affine(64)
    return dict(
        # Conv weights in (kh, kw, cin, cout); real PyTorch Conv2d weights
        # (cout, cin, kh, kw) must be permuted with .transpose(2, 3, 1, 0).
        w1=jax.random.normal(ks[0], (4, 4, 1, 64), jnp.float32) * 0.1,
        b1=jax.random.normal(ks[1], (64,), jnp.float32) * 0.01,
        w2=jax.random.normal(ks[2], (4, 4, 64, 64), jnp.float32) * 0.02,
        b2=jax.random.normal(ks[3], (64,), jnp.float32) * 0.01,
        # fc weight (in_features, out_features); rows in PyTorch (c, h, w)
        # flatten order (forward transposes NHWC -> NCHW before flattening).
        wfc=jax.random.normal(ks[4], (64 * 6 * 6, 128), jnp.float32) * 0.02,
        bfc=jax.random.normal(ks[5], (128,), jnp.float32) * 0.01,
        bn1_scale=bn1_scale, bn1_shift=bn1_shift,
        bn2_scale=bn2_scale, bn2_shift=bn2_shift,
        prelu1=jnp.float32(0.25), prelu2=jnp.float32(0.25),
    )


# ----------------------------------------------------------------------------
# Full forward pass (matches FENet1.forward, eval-mode semantics)
# ----------------------------------------------------------------------------
def fenet1_forward(x_nchw, p):
    n = x_nchw.shape[0]
    x = jnp.transpose(x_nchw, (0, 2, 3, 1))          # NCHW -> NHWC (C=1)

    # Conv2d(1,64,k=4,pad=2) -> PReLU -> BN -> MaxPool2d(2): 28 -> 29 -> 14
    a1, (hp1, wp1) = im2col_pooled(x, k=4, pad=2)    # (N, 4, 196, 16)
    y1 = conv_prelu_bn_pool(a1, p['w1'].reshape(-1, 64), p['b1'],
                            p['bn1_scale'], p['bn1_shift'], p['prelu1'])
    y1 = y1.reshape(n, hp1, wp1, 64)
    # Dropout2d(0.1): identity in eval-mode forward.

    # Conv2d(64,64,k=4,pad=1) -> PReLU -> BN -> MaxPool2d(2): 14 -> 13 -> 6
    a2, (hp2, wp2) = im2col_pooled(y1, k=4, pad=1)   # (N, 4, 36, 1024)
    y2 = conv_prelu_bn_pool(a2, p['w2'].reshape(-1, 64), p['b2'],
                            p['bn2_scale'], p['bn2_shift'], p['prelu2'])
    y2 = y2.reshape(n, hp2, wp2, 64)
    # Dropout2d(0.3): identity in eval-mode forward.

    # x.view(N, -1) in PyTorch NCHW order (C, H, W), then Linear + F.normalize
    feat = jnp.transpose(y2, (0, 3, 1, 2)).reshape(n, 64 * 6 * 6)
    return fc_l2_normalize(feat, p['wfc'], p['bfc'])


if __name__ == "__main__":
    key = jax.random.PRNGKey(0)
    kx, kp = jax.random.split(key)
    # FENet1's fc expects 64*6*6 features => 28x28 single-channel input.
    x = jax.random.normal(kx, (2, 1, 28, 28), jnp.float32)
    params = init_params(kp)

    out = jax.jit(fenet1_forward)(x, params)
    out = jax.block_until_ready(out)

    assert out.shape == (2, 128), out.shape
    assert bool(jnp.all(jnp.isfinite(out)))
    # F.normalize(p=2, dim=1): every row must have unit L2 norm.
    norms = jnp.linalg.norm(out, axis=1)
    assert bool(jnp.allclose(norms, 1.0, atol=1e-3)), norms
    print("KERNEL_OK")
</pallas_src>

<mosaic_0001>
module attributes {stable_mosaic.version = 11 : i64} {
  func.func @_conv_prelu_bn_pool_kernel(%arg0: i32, %arg1: memref<1x4x196x16xbf16, #tpu.memory_space<vmem>>, %arg2: memref<16x64xbf16, #tpu.memory_space<vmem>>, %arg3: memref<1x64xf32, #tpu.memory_space<vmem>>, %arg4: memref<1x64xf32, #tpu.memory_space<vmem>>, %arg5: memref<1x64xf32, #tpu.memory_space<vmem>>, %arg6: memref<1xf32, #tpu.memory_space<smem>>, %arg7: memref<1x196x64xbf16, #tpu.memory_space<vmem>>) attributes {dimension_semantics = [#tpu.dimension_semantics<parallel>], iteration_bounds = array<i64: 2>, scalar_prefetch = 0 : i64, scratch_operands = 0 : i64, tpu.core_type = #tpu.core_type<tc>, window_params = [{transform_indices = @transform_0, window_bounds = array<i64: 1, 4, 196, 16>}, {pipeline_mode = #tpu.pipeline_mode<synchronous>, transform_indices = @transform_1, window_bounds = array<i64: 16, 64>}, {pipeline_mode = #tpu.pipeline_mode<synchronous>, transform_indices = @transform_2, window_bounds = array<i64: 1, 64>}, {pipeline_mode = #tpu.pipeline_mode<synchronous>, transform_indices = @transform_3, window_bounds = array<i64: 1, 64>}, {pipeline_mode = #tpu.pipeline_mode<synchronous>, transform_indices = @transform_4, window_bounds = array<i64: 1, 64>}, {transform_indices = @transform_5, window_bounds = array<i64: 1>}, {transform_indices = @transform_6, window_bounds = array<i64: 1, 196, 64>}]} {
    %c0 = arith.constant 0 : index
    %c0_0 = arith.constant 0 : index
    %0 = vector.load %arg2[%c0, %c0_0] : memref<16x64xbf16, #tpu.memory_space<vmem>>, vector<16x64xbf16>
    %c0_1 = arith.constant 0 : index
    %c0_2 = arith.constant 0 : index
    %1 = vector.load %arg3[%c0_1, %c0_2] : memref<1x64xf32, #tpu.memory_space<vmem>>, vector<1x64xf32>
    %c0_3 = arith.constant 0 : index
    %c0_4 = arith.constant 0 : index
    %2 = vector.load %arg4[%c0_3, %c0_4] : memref<1x64xf32, #tpu.memory_space<vmem>>, vector<1x64xf32>
    %c0_5 = arith.constant 0 : index
    %c0_6 = arith.constant 0 : index
    %3 = vector.load %arg5[%c0_5, %c0_6] : memref<1x64xf32, #tpu.memory_space<vmem>>, vector<1x64xf32>
    %c0_7 = arith.constant 0 : index
    %4 = memref.load %arg6[%c0_7] : memref<1xf32, #tpu.memory_space<smem>>
    %c0_8 = arith.constant 0 : index
    %c0_9 = arith.constant 0 : index
    %c0_10 = arith.constant 0 : index
    %c0_11 = arith.constant 0 : index
    %5 = vector.load %arg1[%c0_8, %c0_9, %c0_10, %c0_11] : memref<1x4x196x16xbf16, #tpu.memory_space<vmem>>, vector<1x1x196x16xbf16>
    %6 = vector.shape_cast %5 : vector<1x1x196x16xbf16> to vector<196x16xbf16>
    %cst = arith.constant dense<0.000000e+00> : vector<196x64xf32>
    %7 = tpu.matmul %6, %0, %cst {dimension_numbers = #tpu.dot_dimension_numbers<[1], [0], [0], [1], [0, 0, 1, 1], [], []>} : vector<196x16xbf16>, vector<16x64xbf16>, vector<196x64xf32> -> vector<196x64xf32>
    %8 = vector.broadcast %1 : vector<1x64xf32> to vector<196x64xf32>
    %9 = arith.addf %7, %8 : vector<196x64xf32>
    %cst_12 = arith.constant 0.000000e+00 : f32
    %10 = vector.broadcast %cst_12 : f32 to vector<196x64xf32>
    %11 = arith.maximumf %9, %10 : vector<196x64xf32>
    %cst_13 = arith.constant 0.000000e+00 : f32
    %12 = vector.broadcast %cst_13 : f32 to vector<196x64xf32>
    %13 = arith.minimumf %9, %12 : vector<196x64xf32>
    %14 = vector.broadcast %4 : f32 to vector<196x64xf32>
    %15 = arith.mulf %14, %13 : vector<196x64xf32>
    %16 = arith.addf %11, %15 : vector<196x64xf32>
    %17 = vector.broadcast %2 : vector<1x64xf32> to vector<196x64xf32>
    %18 = arith.mulf %16, %17 : vector<196x64xf32>
    %19 = vector.broadcast %3 : vector<1x64xf32> to vector<196x64xf32>
    %20 = arith.addf %18, %19 : vector<196x64xf32>
    %c0_14 = arith.constant 0 : index
    %c1 = arith.constant 1 : index
    %c0_15 = arith.constant 0 : index
    %c0_16 = arith.constant 0 : index
    %21 = vector.load %arg1[%c0_14, %c1, %c0_15, %c0_16] : memref<1x4x196x16xbf16, #tpu.memory_space<vmem>>, vector<1x1x196x16xbf16>
    %22 = vector.shape_cast %21 : vector<1x1x196x16xbf16> to vector<196x16xbf16>
    %cst_17 = arith.constant dense<0.000000e+00> : vector<196x64xf32>
    %23 = tpu.matmul %22, %0, %cst_17 {dimension_numbers = #tpu.dot_dimension_numbers<[1], [0], [0], [1], [0, 0, 1, 1], [], []>} : vector<196x16xbf16>, vector<16x64xbf16>, vector<196x64xf32> -> vector<196x64xf32>
    %24 = vector.broadcast %1 : vector<1x64xf32> to vector<196x64xf32>
    %25 = arith.addf %23, %24 : vector<196x64xf32>
    %cst_18 = arith.constant 0.000000e+00 : f32
    %26 = vector.broadcast %cst_18 : f32 to vector<196x64xf32>
    %27 = arith.maximumf %25, %26 : vector<196x64xf32>
    %cst_19 = arith.constant 0.000000e+00 : f32
    %28 = vector.broadcast %cst_19 : f32 to vector<196x64xf32>
    %29 = arith.minimumf %25, %28 : vector<196x64xf32>
    %30 = vector.broadcast %4 : f32 to vector<196x64xf32>
    %31 = arith.mulf %30, %29 : vector<196x64xf32>
    %32 = arith.addf %27, %31 : vector<196x64xf32>
    %33 = vector.broadcast %2 : vector<1x64xf32> to vector<196x64xf32>
    %34 = arith.mulf %32, %33 : vector<196x64xf32>
    %35 = vector.broadcast %3 : vector<1x64xf32> to vector<196x64xf32>
    %36 = arith.addf %34, %35 : vector<196x64xf32>
    %37 = arith.maximumf %20, %36 : vector<196x64xf32>
    %c0_20 = arith.constant 0 : index
    %c2 = arith.constant 2 : index
    %c0_21 = arith.constant 0 : index
    %c0_22 = arith.constant 0 : index
    %38 = vector.load %arg1[%c0_20, %c2, %c0_21, %c0_22] : memref<1x4x196x16xbf16, #tpu.memory_space<vmem>>, vector<1x1x196x16xbf16>
    %39 = vector.shape_cast %38 : vector<1x1x196x16xbf16> to vector<196x16xbf16>
    %cst_23 = arith.constant dense<0.000000e+00> : vector<196x64xf32>
    %40 = tpu.matmul %39, %0, %cst_23 {dimension_numbers = #tpu.dot_dimension_numbers<[1], [0], [0], [1], [0, 0, 1, 1], [], []>} : vector<196x16xbf16>, vector<16x64xbf16>, vector<196x64xf32> -> vector<196x64xf32>
    %41 = vector.broadcast %1 : vector<1x64xf32> to vector<196x64xf32>
    %42 = arith.addf %40, %41 : vector<196x64xf32>
    %cst_24 = arith.constant 0.000000e+00 : f32
    %43 = vector.broadcast %cst_24 : f32 to vector<196x64xf32>
    %44 = arith.maximumf %42, %43 : vector<196x64xf32>
    %cst_25 = arith.constant 0.000000e+00 : f32
    %45 = vector.broadcast %cst_25 : f32 to vector<196x64xf32>
    %46 = arith.minimumf %42, %45 : vector<196x64xf32>
    %47 = vector.broadcast %4 : f32 to vector<196x64xf32>
    %48 = arith.mulf %47, %46 : vector<196x64xf32>
    %49 = arith.addf %44, %48 : vector<196x64xf32>
    %50 = vector.broadcast %2 : vector<1x64xf32> to vector<196x64xf32>
    %51 = arith.mulf %49, %50 : vector<196x64xf32>
    %52 = vector.broadcast %3 : vector<1x64xf32> to vector<196x64xf32>
    %53 = arith.addf %51, %52 : vector<196x64xf32>
    %54 = arith.maximumf %37, %53 : vector<196x64xf32>
    %c0_26 = arith.constant 0 : index
    %c3 = arith.constant 3 : index
    %c0_27 = arith.constant 0 : index
    %c0_28 = arith.constant 0 : index
    %55 = vector.load %arg1[%c0_26, %c3, %c0_27, %c0_28] : memref<1x4x196x16xbf16, #tpu.memory_space<vmem>>, vector<1x1x196x16xbf16>
    %56 = vector.shape_cast %55 : vector<1x1x196x16xbf16> to vector<196x16xbf16>
    %cst_29 = arith.constant dense<0.000000e+00> : vector<196x64xf32>
    %57 = tpu.matmul %56, %0, %cst_29 {dimension_numbers = #tpu.dot_dimension_numbers<[1], [0], [0], [1], [0, 0, 1, 1], [], []>} : vector<196x16xbf16>, vector<16x64xbf16>, vector<196x64xf32> -> vector<196x64xf32>
    %58 = vector.broadcast %1 : vector<1x64xf32> to vector<196x64xf32>
    %59 = arith.addf %57, %58 : vector<196x64xf32>
    %cst_30 = arith.constant 0.000000e+00 : f32
    %60 = vector.broadcast %cst_30 : f32 to vector<196x64xf32>
    %61 = arith.maximumf %59, %60 : vector<196x64xf32>
    %cst_31 = arith.constant 0.000000e+00 : f32
    %62 = vector.broadcast %cst_31 : f32 to vector<196x64xf32>
    %63 = arith.minimumf %59, %62 : vector<196x64xf32>
    %64 = vector.broadcast %4 : f32 to vector<196x64xf32>
    %65 = arith.mulf %64, %63 : vector<196x64xf32>
    %66 = arith.addf %61, %65 : vector<196x64xf32>
    %67 = vector.broadcast %2 : vector<1x64xf32> to vector<196x64xf32>
    %68 = arith.mulf %66, %67 : vector<196x64xf32>
    %69 = vector.broadcast %3 : vector<1x64xf32> to vector<196x64xf32>
    %70 = arith.addf %68, %69 : vector<196x64xf32>
    %71 = arith.maximumf %54, %70 : vector<196x64xf32>
    %72 = arith.truncf %71 : vector<196x64xf32> to vector<196x64xbf16>
    %c0_32 = arith.constant 0 : index
    %c0_33 = arith.constant 0 : index
    %c0_34 = arith.constant 0 : index
    %73 = vector.load %arg7[%c0_32, %c0_33, %c0_34] : memref<1x196x64xbf16, #tpu.memory_space<vmem>>, vector<1x196x64xbf16>
    %74 = vector.shape_cast %73 : vector<1x196x64xbf16> to vector<196x64xbf16>
    %75 = vector.shape_cast %72 : vector<196x64xbf16> to vector<1x196x64xbf16>
    tpu.vector_store %arg7[%c0_32, %c0_33, %c0_34], %75 {strides = array<i32>} : memref<1x196x64xbf16, #tpu.memory_space<vmem>>, vector<1x196x64xbf16>,
    return
  }
  func.func @transform_0(%arg0: i32) -> (i32, i32, i32, i32) {
    %c0_i32 = arith.constant 0 : i32
    %c0_i32_0 = arith.constant 0 : i32
    %c0_i32_1 = arith.constant 0 : i32
    %c0_i32_2 = arith.constant 0 : i32
    return %arg0, %c0_i32, %c0_i32_0, %c0_i32_1 : i32, i32, i32, i32
  }
  func.func @transform_1(%arg0: i32) -> (i32, i32) {
    %c0_i32 = arith.constant 0 : i32
    %c0_i32_0 = arith.constant 0 : i32
    %c0_i32_1 = arith.constant 0 : i32
    return %c0_i32, %c0_i32_0 : i32, i32
  }
  func.func @transform_2(%arg0: i32) -> (i32, i32) {
    %c0_i32 = arith.constant 0 : i32
    %c0_i32_0 = arith.constant 0 : i32
    %c0_i32_1 = arith.constant 0 : i32
    return %c0_i32, %c0_i32_0 : i32, i32
  }
  func.func @transform_3(%arg0: i32) -> (i32, i32) {
    %c0_i32 = arith.constant 0 : i32
    %c0_i32_0 = arith.constant 0 : i32
    %c0_i32_1 = arith.constant 0 : i32
    return %c0_i32, %c0_i32_0 : i32, i32
  }
  func.func @transform_4(%arg0: i32) -> (i32, i32) {
    %c0_i32 = arith.constant 0 : i32
    %c0_i32_0 = arith.constant 0 : i32
    %c0_i32_1 = arith.constant 0 : i32
    return %c0_i32, %c0_i32_0 : i32, i32
  }
  func.func @transform_5(%arg0: i32) -> i32 {
    %c0_i32 = arith.constant 0 : i32
    %c0_i32_0 = arith.constant 0 : i32
    return %c0_i32 : i32
  }
  func.func @transform_6(%arg0: i32) -> (i32, i32, i32) {
    %c0_i32 = arith.constant 0 : i32
    %c0_i32_0 = arith.constant 0 : i32
    %c0_i32_1 = arith.constant 0 : i32
    return %arg0, %c0_i32, %c0_i32_0 : i32, i32, i32
  }
}

module attributes {stable_mosaic.version = 11 : i64} {
  func.func @_conv_prelu_bn_pool_kernel(%arg0: i32, %arg1: memref<1x4x36x1024xbf16, #tpu.memory_space<vmem>>, %arg2: memref<1024x64xbf16, #tpu.memory_space<vmem>>, %arg3: memref<1x64xf32, #tpu.memory_space<vmem>>, %arg4: memref<1x64xf32, #tpu.memory_space<vmem>>, %arg5: memref<1x64xf32, #tpu.memory_space<vmem>>, %arg6: memref<1xf32, #tpu.memory_space<smem>>, %arg7: memref<1x36x64xbf16, #tpu.memory_space<vmem>>) attributes {dimension_semantics = [#tpu.dimension_semantics<parallel>], iteration_bounds = array<i64: 2>, scalar_prefetch = 0 : i64, scratch_operands = 0 : i64, tpu.core_type = #tpu.core_type<tc>, window_params = [{transform_indices = @transform_0, window_bounds = array<i64: 1, 4, 36, 1024>}, {pipeline_mode = #tpu.pipeline_mode<synchronous>, transform_indices = @transform_1, window_bounds = array<i64: 1024, 64>}, {pipeline_mode = #tpu.pipeline_mode<synchronous>, transform_indices = @transform_2, window_bounds = array<i64: 1, 64>}, {pipeline_mode = #tpu.pipeline_mode<synchronous>, transform_indices = @transform_3, window_bounds = array<i64: 1, 64>}, {pipeline_mode = #tpu.pipeline_mode<synchronous>, transform_indices = @transform_4, window_bounds = array<i64: 1, 64>}, {transform_indices = @transform_5, window_bounds = array<i64: 1>}, {transform_indices = @transform_6, window_bounds = array<i64: 1, 36, 64>}]} {
    %c0 = arith.constant 0 : index
    %c0_0 = arith.constant 0 : index
    %0 = vector.load %arg2[%c0, %c0_0] : memref<1024x64xbf16, #tpu.memory_space<vmem>>, vector<1024x64xbf16>
    %c0_1 = arith.constant 0 : index
    %c0_2 = arith.constant 0 : index
    %1 = vector.load %arg3[%c0_1, %c0_2] : memref<1x64xf32, #tpu.memory_space<vmem>>, vector<1x64xf32>
    %c0_3 = arith.constant 0 : index
    %c0_4 = arith.constant 0 : index
    %2 = vector.load %arg4[%c0_3, %c0_4] : memref<1x64xf32, #tpu.memory_space<vmem>>, vector<1x64xf32>
    %c0_5 = arith.constant 0 : index
    %c0_6 = arith.constant 0 : index
    %3 = vector.load %arg5[%c0_5, %c0_6] : memref<1x64xf32, #tpu.memory_space<vmem>>, vector<1x64xf32>
    %c0_7 = arith.constant 0 : index
    %4 = memref.load %arg6[%c0_7] : memref<1xf32, #tpu.memory_space<smem>>
    %c0_8 = arith.constant 0 : index
    %c0_9 = arith.constant 0 : index
    %c0_10 = arith.constant 0 : index
    %c0_11 = arith.constant 0 : index
    %5 = vector.load %arg1[%c0_8, %c0_9, %c0_10, %c0_11] : memref<1x4x36x1024xbf16, #tpu.memory_space<vmem>>, vector<1x1x36x1024xbf16>
    %6 = vector.shape_cast %5 : vector<1x1x36x1024xbf16> to vector<36x1024xbf16>
    %cst = arith.constant dense<0.000000e+00> : vector<36x64xf32>
    %7 = tpu.matmul %6, %0, %cst {dimension_numbers = #tpu.dot_dimension_numbers<[1], [0], [0], [1], [0, 0, 1, 1], [], []>} : vector<36x1024xbf16>, vector<1024x64xbf16>, vector<36x64xf32> -> vector<36x64xf32>
    %8 = vector.broadcast %1 : vector<1x64xf32> to vector<36x64xf32>
    %9 = arith.addf %7, %8 : vector<36x64xf32>
    %cst_12 = arith.constant 0.000000e+00 : f32
    %10 = vector.broadcast %cst_12 : f32 to vector<36x64xf32>
    %11 = arith.maximumf %9, %10 : vector<36x64xf32>
    %cst_13 = arith.constant 0.000000e+00 : f32
    %12 = vector.broadcast %cst_13 : f32 to vector<36x64xf32>
    %13 = arith.minimumf %9, %12 : vector<36x64xf32>
    %14 = vector.broadcast %4 : f32 to vector<36x64xf32>
    %15 = arith.mulf %14, %13 : vector<36x64xf32>
    %16 = arith.addf %11, %15 : vector<36x64xf32>
    %17 = vector.broadcast %2 : vector<1x64xf32> to vector<36x64xf32>
    %18 = arith.mulf %16, %17 : vector<36x64xf32>
    %19 = vector.broadcast %3 : vector<1x64xf32> to vector<36x64xf32>
    %20 = arith.addf %18, %19 : vector<36x64xf32>
    %c0_14 = arith.constant 0 : index
    %c1 = arith.constant 1 : index
    %c0_15 = arith.constant 0 : index
    %c0_16 = arith.constant 0 : index
    %21 = vector.load %arg1[%c0_14, %c1, %c0_15, %c0_16] : memref<1x4x36x1024xbf16, #tpu.memory_space<vmem>>, vector<1x1x36x1024xbf16>
    %22 = vector.shape_cast %21 : vector<1x1x36x1024xbf16> to vector<36x1024xbf16>
    %cst_17 = arith.constant dense<0.000000e+00> : vector<36x64xf32>
    %23 = tpu.matmul %22, %0, %cst_17 {dimension_numbers = #tpu.dot_dimension_numbers<[1], [0], [0], [1], [0, 0, 1, 1], [], []>} : vector<36x1024xbf16>, vector<1024x64xbf16>, vector<36x64xf32> -> vector<36x64xf32>
    %24 = vector.broadcast %1 : vector<1x64xf32> to vector<36x64xf32>
    %25 = arith.addf %23, %24 : vector<36x64xf32>
    %cst_18 = arith.constant 0.000000e+00 : f32
    %26 = vector.broadcast %cst_18 : f32 to vector<36x64xf32>
    %27 = arith.maximumf %25, %26 : vector<36x64xf32>
    %cst_19 = arith.constant 0.000000e+00 : f32
    %28 = vector.broadcast %cst_19 : f32 to vector<36x64xf32>
    %29 = arith.minimumf %25, %28 : vector<36x64xf32>
    %30 = vector.broadcast %4 : f32 to vector<36x64xf32>
    %31 = arith.mulf %30, %29 : vector<36x64xf32>
    %32 = arith.addf %27, %31 : vector<36x64xf32>
    %33 = vector.broadcast %2 : vector<1x64xf32> to vector<36x64xf32>
    %34 = arith.mulf %32, %33 : vector<36x64xf32>
    %35 = vector.broadcast %3 : vector<1x64xf32> to vector<36x64xf32>
    %36 = arith.addf %34, %35 : vector<36x64xf32>
    %37 = arith.maximumf %20, %36 : vector<36x64xf32>
    %c0_20 = arith.constant 0 : index
    %c2 = arith.constant 2 : index
    %c0_21 = arith.constant 0 : index
    %c0_22 = arith.constant 0 : index
    %38 = vector.load %arg1[%c0_20, %c2, %c0_21, %c0_22] : memref<1x4x36x1024xbf16, #tpu.memory_space<vmem>>, vector<1x1x36x1024xbf16>
    %39 = vector.shape_cast %38 : vector<1x1x36x1024xbf16> to vector<36x1024xbf16>
    %cst_23 = arith.constant dense<0.000000e+00> : vector<36x64xf32>
    %40 = tpu.matmul %39, %0, %cst_23 {dimension_numbers = #tpu.dot_dimension_numbers<[1], [0], [0], [1], [0, 0, 1, 1], [], []>} : vector<36x1024xbf16>, vector<1024x64xbf16>, vector<36x64xf32> -> vector<36x64xf32>
    %41 = vector.broadcast %1 : vector<1x64xf32> to vector<36x64xf32>
    %42 = arith.addf %40, %41 : vector<36x64xf32>
    %cst_24 = arith.constant 0.000000e+00 : f32
    %43 = vector.broadcast %cst_24 : f32 to vector<36x64xf32>
    %44 = arith.maximumf %42, %43 : vector<36x64xf32>
    %cst_25 = arith.constant 0.000000e+00 : f32
    %45 = vector.broadcast %cst_25 : f32 to vector<36x64xf32>
    %46 = arith.minimumf %42, %45 : vector<36x64xf32>
    %47 = vector.broadcast %4 : f32 to vector<36x64xf32>
    %48 = arith.mulf %47, %46 : vector<36x64xf32>
    %49 = arith.addf %44, %48 : vector<36x64xf32>
    %50 = vector.broadcast %2 : vector<1x64xf32> to vector<36x64xf32>
    %51 = arith.mulf %49, %50 : vector<36x64xf32>
    %52 = vector.broadcast %3 : vector<1x64xf32> to vector<36x64xf32>
    %53 = arith.addf %51, %52 : vector<36x64xf32>
    %54 = arith.maximumf %37, %53 : vector<36x64xf32>
    %c0_26 = arith.constant 0 : index
    %c3 = arith.constant 3 : index
    %c0_27 = arith.constant 0 : index
    %c0_28 = arith.constant 0 : index
    %55 = vector.load %arg1[%c0_26, %c3, %c0_27, %c0_28] : memref<1x4x36x1024xbf16, #tpu.memory_space<vmem>>, vector<1x1x36x1024xbf16>
    %56 = vector.shape_cast %55 : vector<1x1x36x1024xbf16> to vector<36x1024xbf16>
    %cst_29 = arith.constant dense<0.000000e+00> : vector<36x64xf32>
    %57 = tpu.matmul %56, %0, %cst_29 {dimension_numbers = #tpu.dot_dimension_numbers<[1], [0], [0], [1], [0, 0, 1, 1], [], []>} : vector<36x1024xbf16>, vector<1024x64xbf16>, vector<36x64xf32> -> vector<36x64xf32>
    %58 = vector.broadcast %1 : vector<1x64xf32> to vector<36x64xf32>
    %59 = arith.addf %57, %58 : vector<36x64xf32>
    %cst_30 = arith.constant 0.000000e+00 : f32
    %60 = vector.broadcast %cst_30 : f32 to vector<36x64xf32>
    %61 = arith.maximumf %59, %60 : vector<36x64xf32>
    %cst_31 = arith.constant 0.000000e+00 : f32
    %62 = vector.broadcast %cst_31 : f32 to vector<36x64xf32>
    %63 = arith.minimumf %59, %62 : vector<36x64xf32>
    %64 = vector.broadcast %4 : f32 to vector<36x64xf32>
    %65 = arith.mulf %64, %63 : vector<36x64xf32>
    %66 = arith.addf %61, %65 : vector<36x64xf32>
    %67 = vector.broadcast %2 : vector<1x64xf32> to vector<36x64xf32>
    %68 = arith.mulf %66, %67 : vector<36x64xf32>
    %69 = vector.broadcast %3 : vector<1x64xf32> to vector<36x64xf32>
    %70 = arith.addf %68, %69 : vector<36x64xf32>
    %71 = arith.maximumf %54, %70 : vector<36x64xf32>
    %72 = arith.truncf %71 : vector<36x64xf32> to vector<36x64xbf16>
    %c0_32 = arith.constant 0 : index
    %c0_33 = arith.constant 0 : index
    %c0_34 = arith.constant 0 : index
    %73 = vector.load %arg7[%c0_32, %c0_33, %c0_34] : memref<1x36x64xbf16, #tpu.memory_space<vmem>>, vector<1x36x64xbf16>
    %74 = vector.shape_cast %73 : vector<1x36x64xbf16> to vector<36x64xbf16>
    %75 = vector.shape_cast %72 : vector<36x64xbf16> to vector<1x36x64xbf16>
    tpu.vector_store %arg7[%c0_32, %c0_33, %c0_34], %75 {strides = array<i32>} : memref<1x36x64xbf16, #tpu.memory_space<vmem>>, vector<1x36x64xbf16>,
    return
  }
  func.func @transform_0(%arg0: i32) -> (i32, i32, i32, i32) {
    %c0_i32 = arith.constant 0 : i32
    %c0_i32_0 = arith.constant 0 : i32
    %c0_i32_1 = arith.constant 0 : i32
    %c0_i32_2 = arith.constant 0 : i32
    return %arg0, %c0_i32, %c0_i32_0, %c0_i32_1 : i32, i32, i32, i32
  }
  func.func @transform_1(%arg0: i32) -> (i32, i32) {
    %c0_i32 = arith.constant 0 : i32
    %c0_i32_0 = arith.constant 0 : i32
    %c0_i32_1 = arith.constant 0 : i32
    return %c0_i32, %c0_i32_0 : i32, i32
  }
  func.func @transform_2(%arg0: i32) -> (i32, i32) {
    %c0_i32 = arith.constant 0 : i32
    %c0_i32_0 = arith.constant 0 : i32
    %c0_i32_1 = arith.constant 0 : i32
    return %c0_i32, %c0_i32_0 : i32, i32
  }
  func.func @transform_3(%arg0: i32) -> (i32, i32) {
    %c0_i32 = arith.constant 0 : i32
    %c0_i32_0 = arith.constant 0 : i32
    %c0_i32_1 = arith.constant 0 : i32
    return %c0_i32, %c0_i32_0 : i32, i32
  }
  func.func @transform_4(%arg0: i32) -> (i32, i32) {
    %c0_i32 = arith.constant 0 : i32
    %c0_i32_0 = arith.constant 0 : i32
    %c0_i32_1 = arith.constant 0 : i32
    return %c0_i32, %c0_i32_0 : i32, i32
  }
  func.func @transform_5(%arg0: i32) -> i32 {
    %c0_i32 = arith.constant 0 : i32
    %c0_i32_0 = arith.constant 0 : i32
    return %c0_i32 : i32
  }
  func.func @transform_6(%arg0: i32) -> (i32, i32, i32) {
    %c0_i32 = arith.constant 0 : i32
    %c0_i32_0 = arith.constant 0 : i32
    %c0_i32_1 = arith.constant 0 : i32
    return %arg0, %c0_i32, %c0_i32_0 : i32, i32, i32
  }
}

module attributes {stable_mosaic.version = 11 : i64} {
  func.func @_fc_l2norm_kernel(%arg0: i32, %arg1: memref<2x2304xbf16, #tpu.memory_space<vmem>>, %arg2: memref<2304x128xbf16, #tpu.memory_space<vmem>>, %arg3: memref<1x128xf32, #tpu.memory_space<vmem>>, %arg4: memref<2x128xf32, #tpu.memory_space<vmem>>) attributes {dimension_semantics = [#tpu.dimension_semantics<arbitrary>], iteration_bounds = array<i64: 1>, scalar_prefetch = 0 : i64, scratch_operands = 0 : i64, tpu.core_type = #tpu.core_type<tc>, window_params = [{pipeline_mode = #tpu.pipeline_mode<synchronous>, transform_indices = @transform_0, window_bounds = array<i64: 2, 2304>}, {pipeline_mode = #tpu.pipeline_mode<synchronous>, transform_indices = @transform_1, window_bounds = array<i64: 2304, 128>}, {pipeline_mode = #tpu.pipeline_mode<synchronous>, transform_indices = @transform_2, window_bounds = array<i64: 1, 128>}, {pipeline_mode = #tpu.pipeline_mode<synchronous>, transform_indices = @transform_3, window_bounds = array<i64: 2, 128>}]} {
    %c0 = arith.constant 0 : index
    %c0_0 = arith.constant 0 : index
    %0 = vector.load %arg1[%c0, %c0_0] : memref<2x2304xbf16, #tpu.memory_space<vmem>>, vector<2x2304xbf16>
    %c0_1 = arith.constant 0 : index
    %c0_2 = arith.constant 0 : index
    %1 = vector.load %arg2[%c0_1, %c0_2] : memref<2304x128xbf16, #tpu.memory_space<vmem>>, vector<2304x128xbf16>
    %cst = arith.constant dense<0.000000e+00> : vector<2x128xf32>
    %2 = tpu.matmul %0, %1, %cst {dimension_numbers = #tpu.dot_dimension_numbers<[1], [0], [0], [1], [0, 0, 1, 1], [], []>} : vector<2x2304xbf16>, vector<2304x128xbf16>, vector<2x128xf32> -> vector<2x128xf32>
    %c0_3 = arith.constant 0 : index
    %c0_4 = arith.constant 0 : index
    %3 = vector.load %arg3[%c0_3, %c0_4] : memref<1x128xf32, #tpu.memory_space<vmem>>, vector<1x128xf32>
    %4 = vector.broadcast %3 : vector<1x128xf32> to vector<2x128xf32>
    %5 = arith.addf %2, %4 : vector<2x128xf32>
    %6 = arith.mulf %5, %5 : vector<2x128xf32>
    %cst_5 = arith.constant dense<0.000000e+00> : vector<2xf32>
    %7 = vector.multi_reduction <add>, %6, %cst_5 [1] : vector<2x128xf32> to vector<2xf32>
    %8 = vector.shape_cast %7 : vector<2xf32> to vector<2x1xf32>
    %9 = math.sqrt %8 : vector<2x1xf32>
    %cst_6 = arith.constant 9.99999996E-13 : f32
    %10 = vector.broadcast %cst_6 : f32 to vector<2x1xf32>
    %11 = arith.maximumf %9, %10 : vector<2x1xf32>
    %12 = vector.broadcast %11 : vector<2x1xf32> to vector<2x128xf32>
    %13 = arith.divf %5, %12 : vector<2x128xf32>
    %c0_7 = arith.constant 0 : index
    %c0_8 = arith.constant 0 : index
    %14 = vector.load %arg4[%c0_7, %c0_8] : memref<2x128xf32, #tpu.memory_space<vmem>>, vector<2x128xf32>
    tpu.vector_store %arg4[%c0_7, %c0_8], %13 {strides = array<i32>} : memref<2x128xf32, #tpu.memory_space<vmem>>, vector<2x128xf32>,
    return
  }
  func.func @transform_0(%arg0: i32) -> (i32, i32) {
    %c0_i32 = arith.constant 0 : i32
    %c0_i32_0 = arith.constant 0 : i32
    %c0_i32_1 = arith.constant 0 : i32
    return %c0_i32, %c0_i32_0 : i32, i32
  }
  func.func @transform_1(%arg0: i32) -> (i32, i32) {
    %c0_i32 = arith.constant 0 : i32
    %c0_i32_0 = arith.constant 0 : i32
    %c0_i32_1 = arith.constant 0 : i32
    return %c0_i32, %c0_i32_0 : i32, i32
  }
  func.func @transform_2(%arg0: i32) -> (i32, i32) {
    %c0_i32 = arith.constant 0 : i32
    %c0_i32_0 = arith.constant 0 : i32
    %c0_i32_1 = arith.constant 0 : i32
    return %c0_i32, %c0_i32_0 : i32, i32
  }
  func.func @transform_3(%arg0: i32) -> (i32, i32) {
    %c0_i32 = arith.constant 0 : i32
    %c0_i32_0 = arith.constant 0 : i32
    %c0_i32_1 = arith.constant 0 : i32
    return %c0_i32, %c0_i32_0 : i32, i32
  }
}

</mosaic_0001>

<llo_original>
// kernel: fenet1_forward.3
$region0: #{fenet1_forward.3}
  #allocation0 [shape = 'u32[]', space=smem, size = 0x4, offset = 0x4, fixed_abs, tag = 'smem constant byte address 0x4 - core index']
  #allocation1 [shape = 'u32[144,128]{1,0:T(1,128)}', space=vmem, size = 0x12000, scoped, tag = 'internal scratch']
  #allocation2 [shape = 'f32[1]{0:T(128)S(6)}', space=smem, size = 0x200, scoped, tag = 'scoped memory for fenet1_forward.3']
  %s0 = inlined_call_operand.vmem [shape: bf16[2,4,196,16], index: 0, kind: input, shape index: {}]
  %s1 = inlined_call_operand.vmem [shape: bf16[16,64], index: 1, kind: input, shape index: {}]
  %s2 = inlined_call_operand.vmem [shape: f32[1,64], index: 2, kind: input, shape index: {}]
  %s3 = inlined_call_operand.vmem [shape: f32[1,64], index: 3, kind: input, shape index: {}]
  %s4 = inlined_call_operand.vmem [shape: f32[1,64], index: 4, kind: input, shape index: {}]
  %s5 = inlined_call_operand.<no memory space> [shape: f32[1], index: 5, kind: input, shape index: {}]
  %s6 = inlined_call_operand.vmem [shape: bf16[2,196,64], index: 6, kind: output, shape index: {}]
  %s7 = sld [smem:[#allocation0]]
  $region57: #{fenet1_forward.3} parent=0
    _
  %s9 = ssub.s32 1, %s7
  %s10 = scalar_select 0, %s9, %s7
  %11 = sst [smem:[#allocation2]] %s5
  loop: start=0, step=1, limit=4
  $region2: #{fenet1_forward.3} parent=0 // loop_pre_header
    _
  $region3: #{fenet1_forward.3} parent=0 // loop_header
    %s13 = sphi 0, %s17
    %p14 = scmp.ge.s32.totalorder %s13, 4
    %s23 = sphi 0, %s25
    %s26 = sphi 0, %s23
    %s27 = sphi 0, %s26
    %s43 = sphi 0, %s27
    %s47 = sphi 0, %s47
    %s49 = sphi 0, %s47
    %s50 = sphi 0, %s49
    %s64 = sphi 0, %s50
    %s68 = sphi 0, %s68
    %s70 = sphi 0, %s68
    %s71 = sphi 0, %s70
    %s85 = sphi 0, %s71
    %s89 = sphi 0, %s89
    %s91 = sphi 0, %s89
    %s92 = sphi 0, %s91
    %s106 = sphi 0, %s92
    %s110 = sphi 0, %s110
    %s112 = sphi 0, %s110
    %s113 = sphi 0, %s112
    %s127 = sphi 0, %s113
    %s131 = sphi 0, %s131
    %s133 = sphi 0, %s131
    %s134 = sphi 0, %s133
    %s148 = sphi 0, %s134
    %s154 = sphi 0, %s156
    %s157 = sphi 0, %s154
    %s158 = sphi 0, %s157
    %s174 = sphi 0, %s158
  $region4: #{fenet1_forward.3} parent=0 // loop_header_branch
    %16 = sbr.rel (%p14) target = $region8
  $region5: #{fenet1_forward.3} parent=0 // loop_body
    %s18 = ssub.s32 %s13, 1
    %s19 = ssub.s32 %s13, 2
    %s20 = sadd.s32 %s13, 1
    %s21 = ssub.s32 %s13, %s20
    %p22 = scmp.eq.s32.totalorder %s21, 0
    %s24 = sadd.s32 %s23, 1
    %s25 = scalar_select %p22, %s23, %s24
    %p28 = pneg %p22
    %p29 = scmp.eq.s32.totalorder %s13, 1
    %p30 = por %p28, %p29
    %p31 = scmp.ne.s32.totalorder %s23, %s26
    %p32 = scmp.eq.s32.totalorder %s13, 0
    %p33 = por %p31, %p32
    %p34 = scmp.ne.s32.totalorder %s23, %s26
    %p35 = scmp.eq.s32.totalorder %s18, 1
    %p36 = por %p34, %p35
    %p37 = scmp.ne.s32.totalorder %s26, %s27
    %p38 = scmp.eq.s32.totalorder %s18, 0
    %p39 = por %p37, %p38
    %p40 = scmp.ne.s32.totalorder %s26, %s27
    %p41 = scmp.eq.s32.totalorder %s19, 1
    %p42 = por %p40, %p41
    %p44 = scmp.ne.s32.totalorder %s27, %s43
    %p45 = scmp.eq.s32.totalorder %s19, 0
    %p46 = por %p44, %p45
    %s48 = sadd.s32 %s47, 1
    %p51 = scmp.eq.s32.totalorder %s13, 1
    %p52 = scmp.ne.s32.totalorder %s47, %s49
    %p53 = scmp.eq.s32.totalorder %s13, 0
    %p54 = por %p52, %p53
    %p55 = scmp.ne.s32.totalorder %s47, %s49
    %p56 = scmp.eq.s32.totalorder %s18, 1
    %p57 = por %p55, %p56
    %p58 = scmp.ne.s32.totalorder %s49, %s50
    %p59 = scmp.eq.s32.totalorder %s18, 0
    %p60 = por %p58, %p59
    %p61 = scmp.ne.s32.totalorder %s49, %s50
    %p62 = scmp.eq.s32.totalorder %s19, 1
    %p63 = por %p61, %p62
    %p65 = scmp.ne.s32.totalorder %s50, %s64
    %p66 = scmp.eq.s32.totalorder %s19, 0
    %p67 = por %p65, %p66
    %s69 = sadd.s32 %s68, 1
    %p72 = scmp.eq.s32.totalorder %s13, 1
    %p73 = scmp.ne.s32.totalorder %s68, %s70
    %p74 = scmp.eq.s32.totalorder %s13, 0
    %p75 = por %p73, %p74
    %p76 = scmp.ne.s32.totalorder %s68, %s70
    %p77 = scmp.eq.s32.totalorder %s18, 1
    %p78 = por %p76, %p77
    %p79 = scmp.ne.s32.totalorder %s70, %s71
    %p80 = scmp.eq.s32.totalorder %s18, 0
    %p81 = por %p79, %p80
    %p82 = scmp.ne.s32.totalorder %s70, %s71
    %p83 = scmp.eq.s32.totalorder %s19, 1
    %p84 = por %p82, %p83
    %p86 = scmp.ne.s32.totalorder %s71, %s85
    %p87 = scmp.eq.s32.totalorder %s19, 0
    %p88 = por %p86, %p87
    %s90 = sadd.s32 %s89, 1
    %p93 = scmp.eq.s32.totalorder %s13, 1
    %p94 = scmp.ne.s32.totalorder %s89, %s91
    %p95 = scmp.eq.s32.totalorder %s13, 0
    %p96 = por %p94, %p95
    %p97 = scmp.ne.s32.totalorder %s89, %s91
    %p98 = scmp.eq.s32.totalorder %s18, 1
    %p99 = por %p97, %p98
    %p100 = scmp.ne.s32.totalorder %s91, %s92
    %p101 = scmp.eq.s32.totalorder %s18, 0
    %p102 = por %p100, %p101
    %p103 = scmp.ne.s32.totalorder %s91, %s92
    %p104 = scmp.eq.s32.totalorder %s19, 1
    %p105 = por %p103, %p104
    %p107 = scmp.ne.s32.totalorder %s92, %s106
    %p108 = scmp.eq.s32.totalorder %s19, 0
    %p109 = por %p107, %p108
    %s111 = sadd.s32 %s110, 1
    %p114 = scmp.eq.s32.totalorder %s13, 1
    %p115 = scmp.ne.s32.totalorder %s110, %s112
    %p116 = scmp.eq.s32.totalorder %s13, 0
    %p117 = por %p115, %p116
    %p118 = scmp.ne.s32.totalorder %s110, %s112
    %p119 = scmp.eq.s32.totalorder %s18, 1
    %p120 = por %p118, %p119
    %p121 = scmp.ne.s32.totalorder %s112, %s113
    %p122 = scmp.eq.s32.totalorder %s18, 0
    %p123 = por %p121, %p122
    %p124 = scmp.ne.s32.totalorder %s112, %s113
    %p125 = scmp.eq.s32.totalorder %s19, 1
    %p126 = por %p124, %p125
    %p128 = scmp.ne.s32.totalorder %s113, %s127
    %p129 = scmp.eq.s32.totalorder %s19, 0
    %p130 = por %p128, %p129
    %s132 = sadd.s32 %s131, 1
    %p135 = scmp.eq.s32.totalorder %s13, 1
    %p136 = scmp.ne.s32.totalorder %s131, %s133
    %p137 = scmp.eq.s32.totalorder %s13, 0
    %p138 = por %p136, %p137
    %p139 = scmp.ne.s32.totalorder %s131, %s133
    %p140 = scmp.eq.s32.totalorder %s18, 1
    %p141 = por %p139, %p140
    %p142 = scmp.ne.s32.totalorder %s133, %s134
    %p143 = scmp.eq.s32.totalorder %s18, 0
    %p144 = por %p142, %p143
    %p145 = scmp.ne.s32.totalorder %s133, %s134
    %p146 = scmp.eq.s32.totalorder %s19, 1
    %p147 = por %p145, %p146
    %p149 = scmp.ne.s32.totalorder %s134, %s148
    %p150 = scmp.eq.s32.totalorder %s19, 0
    %p151 = por %p149, %p150
    %s152 = ssub.s32 %s13, %s20
    %p153 = scmp.eq.s32.totalorder %s152, 0
    %s155 = sadd.s32 %s154, 1
    %s156 = scalar_select %p153, %s154, %s155
    %p159 = pneg %p153
    %p160 = scmp.eq.s32.totalorder %s13, 1
    %p161 = por %p159, %p160
    %p162 = scmp.ne.s32.totalorder %s154, %s157
    %p163 = scmp.eq.s32.totalorder %s13, 0
    %p164 = por %p162, %p163
    %p165 = scmp.ne.s32.totalorder %s154, %s157
    %p166 = scmp.eq.s32.totalorder %s18, 1
    %p167 = por %p165, %p166
    %p168 = scmp.ne.s32.totalorder %s157, %s158
    %p169 = scmp.eq.s32.totalorder %s18, 0
    %p170 = por %p168, %p169
    %p171 = scmp.ne.s32.totalorder %s157, %s158
    %p172 = scmp.eq.s32.totalorder %s19, 1
    %p173 = por %p171, %p172
    %p175 = scmp.ne.s32.totalorder %s158, %s174
    %p176 = scmp.eq.s32.totalorder %s19, 0
    %p177 = por %p175, %p176
    %p178 = scmp.le.s32.totalorder 1, %s13
    %p179 = scmp.lt.s32.totalorder %s13, 3
    %p180 = pnand %p178, %p179
    %p181 = pneg %p180
    // Predicated region
    $region9: #{fenet1_forward.3} parent=5 // pred_check
      _
    $region10: #{fenet1_forward.3} parent=5 // pred_check_branch
      %183 = sbr.rel (%p180) target = $region12
    $region11: #{fenet1_forward.3} parent=5 // pred_region
      %s184 = ssub.s32 %s13, 1
      // Predicated region
      $region13: #{fenet1_forward.3} parent=11 // pred_check
        %p185 = pneg %p60
      $region14: #{fenet1_forward.3} parent=11 // pred_check_branch
        %187 = sbr.rel (%p185) target = $region16
      $region15: #{fenet1_forward.3} parent=11 // pred_region
        _
      $region16: #{fenet1_forward.3} parent=11 // pred_fallthru
        _
      // Predicated region
      $region17: #{fenet1_forward.3} parent=11 // pred_check
        %p188 = pneg %p81
      $region18: #{fenet1_forward.3} parent=11 // pred_check_branch
        %190 = sbr.rel (%p188) target = $region20
      $region19: #{fenet1_forward.3} parent=11 // pred_region
        _
      $region20: #{fenet1_forward.3} parent=11 // pred_fallthru
        _
      // Predicated region
      $region21: #{fenet1_forward.3} parent=11 // pred_check
        %p191 = pneg %p102
      $region22: #{fenet1_forward.3} parent=11 // pred_check_branch
        %193 = sbr.rel (%p191) target = $region24
      $region23: #{fenet1_forward.3} parent=11 // pred_region
        _
      $region24: #{fenet1_forward.3} parent=11 // pred_fallthru
        _
      // Predicated region
      $region25: #{fenet1_forward.3} parent=11 // pred_check
        %p194 = pneg %p123
      $region26: #{fenet1_forward.3} parent=11 // pred_check_branch
        %196 = sbr.rel (%p194) target = $region28
      $region27: #{fenet1_forward.3} parent=11 // pred_region
        _
      $region28: #{fenet1_forward.3} parent=11 // pred_fallthru
        _
      // Predicated region
      $region29: #{fenet1_forward.3} parent=11 // pred_check
        %p197 = pneg %p144
      $region30: #{fenet1_forward.3} parent=11 // pred_check_branch
        %199 = sbr.rel (%p197) target = $region32
      $region31: #{fenet1_forward.3} parent=11 // pred_region
        _
      $region32: #{fenet1_forward.3} parent=11 // pred_fallthru
        _
    $region12: #{fenet1_forward.3} parent=5 // pred_fallthru
      _
    %p200 = scmp.lt.s32.totalorder %s13, 2
    // Predicated region
    $region33: #{fenet1_forward.3} parent=5 // pred_check
      %p201 = pneg %p200
    $region34: #{fenet1_forward.3} parent=5 // pred_check_branch
      %203 = sbr.rel (%p201) target = $region36
    $region35: #{fenet1_forward.3} parent=5 // pred_region
      // Predicated region
      $region37: #{fenet1_forward.3} parent=35 // pred_check
        %p204 = pneg %p33
      $region38: #{fenet1_forward.3} parent=35 // pred_check_branch
        %206 = sbr.rel (%p204) target = $region40
      $region39: #{fenet1_forward.3} parent=35 // pred_region
        %p207 = scmp.lt.s32.totalorder %s13, 1
        %s208 = scalar_select %p207, %s13, 1
        %s209 = smul.addr %s208, 100
        %s210 = smul.addr %s209, 4
        %s211 = scalar_lea.vmem %s0, %s210
      $region40: #{fenet1_forward.3} parent=35 // pred_fallthru
        _
    $region36: #{fenet1_forward.3} parent=5 // pred_fallthru
      _
    %p212 = scmp.le.s32.totalorder 1, %s13
    %p213 = scmp.lt.s32.totalorder %s13, 3
    %p214 = pnand %p212, %p213
    %p215 = pneg %p214
    // Predicated region
    $region41: #{fenet1_forward.3} parent=5 // pred_check
      _
    $region42: #{fenet1_forward.3} parent=5 // pred_check_branch
      %217 = sbr.rel (%p214) target = $region44
    $region43: #{fenet1_forward.3} parent=5 // pred_region
      %s218 = ssub.s32 %s13, 1
      %p219 = scmp.lt.s32.totalorder %s18, 1
      %s220 = scalar_select %p219, %s18, 1
      %s221 = smul.addr %s220, 100
      %s222 = smul.addr %s221, 4
      %s223 = scalar_lea.vmem %s0, %s222
      %p224 = pneg %p39
      %p225 = pneg %p36
      %p226 = pneg %p60
      %p227 = pneg %p57
      %p228 = pneg %p81
      %p229 = pneg %p78
      %p230 = pneg %p102
      %p231 = pneg %p99
      %p232 = pneg %p123
      %p233 = pneg %p120
      %p234 = pneg %p144
      %p235 = pneg %p141
      %p236 = pneg %p170
      %p237 = pneg %p167
      %p238 = scmp.lt.s32.totalorder %s18, 1
      %s239 = scalar_select %p238, %s18, 1
      %s240 = smul.addr %s239, 25
      %s241 = smul.addr %s240, 4
      %s242 = scalar_lea.vmem %s6, %s241
      %p243 = scmp.lt.s32.totalorder %s18, 1
      %s244 = scalar_select %p243, %s18, 1
      %s245 = smul.addr %s244, 100
      %s246 = smul.addr %s245, 4
      %s247 = scalar_lea.vmem %s0, %s246
      %p248 = scmp.lt.s32.totalorder %s18, 1
      %s249 = scalar_select %p248, %s18, 1
      %s250 = smul.addr %s249, 25
      %s251 = smul.addr %s250, 4
      %s252 = scalar_lea.vmem %s6, %s251
      %v254 = vld [vmem:[%s1] sm:$0xf]
      %v255 = vld [vmem:[%s1 + $0x4] sm:$0xf]
      %v256 = vld [vmem:[%s2] sm:$0x1]
      %v257 = vld [vmem:[%s3] sm:$0x1]
      %v258 = vld [vmem:[%s4] sm:$0x1]
      %s259 = sld [smem:[#allocation2]]
      %v260 = vld [vmem:[%s247] sm:$0xf]
      %v261 = vld [vmem:[%s247 + $0x4] sm:$0xf]
      %v262 = vld [vmem:[%s247 + $0x8] sm:$0xf]
      %v263 = vld [vmem:[%s247 + $0xc] sm:$0xf]
      %v264 = vld [vmem:[%s247 + $0x10] sm:$0xf]
      %v265 = vld [vmem:[%s247 + $0x14] sm:$0xf]
      %v266 = vld [vmem:[%s247 + $0x18] sm:$0xf]
      %v267 = vld [vmem:[%s247 + $0x1c] sm:$0xf]
      %v268 = vld [vmem:[%s247 + $0x20] sm:$0xf]
      %v269 = vld [vmem:[%s247 + $0x24] sm:$0xf]
      %v270 = vld [vmem:[%s247 + $0x28] sm:$0xf]
      %v271 = vld [vmem:[%s247 + $0x2c] sm:$0xf]
      %v272 = vld [vmem:[%s247 + $0x30] sm:$0xf]
      %v273 = vld [vmem:[%s247 + $0x34] sm:$0xf]
      %v274 = vld [vmem:[%s247 + $0x38] sm:$0xf]
      %v275 = vld [vmem:[%s247 + $0x3c] sm:$0xf]
      %v276 = vld [vmem:[%s247 + $0x40] sm:$0xf]
      %v277 = vld [vmem:[%s247 + $0x44] sm:$0xf]
      %v278 = vld [vmem:[%s247 + $0x48] sm:$0xf]
      %v279 = vld [vmem:[%s247 + $0x4c] sm:$0xf]
      %v280 = vld [vmem:[%s247 + $0x50] sm:$0xf]
      %v281 = vld [vmem:[%s247 + $0x54] sm:$0xf]
      %v282 = vld [vmem:[%s247 + $0x58] sm:$0xf]
      %v283 = vld [vmem:[%s247 + $0x5c] sm:$0xf]
      %v284 = vld [vmem:[%s247 + $0x60] sm:$0x3]
      %v286 = vlaneseq
      %v287 = vshrl.u32 %v286, 7
      %v288 = vsub.s32 0, %v287
      %v289 = vrot.slane %v256, %v288
      %v316 = vunpack.c.l.b16 %v260
      %v317 = vunpack.c.l.b16 %v261
      %v318 = vunpack.c.l.b16 %v262
      %v319 = vunpack.c.l.b16 %v263
      %v320 = vunpack.c.l.b16 %v264
      %v321 = vunpack.c.l.b16 %v265
      %v322 = vunpack.c.l.b16 %v266
      %v323 = vunpack.c.l.b16 %v267
      %v324 = vunpack.c.l.b16 %v268
      %v325 = vunpack.c.l.b16 %v269
      %v326 = vunpack.c.l.b16 %v270
      %v327 = vunpack.c.l.b16 %v271
      %v328 = vunpack.c.l.b16 %v272
      %v329 = vunpack.c.l.b16 %v273
      %v330 = vunpack.c.l.b16 %v274
      %v331 = vunpack.c.l.b16 %v275
      %v332 = vunpack.c.l.b16 %v276
      %v333 = vunpack.c.l.b16 %v277
      %v334 = vunpack.c.l.b16 %v278
      %v335 = vunpack.c.l.b16 %v279
      %v336 = vunpack.c.l.b16 %v280
      %v337 = vunpack.c.l.b16 %v281
      %v338 = vunpack.c.l.b16 %v282
      %v339 = vunpack.c.l.b16 %v283
      %v340 = vunpack.c.l.b16 %v284
      %v341 = vpack.c.b16 %v317, %v316
      %v342 = vpack.c.b16 %v319, %v318
      %v343 = vpack.c.b16 %v321, %v320
      %v344 = vpack.c.b16 %v323, %v322
      %v345 = vpack.c.b16 %v325, %v324
      %v346 = vpack.c.b16 %v327, %v326
      %v347 = vpack.c.b16 %v329, %v328
      %v348 = vpack.c.b16 %v331, %v330
      %v349 = vpack.c.b16 %v333, %v332
      %v350 = vpack.c.b16 %v335, %v334
      %v351 = vpack.c.b16 %v337, %v336
      %v352 = vpack.c.b16 %v339, %v338
      %v353 = vpack.c.b16 %v340, %v340
      %v356 = vunpack.c.l.b16 %v254
      %v357 = vunpack.c.l.b16 %v255
      %v358 = vpack.c.b16 %v357, %v356
      %vm360 = vcmask 130048
      %v362 = vsel %vm360, %v341, 0
      %v365 = vsel %vm360, %v342, 0
      %v368 = vsel %vm360, %v343, 0
      %v371 = vsel %vm360, %v344, 0
      %v374 = vsel %vm360, %v345, 0
      %v377 = vsel %vm360, %v346, 0
      %v380 = vsel %vm360, %v347, 0
      %v383 = vsel %vm360, %v348, 0
      %v386 = vsel %vm360, %v349, 0
      %v389 = vsel %vm360, %v350, 0
      %v392 = vsel %vm360, %v351, 0
      %v395 = vsel %vm360, %v352, 0
      %v398 = vsel %vm360, %v353, 0
      %400 = vmatprep.subr.bf16.mxu0 0
      %401 = vmatpush1.bf16.msra.mxu0 %v358
      %402 = vmatprep.subr.bf16.mxu0 0
      %403 = vmatpush1.bf16.msra.mxu0 0
      %404 = vmatprep.subr.bf16.mxu0 0
      %405 = vmatpush1.bf16.msra.mxu0 0
      %406 = vmatprep.subr.bf16.mxu0 0
      %407 = vmatpush1.bf16.msra.mxu0 0
      %408 = vmatprep.subr.bf16.mxu0 0
      %409 = vmatpush1.bf16.msra.mxu0 0
      %410 = vmatprep.subr.bf16.mxu0 0
      %411 = vmatpush1.bf16.msra.mxu0 0
      %412 = vmatprep.subr.bf16.mxu0 0
      %413 = vmatpush1.bf16.msra.mxu0 0
      %414 = vmatprep.subr.bf16.mxu0 0
      %415 = vmatpush1.bf16.msra.mxu0 0
      %416 = vmatprep.subr.bf16.mxu0 0
      %417 = vmatpush1.bf16.msra.mxu0 0
      %418 = vmatprep.subr.bf16.mxu0 0
      %419 = vmatpush1.bf16.msra.mxu0 0
      %420 = vmatprep.subr.bf16.mxu0 0
      %421 = vmatpush1.bf16.msra.mxu0 0
      %422 = vmatprep.subr.bf16.mxu0 0
      %423 = vmatpush1.bf16.msra.mxu0 0
      %424 = vmatprep.subr.bf16.mxu0 0
      %425 = vmatpush1.bf16.msra.mxu0 0
      %426 = vmatprep.subr.bf16.mxu0 0
      %427 = vmatpush1.bf16.msra.mxu0 0
      %428 = vmatprep.subr.bf16.mxu0 0
      %429 = vmatpush1.bf16.msra.mxu0 0
      %430 = vmatprep.subr.bf16.mxu0 0
      %431 = vmatpush1.bf16.msra.mxu0 0
      %432 = vmatprep.mubr.bf16.mxu0 0
      %433 = vmatmul.mubr.bf16.gmra.mrb[0].mxu0 %v362
      %v434 = vpop.f32.mrb[0].mxu0
      %v435 = vadd.f32 %v289, %v434
      %v436 = vpop.f32.mrb[0].mxu0
      %v437 = vpop.f32.mrb[0].mxu0
      %v438 = vadd.f32 %v289, %v437
      %v439 = vpop.f32.mrb[0].mxu0
      %440 = vmatprep.mubr.bf16.mxu0 0
      %441 = vmatmul.mubr.bf16.gmra.mrb[0].mxu0 %v365
      %v442 = vpop.f32.mrb[0].mxu0
      %v443 = vadd.f32 %v289, %v442
      %v444 = vpop.f32.mrb[0].mxu0
      %v445 = vpop.f32.mrb[0].mxu0
      %v446 = vadd.f32 %v289, %v445
      %v447 = vpop.f32.mrb[0].mxu0
      %448 = vmatprep.mubr.bf16.mxu0 0
      %449 = vmatmul.mubr.bf16.gmra.mrb[0].mxu0 %v368
      %v450 = vpop.f32.mrb[0].mxu0
      %v451 = vadd.f32 %v289, %v450
      %v452 = vpop.f32.mrb[0].mxu0
      %v453 = vpop.f32.mrb[0].mxu0
      %v454 = vadd.f32 %v289, %v453
      %v455 = vpop.f32.mrb[0].mxu0
      %456 = vmatprep.mubr.bf16.mxu0 0
      %457 = vmatmul.mubr.bf16.gmra.mrb[0].mxu0 %v371
      %v458 = vpop.f32.mrb[0].mxu0
      %v459 = vadd.f32 %v289, %v458
      %v460 = vpop.f32.mrb[0].mxu0
      %v461 = vpop.f32.mrb[0].mxu0
      %v462 = vadd.f32 %v289, %v461
      %v463 = vpop.f32.mrb[0].mxu0
      %464 = vmatprep.mubr.bf16.mxu0 0
      %465 = vmatmul.mubr.bf16.gmra.mrb[0].mxu0 %v374
      %v466 = vpop.f32.mrb[0].mxu0
      %v467 = vadd.f32 %v289, %v466
      %v468 = vpop.f32.mrb[0].mxu0
      %v469 = vpop.f32.mrb[0].mxu0
      %v470 = vadd.f32 %v289, %v469
      %v471 = vpop.f32.mrb[0].mxu0
      %472 = vmatprep.mubr.bf16.mxu0 0
      %473 = vmatmul.mubr.bf16.gmra.mrb[0].mxu0 %v377
      %v474 = vpop.f32.mrb[0].mxu0
      %v475 = vadd.f32 %v289, %v474
      %v476 = vpop.f32.mrb[0].mxu0
      %v477 = vpop.f32.mrb[0].mxu0
      %v478 = vadd.f32 %v289, %v477
      %v479 = vpop.f32.mrb[0].mxu0
      %480 = vmatprep.mubr.bf16.mxu0 0
      %481 = vmatmul.mubr.bf16.gmra.mrb[0].mxu0 %v380
      %v482 = vpop.f32.mrb[0].mxu0
      %v483 = vadd.f32 %v289, %v482
      %v484 = vpop.f32.mrb[0].mxu0
      %v485 = vpop.f32.mrb[0].mxu0
      %v486 = vadd.f32 %v289, %v485
      %v487 = vpop.f32.mrb[0].mxu0
      %488 = vmatprep.mubr.bf16.mxu0 0
      %489 = vmatmul.mubr.bf16.gmra.mrb[0].mxu0 %v383
      %v490 = vpop.f32.mrb[0].mxu0
      %v491 = vadd.f32 %v289, %v490
      %v492 = vpop.f32.mrb[0].mxu0
      %v493 = vpop.f32.mrb[0].mxu0
      %v494 = vadd.f32 %v289, %v493
      %v495 = vpop.f32.mrb[0].mxu0
      %496 = vmatprep.mubr.bf16.mxu0 0
      %497 = vmatmul.mubr.bf16.gmra.mrb[0].mxu0 %v386
      %v498 = vpop.f32.mrb[0].mxu0
      %v499 = vadd.f32 %v289, %v498
      %v500 = vpop.f32.mrb[0].mxu0
      %v501 = vpop.f32.mrb[0].mxu0
      %v502 = vadd.f32 %v289, %v501
      %v503 = vpop.f32.mrb[0].mxu0
      %504 = vmatprep.mubr.bf16.mxu0 0
      %505 = vmatmul.mubr.bf16.gmra.mrb[0].mxu0 %v389
      %v506 = vpop.f32.mrb[0].mxu0
      %v507 = vadd.f32 %v289, %v506
      %v508 = vpop.f32.mrb[0].mxu0
      %v509 = vpop.f32.mrb[0].mxu0
      %v510 = vadd.f32 %v289, %v509
      %v511 = vpop.f32.mrb[0].mxu0
      %512 = vmatprep.mubr.bf16.mxu0 0
      %513 = vmatmul.mubr.bf16.gmra.mrb[0].mxu0 %v392
      %v514 = vpop.f32.mrb[0].mxu0
      %v515 = vadd.f32 %v289, %v514
      %v516 = vpop.f32.mrb[0].mxu0
      %v517 = vpop.f32.mrb[0].mxu0
      %v518 = vadd.f32 %v289, %v517
      %v519 = vpop.f32.mrb[0].mxu0
      %520 = vmatprep.mubr.bf16.mxu0 0
      %521 = vmatmul.mubr.bf16.gmra.mrb[0].mxu0 %v395
      %v522 = vpop.f32.mrb[0].mxu0
      %v523 = vadd.f32 %v289, %v522
      %v524 = vpop.f32.mrb[0].mxu0
      %v525 = vpop.f32.mrb[0].mxu0
      %v526 = vadd.f32 %v289, %v525
      %v527 = vpop.f32.mrb[0].mxu0
      %528 = vmatprep.mubr.bf16.mxu0 0
      %529 = vmatmul.mubr.bf16.gmra.mrb[0].mxu0 %v398
      %v530 = vpop.f32.mrb[0].mxu0
      %v531 = vadd.f32 %v289, %v530
      %v532 = vpop.f32.mrb[0].mxu0
      %v533 = vpop.f32.mrb[0].mxu0
      %v534 = vpop.f32.mrb[0].mxu0
      %535 = vdwg.mxu0
      %v536 = vmax.f32 %v435, 0.0
      %v537 = vmax.f32 %v438, 0.0
      %v538 = vmax.f32 %v443, 0.0
      %v539 = vmax.f32 %v446, 0.0
      %v540 = vmax.f32 %v451, 0.0
      %v541 = vmax.f32 %v454, 0.0
      %v542 = vmax.f32 %v459, 0.0
      %v543 = vmax.f32 %v462, 0.0
      %v544 = vmax.f32 %v467, 0.0
      %v545 = vmax.f32 %v470, 0.0
      %v546 = vmax.f32 %v475, 0.0
      %v547 = vmax.f32 %v478, 0.0
      %v548 = vmax.f32 %v483, 0.0
      %v549 = vmax.f32 %v486, 0.0
      %v550 = vmax.f32 %v491, 0.0
      %v551 = vmax.f32 %v494, 0.0
      %v552 = vmax.f32 %v499, 0.0
      %v553 = vmax.f32 %v502, 0.0
      %v554 = vmax.f32 %v507, 0.0
      %v555 = vmax.f32 %v510, 0.0
      %v556 = vmax.f32 %v515, 0.0
      %v557 = vmax.f32 %v518, 0.0
      %v558 = vmax.f32 %v523, 0.0
      %v559 = vmax.f32 %v526, 0.0
      %v560 = vmax.f32 %v531, 0.0
      %v561 = vmin.f32 %v435, 0.0
      %v562 = vmin.f32 %v438, 0.0
      %v563 = vmin.f32 %v443, 0.0
      %v564 = vmin.f32 %v446, 0.0
      %v565 = vmin.f32 %v451, 0.0
      %v566 = vmin.f32 %v454, 0.0
      %v567 = vmin.f32 %v459, 0.0
      %v568 = vmin.f32 %v462, 0.0
      %v569 = vmin.f32 %v467, 0.0
      %v570 = vmin.f32 %v470, 0.0
      %v571 = vmin.f32 %v475, 0.0
      %v572 = vmin.f32 %v478, 0.0
      %v573 = vmin.f32 %v483, 0.0
      %v574 = vmin.f32 %v486, 0.0
      %v575 = vmin.f32 %v491, 0.0
      %v576 = vmin.f32 %v494, 0.0
      %v577 = vmin.f32 %v499, 0.0
      %v578 = vmin.f32 %v502, 0.0
      %v579 = vmin.f32 %v507, 0.0
      %v580 = vmin.f32 %v510, 0.0
      %v581 = vmin.f32 %v515, 0.0
      %v582 = vmin.f32 %v518, 0.0
      %v583 = vmin.f32 %v523, 0.0
      %v584 = vmin.f32 %v526, 0.0
      %v585 = vmin.f32 %v531, 0.0
      %v586 = vstv %s259
      %v587 = vmul.f32 %v586, %v561
      %v588 = vmul.f32 %v586, %v562
      %v589 = vmul.f32 %v586, %v563
      %v590 = vmul.f32 %v586, %v564
      %v591 = vmul.f32 %v586, %v565
      %v592 = vmul.f32 %v586, %v566
      %v593 = vmul.f32 %v586, %v567
      %v594 = vmul.f32 %v586, %v568
      %v595 = vmul.f32 %v586, %v569
      %v596 = vmul.f32 %v586, %v570
      %v597 = vmul.f32 %v586, %v571
      %v598 = vmul.f32 %v586, %v572
      %v599 = vmul.f32 %v586, %v573
      %v600 = vmul.f32 %v586, %v574
      %v601 = vmul.f32 %v586, %v575
      %v602 = vmul.f32 %v586, %v576
      %v603 = vmul.f32 %v586, %v577
      %v604 = vmul.f32 %v586, %v578
      %v605 = vmul.f32 %v586, %v579
      %v606 = vmul.f32 %v586, %v580
      %v607 = vmul.f32 %v586, %v581
      %v608 = vmul.f32 %v586, %v582
      %v609 = vmul.f32 %v586, %v583
      %v610 = vmul.f32 %v586, %v584
      %v611 = vmul.f32 %v586, %v585
      %v612 = vadd.f32 %v536, %v587
      %v613 = vadd.f32 %v537, %v588
      %v614 = vadd.f32 %v538, %v589
      %v615 = vadd.f32 %v539, %v590
      %v616 = vadd.f32 %v540, %v591
      %v617 = vadd.f32 %v541, %v592
      %v618 = vadd.f32 %v542, %v593
      %v619 = vadd.f32 %v543, %v594
      %v620 = vadd.f32 %v544, %v595
      %v621 = vadd.f32 %v545, %v596
      %v622 = vadd.f32 %v546, %v597
      %v623 = vadd.f32 %v547, %v598
      %v624 = vadd.f32 %v548, %v599
      %v625 = vadd.f32 %v549, %v600
      %v626 = vadd.f32 %v550, %v601
      %v627 = vadd.f32 %v551, %v602
      %v628 = vadd.f32 %v552, %v603
      %v629 = vadd.f32 %v553, %v604
      %v630 = vadd.f32 %v554, %v605
      %v631 = vadd.f32 %v555, %v606
      %v632 = vadd.f32 %v556, %v607
      %v633 = vadd.f32 %v557, %v608
      %v634 = vadd.f32 %v558, %v609
      %v635 = vadd.f32 %v559, %v610
      %v636 = vadd.f32 %v560, %v611
      %v638 = vlaneseq
      %v639 = vshrl.u32 %v638, 7
      %v640 = vsub.s32 0, %v639
      %v641 = vrot.slane %v257, %v640
      %v643 = vmul.f32 %v612, %v641
      %v644 = vmul.f32 %v613, %v641
      %v645 = vmul.f32 %v614, %v641
      %v646 = vmul.f32 %v615, %v641
      %v647 = vmul.f32 %v616, %v641
      %v648 = vmul.f32 %v617, %v641
      %v649 = vmul.f32 %v618, %v641
      %v650 = vmul.f32 %v619, %v641
      %v651 = vmul.f32 %v620, %v641
      %v652 = vmul.f32 %v621, %v641
      %v653 = vmul.f32 %v622, %v641
      %v654 = vmul.f32 %v623, %v641
      %v655 = vmul.f32 %v624, %v641
      %v656 = vmul.f32 %v625, %v641
      %v657 = vmul.f32 %v626, %v641
      %v658 = vmul.f32 %v627, %v641
      %v659 = vmul.f32 %v628, %v641
      %v660 = vmul.f32 %v629, %v641
      %v661 = vmul.f32 %v630, %v641
      %v662 = vmul.f32 %v631, %v641
      %v663 = vmul.f32 %v632, %v641
      %v664 = vmul.f32 %v633, %v641
      %v665 = vmul.f32 %v634, %v641
      %v666 = vmul.f32 %v635, %v641
      %v667 = vmul.f32 %v636, %v641
      %v669 = vlaneseq
      %v670 = vshrl.u32 %v669, 7
      %v671 = vsub.s32 0, %v670
      %v672 = vrot.slane %v258, %v671
      %v674 = vadd.f32 %v643, %v672
      %v675 = vadd.f32 %v644, %v672
      %v676 = vadd.f32 %v645, %v672
      %v677 = vadd.f32 %v646, %v672
      %v678 = vadd.f32 %v647, %v672
      %v679 = vadd.f32 %v648, %v672
      %v680 = vadd.f32 %v649, %v672
      %v681 = vadd.f32 %v650, %v672
      %v682 = vadd.f32 %v651, %v672
      %v683 = vadd.f32 %v652, %v672
      %v684 = vadd.f32 %v653, %v672
      %v685 = vadd.f32 %v654, %v672
      %v686 = vadd.f32 %v655, %v672
      %v687 = vadd.f32 %v656, %v672
      %v688 = vadd.f32 %v657, %v672
      %v689 = vadd.f32 %v658, %v672
      %v690 = vadd.f32 %v659, %v672
      %v691 = vadd.f32 %v660, %v672
      %v692 = vadd.f32 %v661, %v672
      %v693 = vadd.f32 %v662, %v672
      %v694 = vadd.f32 %v663, %v672
      %v695 = vadd.f32 %v664, %v672
      %v696 = vadd.f32 %v665, %v672
      %v697 = vadd.f32 %v666, %v672
      %v698 = vadd.f32 %v667, %v672
      %s699 = scalar_lea.vmem %s247, 100
      %v700 = vld [vmem:[%s699] sm:$0xf]
      %v701 = vld [vmem:[%s699 + $0x4] sm:$0xf]
      %v702 = vld [vmem:[%s699 + $0x8] sm:$0xf]
      %v703 = vld [vmem:[%s699 + $0xc] sm:$0xf]
      %v704 = vld [vmem:[%s699 + $0x10] sm:$0xf]
      %v705 = vld [vmem:[%s699 + $0x14] sm:$0xf]
      %v706 = vld [vmem:[%s699 + $0x18] sm:$0xf]
      %v707 = vld [vmem:[%s699 + $0x1c] sm:$0xf]
      %v708 = vld [vmem:[%s699 + $0x20] sm:$0xf]
      %v709 = vld [vmem:[%s699 + $0x24] sm:$0xf]
      %v710 = vld [vmem:[%s699 + $0x28] sm:$0xf]
      %v711 = vld [vmem:[%s699 + $0x2c] sm:$0xf]
      %v712 = vld [vmem:[%s699 + $0x30] sm:$0xf]
      %v713 = vld [vmem:[%s699 + $0x34] sm:$0xf]
      %v714 = vld [vmem:[%s699 + $0x38] sm:$0xf]
      %v715 = vld [vmem:[%s699 + $0x3c] sm:$0xf]
      %v716 = vld [vmem:[%s699 + $0x40] sm:$0xf]
      %v717 = vld [vmem:[%s699 + $0x44] sm:$0xf]
      %v718 = vld [vmem:[%s699 + $0x48] sm:$0xf]
      %v719 = vld [vmem:[%s699 + $0x4c] sm:$0xf]
      %v720 = vld [vmem:[%s699 + $0x50] sm:$0xf]
      %v721 = vld [vmem:[%s699 + $0x54] sm:$0xf]
      %v722 = vld [vmem:[%s699 + $0x58] sm:$0xf]
      %v723 = vld [vmem:[%s699 + $0x5c] sm:$0xf]
      %v724 = vld [vmem:[%s699 + $0x60] sm:$0x3]
      %v750 = vunpack.c.l.b16 %v700
      %v751 = vunpack.c.l.b16 %v701
      %v752 = vunpack.c.l.b16 %v702
      %v753 = vunpack.c.l.b16 %v703
      %v754 = vunpack.c.l.b16 %v704
      %v755 = vunpack.c.l.b16 %v705
      %v756 = vunpack.c.l.b16 %v706
      %v757 = vunpack.c.l.b16 %v707
      %v758 = vunpack.c.l.b16 %v708
      %v759 = vunpack.c.l.b16 %v709
      %v760 = vunpack.c.l.b16 %v710
      %v761 = vunpack.c.l.b16 %v711
      %v762 = vunpack.c.l.b16 %v712
      %v763 = vunpack.c.l.b16 %v713
      %v764 = vunpack.c.l.b16 %v714
      %v765 = vunpack.c.l.b16 %v715
      %v766 = vunpack.c.l.b16 %v716
      %v767 = vunpack.c.l.b16 %v717
      %v768 = vunpack.c.l.b16 %v718
      %v769 = vunpack.c.l.b16 %v719
      %v770 = vunpack.c.l.b16 %v720
      %v771 = vunpack.c.l.b16 %v721
      %v772 = vunpack.c.l.b16 %v722
      %v773 = vunpack.c.l.b16 %v723
      %v774 = vunpack.c.l.b16 %v724
      %v775 = vpack.c.b16 %v751, %v750
      %v776 = vpack.c.b16 %v753, %v752
      %v777 = vpack.c.b16 %v755, %v754
      %v778 = vpack.c.b16 %v757, %v756
      %v779 = vpack.c.b16 %v759, %v758
      %v780 = vpack.c.b16 %v761, %v760
      %v781 = vpack.c.b16 %v763, %v762
      %v782 = vpack.c.b16 %v765, %v764
      %v783 = vpack.c.b16 %v767, %v766
      %v784 = vpack.c.b16 %v769, %v768
      %v785 = vpack.c.b16 %v771, %v770
      %v786 = vpack.c.b16 %v773, %v772
      %v787 = vpack.c.b16 %v774, %v774
      %v789 = vsel %vm360, %v775, 0
      %v792 = vsel %vm360, %v776, 0
      %v795 = vsel %vm360, %v777, 0
      %v798 = vsel %vm360, %v778, 0
      %v801 = vsel %vm360, %v779, 0
      %v804 = vsel %vm360, %v780, 0
      %v807 = vsel %vm360, %v781, 0
      %v810 = vsel %vm360, %v782, 0
      %v813 = vsel %vm360, %v783, 0
      %v816 = vsel %vm360, %v784, 0
      %v819 = vsel %vm360, %v785, 0
      %v822 = vsel %vm360, %v786, 0
      %v825 = vsel %vm360, %v787, 0
      %827 = vmatprep.subr.bf16.mxu0 0
      %828 = vmatpush1.bf16.msra.mxu0 %v358
      %829 = vmatprep.subr.bf16.mxu0 0
      %830 = vmatpush1.bf16.msra.mxu0 0
      %831 = vmatprep.subr.bf16.mxu0 0
      %832 = vmatpush1.bf16.msra.mxu0 0
      %833 = vmatprep.subr.bf16.mxu0 0
      %834 = vmatpush1.bf16.msra.mxu0 0
      %835 = vmatprep.subr.bf16.mxu0 0
      %836 = vmatpush1.bf16.msra.mxu0 0
      %837 = vmatprep.subr.bf16.mxu0 0
      %838 = vmatpush1.bf16.msra.mxu0 0
      %839 = vmatprep.subr.bf16.mxu0 0
      %840 = vmatpush1.bf16.msra.mxu0 0
      %841 = vmatprep.subr.bf16.mxu0 0
      %842 = vmatpush1.bf16.msra.mxu0 0
      %843 = vmatprep.subr.bf16.mxu0 0
      %844 = vmatpush1.bf16.msra.mxu0 0
      %845 = vmatprep.subr.bf16.mxu0 0
      %846 = vmatpush1.bf16.msra.mxu0 0
      %847 = vmatprep.subr.bf16.mxu0 0
      %848 = vmatpush1.bf16.msra.mxu0 0
      %849 = vmatprep.subr.bf16.mxu0 0
      %850 = vmatpush1.bf16.msra.mxu0 0
      %851 = vmatprep.subr.bf16.mxu0 0
      %852 = vmatpush1.bf16.msra.mxu0 0
      %853 = vmatprep.subr.bf16.mxu0 0
      %854 = vmatpush1.bf16.msra.mxu0 0
      %855 = vmatprep.subr.bf16.mxu0 0
      %856 = vmatpush1.bf16.msra.mxu0 0
      %857 = vmatprep.subr.bf16.mxu0 0
      %858 = vmatpush1.bf16.msra.mxu0 0
      %859 = vmatprep.mubr.bf16.mxu0 0
      %860 = vmatmul.mubr.bf16.gmra.mrb[0].mxu0 %v789
      %v861 = vpop.f32.mrb[0].mxu0
      %v862 = vadd.f32 %v289, %v861
      %v863 = vpop.f32.mrb[0].mxu0
      %v864 = vpop.f32.mrb[0].mxu0
      %v865 = vadd.f32 %v289, %v864
      %v866 = vpop.f32.mrb[0].mxu0
      %867 = vmatprep.mubr.bf16.mxu0 0
      %868 = vmatmul.mubr.bf16.gmra.mrb[0].mxu0 %v792
      %v869 = vpop.f32.mrb[0].mxu0
      %v870 = vadd.f32 %v289, %v869
      %v871 = vpop.f32.mrb[0].mxu0
      %v872 = vpop.f32.mrb[0].mxu0
      %v873 = vadd.f32 %v289, %v872
      %v874 = vpop.f32.mrb[0].mxu0
      %875 = vmatprep.mubr.bf16.mxu0 0
      %876 = vmatmul.mubr.bf16.gmra.mrb[0].mxu0 %v795
      %v877 = vpop.f32.mrb[0].mxu0
      %v878 = vadd.f32 %v289, %v877
      %v879 = vpop.f32.mrb[0].mxu0
      %v880 = vpop.f32.mrb[0].mxu0
      %v881 = vadd.f32 %v289, %v880
      %v882 = vpop.f32.mrb[0].mxu0
      %883 = vmatprep.mubr.bf16.mxu0 0
      %884 = vmatmul.mubr.bf16.gmra.mrb[0].mxu0 %v798
      %v885 = vpop.f32.mrb[0].mxu0
      %v886 = vadd.f32 %v289, %v885
      %v887 = vpop.f32.mrb[0].mxu0
      %v888 = vpop.f32.mrb[0].mxu0
      %v889 = vadd.f32 %v289, %v888
      %v890 = vpop.f32.mrb[0].mxu0
      %891 = vmatprep.mubr.bf16.mxu0 0
      %892 = vmatmul.mubr.bf16.gmra.mrb[0].mxu0 %v801
      %v893 = vpop.f32.mrb[0].mxu0
      %v894 = vadd.f32 %v289, %v893
      %v895 = vpop.f32.mrb[0].mxu0
      %v896 = vpop.f32.mrb[0].mxu0
      %v897 = vadd.f32 %v289, %v896
      %v898 = vpop.f32.mrb[0].mxu0
      %899 = vmatprep.mubr.bf16.mxu0 0
      %900 = vmatmul.mubr.bf16.gmra.mrb[0].mxu0 %v804
      %v901 = vpop.f32.mrb[0].mxu0
      %v902 = vadd.f32 %v289, %v901
      %v903 = vpop.f32.mrb[0].mxu0
      %v904 = vpop.f32.mrb[0].mxu0
      %v905 = vadd.f32 %v289, %v904
      %v906 = vpop.f32.mrb[0].mxu0
      %907 = vmatprep.mubr.bf16.mxu0 0
      %908 = vmatmul.mubr.bf16.gmra.mrb[0].mxu0 %v807
      %v909 = vpop.f32.mrb[0].mxu0
      %v910 = vadd.f32 %v289, %v909
      %v911 = vpop.f32.mrb[0].mxu0
      %v912 = vpop.f32.mrb[0].mxu0
      %v913 = vadd.f32 %v289, %v912
      %v914 = vpop.f32.mrb[0].mxu0
      %915 = vmatprep.mubr.bf16.mxu0 0
      %916 = vmatmul.mubr.bf16.gmra.mrb[0].mxu0 %v810
      %v917 = vpop.f32.mrb[0].mxu0
      %v918 = vadd.f32 %v289, %v917
      %v919 = vpop.f32.mrb[0].mxu0
      %v920 = vpop.f32.mrb[0].mxu0
      %v921 = vadd.f32 %v289, %v920
      %v922 = vpop.f32.mrb[0].mxu0
      %923 = vmatprep.mubr.bf16.mxu0 0
      %924 = vmatmul.mubr.bf16.gmra.mrb[0].mxu0 %v813
      %v925 = vpop.f32.mrb[0].mxu0
      %v926 = vadd.f32 %v289, %v925
      %v927 = vpop.f32.mrb[0].mxu0
      %v928 = vpop.f32.mrb[0].mxu0
      %v929 = vadd.f32 %v289, %v928
      %v930 = vpop.f32.mrb[0].mxu0
      %931 = vmatprep.mubr.bf16.mxu0 0
      %932 = vmatmul.mubr.bf16.gmra.mrb[0].mxu0 %v816
      %v933 = vpop.f32.mrb[0].mxu0
      %v934 = vadd.f32 %v289, %v933
      %v935 = vpop.f32.mrb[0].mxu0
      %v936 = vpop.f32.mrb[0].mxu0
      %v937 = vadd.f32 %v289, %v936
      %v938 = vpop.f32.mrb[0].mxu0
      %939 = vmatprep.mubr.bf16.mxu0 0
      %940 = vmatmul.mubr.bf16.gmra.mrb[0].mxu0 %v819
      %v941 = vpop.f32.mrb[0].mxu0
      %v942 = vadd.f32 %v289, %v941
      %v943 = vpop.f32.mrb[0].mxu0
      %v944 = vpop.f32.mrb[0].mxu0
      %v945 = vadd.f32 %v289, %v944
      %v946 = vpop.f32.mrb[0].mxu0
      %947 = vmatprep.mubr.bf16.mxu0 0
      %948 = vmatmul.mubr.bf16.gmra.mrb[0].mxu0 %v822
      %v949 = vpop.f32.mrb[0].mxu0
      %v950 = vadd.f32 %v289, %v949
      %v951 = vpop.f32.mrb[0].mxu0
      %v952 = vpop.f32.mrb[0].mxu0
      %v953 = vadd.f32 %v289, %v952
      %v954 = vpop.f32.mrb[0].mxu0
      %955 = vmatprep.mubr.bf16.mxu0 0
      %956 = vmatmul.mubr.bf16.gmra.mrb[0].mxu0 %v825
      %v957 = vpop.f32.mrb[0].mxu0
      %v958 = vadd.f32 %v289, %v957
      %v959 = vpop.f32.mrb[0].mxu0
      %v960 = vpop.f32.mrb[0].mxu0
      %v961 = vpop.f32.mrb[0].mxu0
      %962 = vdwg.mxu0
      %v963 = vmax.f32 %v862, 0.0
      %v964 = vmax.f32 %v865, 0.0
      %v965 = vmax.f32 %v870, 0.0
      %v966 = vmax.f32 %v873, 0.0
      %v967 = vmax.f32 %v878, 0.0
      %v968 = vmax.f32 %v881, 0.0
      %v969 = vmax.f32 %v886, 0.0
      %v970 = vmax.f32 %v889, 0.0
      %v971 = vmax.f32 %v894, 0.0
      %v972 = vmax.f32 %v897, 0.0
      %v973 = vmax.f32 %v902, 0.0
      %v974 = vmax.f32 %v905, 0.0
      %v975 = vmax.f32 %v910, 0.0
      %v976 = vmax.f32 %v913, 0.0
      %v977 = vmax.f32 %v918, 0.0
      %v978 = vmax.f32 %v921, 0.0
      %v979 = vmax.f32 %v926, 0.0
      %v980 = vmax.f32 %v929, 0.0
      %v981 = vmax.f32 %v934, 0.0
      %v982 = vmax.f32 %v937, 0.0
      %v983 = vmax.f32 %v942, 0.0
      %v984 = vmax.f32 %v945, 0.0
      %v985 = vmax.f32 %v950, 0.0
      %v986 = vmax.f32 %v953, 0.0
      %v987 = vmax.f32 %v958, 0.0
      %v988 = vmin.f32 %v862, 0.0
      %v989 = vmin.f32 %v865, 0.0
      %v990 = vmin.f32 %v870, 0.0
      %v991 = vmin.f32 %v873, 0.0
      %v992 = vmin.f32 %v878, 0.0
      %v993 = vmin.f32 %v881, 0.0
      %v994 = vmin.f32 %v886, 0.0
      %v995 = vmin.f32 %v889, 0.0
      %v996 = vmin.f32 %v894, 0.0
      %v997 = vmin.f32 %v897, 0.0
      %v998 = vmin.f32 %v902, 0.0
      %v999 = vmin.f32 %v905, 0.0
      %v1000 = vmin.f32 %v910, 0.0
      %v1001 = vmin.f32 %v913, 0.0
      %v1002 = vmin.f32 %v918, 0.0
      %v1003 = vmin.f32 %v921, 0.0
      %v1004 = vmin.f32 %v926, 0.0
      %v1005 = vmin.f32 %v929, 0.0
      %v1006 = vmin.f32 %v934, 0.0
      %v1007 = vmin.f32 %v937, 0.0
      %v1008 = vmin.f32 %v942, 0.0
      %v1009 = vmin.f32 %v945, 0.0
      %v1010 = vmin.f32 %v950, 0.0
      %v1011 = vmin.f32 %v953, 0.0
      %v1012 = vmin.f32 %v958, 0.0
      %v1013 = vmul.f32 %v586, %v988
      %v1014 = vmul.f32 %v586, %v989
      %v1015 = vmul.f32 %v586, %v990
      %v1016 = vmul.f32 %v586, %v991
      %v1017 = vmul.f32 %v586, %v992
      %v1018 = vmul.f32 %v586, %v993
      %v1019 = vmul.f32 %v586, %v994
      %v1020 = vmul.f32 %v586, %v995
      %v1021 = vmul.f32 %v586, %v996
      %v1022 = vmul.f32 %v586, %v997
      %v1023 = vmul.f32 %v586, %v998
      %v1024 = vmul.f32 %v586, %v999
      %v1025 = vmul.f32 %v586, %v1000
      %v1026 = vmul.f32 %v586, %v1001
      %v1027 = vmul.f32 %v586, %v1002
      %v1028 = vmul.f32 %v586, %v1003
      %v1029 = vmul.f32 %v586, %v1004
      %v1030 = vmul.f32 %v586, %v1005
      %v1031 = vmul.f32 %v586, %v1006
      %v1032 = vmul.f32 %v586, %v1007
      %v1033 = vmul.f32 %v586, %v1008
      %v1034 = vmul.f32 %v586, %v1009
      %v1035 = vmul.f32 %v586, %v1010
      %v1036 = vmul.f32 %v586, %v1011
      %v1037 = vmul.f32 %v586, %v1012
      %v1038 = vadd.f32 %v963, %v1013
      %v1039 = vadd.f32 %v964, %v1014
      %v1040 = vadd.f32 %v965, %v1015
      %v1041 = vadd.f32 %v966, %v1016
      %v1042 = vadd.f32 %v967, %v1017
      %v1043 = vadd.f32 %v968, %v1018
      %v1044 = vadd.f32 %v969, %v1019
      %v1045 = vadd.f32 %v970, %v1020
      %v1046 = vadd.f32 %v971, %v1021
      %v1047 = vadd.f32 %v972, %v1022
      %v1048 = vadd.f32 %v973, %v1023
      %v1049 = vadd.f32 %v974, %v1024
      %v1050 = vadd.f32 %v975, %v1025
      %v1051 = vadd.f32 %v976, %v1026
      %v1052 = vadd.f32 %v977, %v1027
      %v1053 = vadd.f32 %v978, %v1028
      %v1054 = vadd.f32 %v979, %v1029
      %v1055 = vadd.f32 %v980, %v1030
      %v1056 = vadd.f32 %v981, %v1031
      %v1057 = vadd.f32 %v982, %v1032
      %v1058 = vadd.f32 %v983, %v1033
      %v1059 = vadd.f32 %v984, %v1034
      %v1060 = vadd.f32 %v985, %v1035
      %v1061 = vadd.f32 %v986, %v1036
      %v1062 = vadd.f32 %v987, %v1037
      %v1063 = vmul.f32 %v1038, %v641
      %v1064 = vmul.f32 %v1039, %v641
      %v1065 = vmul.f32 %v1040, %v641
      %v1066 = vmul.f32 %v1041, %v641
      %v1067 = vmul.f32 %v1042, %v641
      %v1068 = vmul.f32 %v1043, %v641
      %v1069 = vmul.f32 %v1044, %v641
      %v1070 = vmul.f32 %v1045, %v641
      %v1071 = vmul.f32 %v1046, %v641
      %v1072 = vmul.f32 %v1047, %v641
      %v1073 = vmul.f32 %v1048, %v641
      %v1074 = vmul.f32 %v1049, %v641
      %v1075 = vmul.f32 %v1050, %v641
      %v1076 = vmul.f32 %v1051, %v641
      %v1077 = vmul.f32 %v1052, %v641
      %v1078 = vmul.f32 %v1053, %v641
      %v1079 = vmul.f32 %v1054, %v641
      %v1080 = vmul.f32 %v1055, %v641
      %v1081 = vmul.f32 %v1056, %v641
      %v1082 = vmul.f32 %v1057, %v641
      %v1083 = vmul.f32 %v1058, %v641
      %v1084 = vmul.f32 %v1059, %v641
      %v1085 = vmul.f32 %v1060, %v641
      %v1086 = vmul.f32 %v1061, %v641
      %v1087 = vmul.f32 %v1062, %v641
      %v1088 = vadd.f32 %v1063, %v672
      %v1089 = vadd.f32 %v1064, %v672
      %v1090 = vadd.f32 %v1065, %v672
      %v1091 = vadd.f32 %v1066, %v672
      %v1092 = vadd.f32 %v1067, %v672
      %v1093 = vadd.f32 %v1068, %v672
      %v1094 = vadd.f32 %v1069, %v672
      %v1095 = vadd.f32 %v1070, %v672
      %v1096 = vadd.f32 %v1071, %v672
      %v1097 = vadd.f32 %v1072, %v672
      %v1098 = vadd.f32 %v1073, %v672
      %v1099 = vadd.f32 %v1074, %v672
      %v1100 = vadd.f32 %v1075, %v672
      %v1101 = vadd.f32 %v1076, %v672
      %v1102 = vadd.f32 %v1077, %v672
      %v1103 = vadd.f32 %v1078, %v672
      %v1104 = vadd.f32 %v1079, %v672
      %v1105 = vadd.f32 %v1080, %v672
      %v1106 = vadd.f32 %v1081, %v672
      %v1107 = vadd.f32 %v1082, %v672
      %v1108 = vadd.f32 %v1083, %v672
      %v1109 = vadd.f32 %v1084, %v672
      %v1110 = vadd.f32 %v1085, %v672
      %v1111 = vadd.f32 %v1086, %v672
      %v1112 = vadd.f32 %v1087, %v672
      %v1113 = vmax.f32 %v674, %v1088
      %v1114 = vmax.f32 %v675, %v1089
      %v1115 = vmax.f32 %v676, %v1090
      %v1116 = vmax.f32 %v677, %v1091
      %v1117 = vmax.f32 %v678, %v1092
      %v1118 = vmax.f32 %v679, %v1093
      %v1119 = vmax.f32 %v680, %v1094
      %v1120 = vmax.f32 %v681, %v1095
      %v1121 = vmax.f32 %v682, %v1096
      %v1122 = vmax.f32 %v683, %v1097
      %v1123 = vmax.f32 %v684, %v1098
      %v1124 = vmax.f32 %v685, %v1099
      %v1125 = vmax.f32 %v686, %v1100
      %v1126 = vmax.f32 %v687, %v1101
      %v1127 = vmax.f32 %v688, %v1102
      %v1128 = vmax.f32 %v689, %v1103
      %v1129 = vmax.f32 %v690, %v1104
      %v1130 = vmax.f32 %v691, %v1105
      %v1131 = vmax.f32 %v692, %v1106
      %v1132 = vmax.f32 %v693, %v1107
      %v1133 = vmax.f32 %v694, %v1108
      %v1134 = vmax.f32 %v695, %v1109
      %v1135 = vmax.f32 %v696, %v1110
      %v1136 = vmax.f32 %v697, %v1111
      %v1137 = vmax.f32 %v698, %v1112
      %s1138 = scalar_lea.vmem %s247, 200
      %v1139 = vld [vmem:[%s1138] sm:$0xf]
      %v1140 = vld [vmem:[%s1138 + $0x4] sm:$0xf]
      %v1141 = vld [vmem:[%s1138 + $0x8] sm:$0xf]
      %v1142 = vld [vmem:[%s1138 + $0xc] sm:$0xf]
      %v1143 = vld [vmem:[%s1138 + $0x10] sm:$0xf]
      %v1144 = vld [vmem:[%s1138 + $0x14] sm:$0xf]
      %v1145 = vld [vmem:[%s1138 + $0x18] sm:$0xf]
      %v1146 = vld [vmem:[%s1138 + $0x1c] sm:$0xf]
      %v1147 = vld [vmem:[%s1138 + $0x20] sm:$0xf]
      %v1148 = vld [vmem:[%s1138 + $0x24] sm:$0xf]
      %v1149 = vld [vmem:[%s1138 + $0x28] sm:$0xf]
      %v1150 = vld [vmem:[%s1138 + $0x2c] sm:$0xf]
      %v1151 = vld [vmem:[%s1138 + $0x30] sm:$0xf]
      %v1152 = vld [vmem:[%s1138 + $0x34] sm:$0xf]
      %v1153 = vld [vmem:[%s1138 + $0x38] sm:$0xf]
      %v1154 = vld [vmem:[%s1138 + $0x3c] sm:$0xf]
      %v1155 = vld [vmem:[%s1138 + $0x40] sm:$0xf]
      %v1156 = vld [vmem:[%s1138 + $0x44] sm:$0xf]
      %v1157 = vld [vmem:[%s1138 + $0x48] sm:$0xf]
      %v1158 = vld [vmem:[%s1138 + $0x4c] sm:$0xf]
      %v1159 = vld [vmem:[%s1138 + $0x50] sm:$0xf]
      %v1160 = vld [vmem:[%s1138 + $0x54] sm:$0xf]
      %v1161 = vld [vmem:[%s1138 + $0x58] sm:$0xf]
      %v1162 = vld [vmem:[%s1138 + $0x5c] sm:$0xf]
      %v1163 = vld [vmem:[%s1138 + $0x60] sm:$0x3]
      %v1189 = vunpack.c.l.b16 %v1139
      %v1190 = vunpack.c.l.b16 %v1140
      %v1191 = vunpack.c.l.b16 %v1141
      %v1192 = vunpack.c.l.b16 %v1142
      %v1193 = vunpack.c.l.b16 %v1143
      %v1194 = vunpack.c.l.b16 %v1144
      %v1195 = vunpack.c.l.b16 %v1145
      %v1196 = vunpack.c.l.b16 %v1146
      %v1197 = vunpack.c.l.b16 %v1147
      %v1198 = vunpack.c.l.b16 %v1148
      %v1199 = vunpack.c.l.b16 %v1149
      %v1200 = vunpack.c.l.b16 %v1150
      %v1201 = vunpack.c.l.b16 %v1151
      %v1202 = vunpack.c.l.b16 %v1152
      %v1203 = vunpack.c.l.b16 %v1153
      %v1204 = vunpack.c.l.b16 %v1154
      %v1205 = vunpack.c.l.b16 %v1155
      %v1206 = vunpack.c.l.b16 %v1156
      %v1207 = vunpack.c.l.b16 %v1157
      %v1208 = vunpack.c.l.b16 %v1158
      %v1209 = vunpack.c.l.b16 %v1159
      %v1210 = vunpack.c.l.b16 %v1160
      %v1211 = vunpack.c.l.b16 %v1161
      %v1212 = vunpack.c.l.b16 %v1162
      %v1213 = vunpack.c.l.b16 %v1163
      %v1214 = vpack.c.b16 %v1190, %v1189
      %v1215 = vpack.c.b16 %v1192, %v1191
      %v1216 = vpack.c.b16 %v1194, %v1193
      %v1217 = vpack.c.b16 %v1196, %v1195
      %v1218 = vpack.c.b16 %v1198, %v1197
      %v1219 = vpack.c.b16 %v1200, %v1199
      %v1220 = vpack.c.b16 %v1202, %v1201
      %v1221 = vpack.c.b16 %v1204, %v1203
      %v1222 = vpack.c.b16 %v1206, %v1205
      %v1223 = vpack.c.b16 %v1208, %v1207
      %v1224 = vpack.c.b16 %v1210, %v1209
      %v1225 = vpack.c.b16 %v1212, %v1211
      %v1226 = vpack.c.b16 %v1213, %v1213
      %v1228 = vsel %vm360, %v1214, 0
      %v1231 = vsel %vm360, %v1215, 0
      %v1234 = vsel %vm360, %v1216, 0
      %v1237 = vsel %vm360, %v1217, 0
      %v1240 = vsel %vm360, %v1218, 0
      %v1243 = vsel %vm360, %v1219, 0
      %v1246 = vsel %vm360, %v1220, 0
      %v1249 = vsel %vm360, %v1221, 0
      %v1252 = vsel %vm360, %v1222, 0
      %v1255 = vsel %vm360, %v1223, 0
      %v1258 = vsel %vm360, %v1224, 0
      %v1261 = vsel %vm360, %v1225, 0
      %v1264 = vsel %vm360, %v1226, 0
      %1266 = vmatprep.subr.bf16.mxu0 0
      %1267 = vmatpush1.bf16.msra.mxu0 %v358
      %1268 = vmatprep.subr.bf16.mxu0 0
      %1269 = vmatpush1.bf16.msra.mxu0 0
      %1270 = vmatprep.subr.bf16.mxu0 0
      %1271 = vmatpush1.bf16.msra.mxu0 0
      %1272 = vmatprep.subr.bf16.mxu0 0
      %1273 = vmatpush1.bf16.msra.mxu0 0
      %1274 = vmatprep.subr.bf16.mxu0 0
      %1275 = vmatpush1.bf16.msra.mxu0 0
      %1276 = vmatprep.subr.bf16.mxu0 0
      %1277 = vmatpush1.bf16.msra.mxu0 0
      %1278 = vmatprep.subr.bf16.mxu0 0
      %1279 = vmatpush1.bf16.msra.mxu0 0
      %1280 = vmatprep.subr.bf16.mxu0 0
      %1281 = vmatpush1.bf16.msra.mxu0 0
      %1282 = vmatprep.subr.bf16.mxu0 0
      %1283 = vmatpush1.bf16.msra.mxu0 0
      %1284 = vmatprep.subr.bf16.mxu0 0
      %1285 = vmatpush1.bf16.msra.mxu0 0
      %1286 = vmatprep.subr.bf16.mxu0 0
      %1287 = vmatpush1.bf16.msra.mxu0 0
      %1288 = vmatprep.subr.bf16.mxu0 0
      %1289 = vmatpush1.bf16.msra.mxu0 0
      %1290 = vmatprep.subr.bf16.mxu0 0
      %1291 = vmatpush1.bf16.msra.mxu0 0
      %1292 = vmatprep.subr.bf16.mxu0 0
      %1293 = vmatpush1.bf16.msra.mxu0 0
      %1294 = vmatprep.subr.bf16.mxu0 0
      %1295 = vmatpush1.bf16.msra.mxu0 0
      %1296 = vmatprep.subr.bf16.mxu0 0
      %1297 = vmatpush1.bf16.msra.mxu0 0
      %1298 = vmatprep.mubr.bf16.mxu0 0
      %1299 = vmatmul.mubr.bf16.gmra.mrb[0].mxu0 %v1228
      %v1300 = vpop.f32.mrb[0].mxu0
      %v1301 = vadd.f32 %v289, %v1300
      %v1302 = vpop.f32.mrb[0].mxu0
      %v1303 = vpop.f32.mrb[0].mxu0
      %v1304 = vadd.f32 %v289, %v1303
      %v1305 = vpop.f32.mrb[0].mxu0
      %1306 = vmatprep.mubr.bf16.mxu0 0
      %1307 = vmatmul.mubr.bf16.gmra.mrb[0].mxu0 %v1231
      %v1308 = vpop.f32.mrb[0].mxu0
      %v1309 = vadd.f32 %v289, %v1308
      %v1310 = vpop.f32.mrb[0].mxu0
      %v1311 = vpop.f32.mrb[0].mxu0
      %v1312 = vadd.f32 %v289, %v1311
      %v1313 = vpop.f32.mrb[0].mxu0
      %1314 = vmatprep.mubr.bf16.mxu0 0
      %1315 = vmatmul.mubr.bf16.gmra.mrb[0].mxu0 %v1234
      %v1316 = vpop.f32.mrb[0].mxu0
      %v1317 = vadd.f32 %v289, %v1316
      %v1318 = vpop.f32.mrb[0].mxu0
      %v1319 = vpop.f32.mrb[0].mxu0
      %v1320 = vadd.f32 %v289, %v1319
      %v1321 = vpop.f32.mrb[0].mxu0
      %1322 = vmatprep.mubr.bf16.mxu0 0
      %1323 = vmatmul.mubr.bf16.gmra.mrb[0].mxu0 %v1237
      %v1324 = vpop.f32.mrb[0].mxu0
      %v1325 = vadd.f32 %v289, %v1324
      %v1326 = vpop.f32.mrb[0].mxu0
      %v1327 = vpop.f32.mrb[0].mxu0
      %v1328 = vadd.f32 %v289, %v1327
      %v1329 = vpop.f32.mrb[0].mxu0
      %1330 = vmatprep.mubr.bf16.mxu0 0
      %1331 = vmatmul.mubr.bf16.gmra.mrb[0].mxu0 %v1240
      %v1332 = vpop.f32.mrb[0].mxu0
      %v1333 = vadd.f32 %v289, %v1332
      %v1334 = vpop.f32.mrb[0].mxu0
      %v1335 = vpop.f32.mrb[0].mxu0
      %v1336 = vadd.f32 %v289, %v1335
      %v1337 = vpop.f32.mrb[0].mxu0
      %1338 = vmatprep.mubr.bf16.mxu0 0
      %1339 = vmatmul.mubr.bf16.gmra.mrb[0].mxu0 %v1243
      %v1340 = vpop.f32.mrb[0].mxu0
      %v1341 = vadd.f32 %v289, %v1340
      %v1342 = vpop.f32.mrb[0].mxu0
      %v1343 = vpop.f32.mrb[0].mxu0
      %v1344 = vadd.f32 %v289, %v1343
      %v1345 = vpop.f32.mrb[0].mxu0
      %1346 = vmatprep.mubr.bf16.mxu0 0
      %1347 = vmatmul.mubr.bf16.gmra.mrb[0].mxu0 %v1246
      %v1348 = vpop.f32.mrb[0].mxu0
      %v1349 = vadd.f32 %v289, %v1348
      %v1350 = vpop.f32.mrb[0].mxu0
      %v1351 = vpop.f32.mrb[0].mxu0
      %v1352 = vadd.f32 %v289, %v1351
      %v1353 = vpop.f32.mrb[0].mxu0
      %1354 = vmatprep.mubr.bf16.mxu0 0
      %1355 = vmatmul.mubr.bf16.gmra.mrb[0].mxu0 %v1249
      %v1356 = vpop.f32.mrb[0].mxu0
      %v1357 = vadd.f32 %v289, %v1356
      %v1358 = vpop.f32.mrb[0].mxu0
      %v1359 = vpop.f32.mrb[0].mxu0
      %v1360 = vadd.f32 %v289, %v1359
      %v1361 = vpop.f32.mrb[0].mxu0
      %1362 = vmatprep.mubr.bf16.mxu0 0
      %1363 = vmatmul.mubr.bf16.gmra.mrb[0].mxu0 %v1252
      %v1364 = vpop.f32.mrb[0].mxu0
      %v1365 = vadd.f32 %v289, %v1364
      %v1366 = vpop.f32.mrb[0].mxu0
      %v1367 = vpop.f32.mrb[0].mxu0
      %v1368 = vadd.f32 %v289, %v1367
      %v1369 = vpop.f32.mrb[0].mxu0
      %1370 = vmatprep.mubr.bf16.mxu0 0
      %1371 = vmatmul.mubr.bf16.gmra.mrb[0].mxu0 %v1255
      %v1372 = vpop.f32.mrb[0].mxu0
      %v1373 = vadd.f32 %v289, %v1372
      %v1374 = vpop.f32.mrb[0].mxu0
      %v1375 = vpop.f32.mrb[0].mxu0
      %v1376 = vadd.f32 %v289, %v1375
      %v1377 = vpop.f32.mrb[0].mxu0
      %1378 = vmatprep.mubr.bf16.mxu0 0
      %1379 = vmatmul.mubr.bf16.gmra.mrb[0].mxu0 %v1258
      %v1380 = vpop.f32.mrb[0].mxu0
      %v1381 = vadd.f32 %v289, %v1380
      %v1382 = vpop.f32.mrb[0].mxu0
      %v1383 = vpop.f32.mrb[0].mxu0
      %v1384 = vadd.f32 %v289, %v1383
      %v1385 = vpop.f32.mrb[0].mxu0
      %1386 = vmatprep.mubr.bf16.mxu0 0
      %1387 = vmatmul.mubr.bf16.gmra.mrb[0].mxu0 %v1261
      %v1388 = vpop.f32.mrb[0].mxu0
      %v1389 = vadd.f32 %v289, %v1388
      %v1390 = vpop.f32.mrb[0].mxu0
      %v1391 = vpop.f32.mrb[0].mxu0
      %v1392 = vadd.f32 %v289, %v1391
      %v1393 = vpop.f32.mrb[0].mxu0
      %1394 = vmatprep.mubr.bf16.mxu0 0
      %1395 = vmatmul.mubr.bf16.gmra.mrb[0].mxu0 %v1264
      %v1396 = vpop.f32.mrb[0].mxu0
      %v1397 = vadd.f32 %v289, %v1396
      %v1398 = vpop.f32.mrb[0].mxu0
      %v1399 = vpop.f32.mrb[0].mxu0
      %v1400 = vpop.f32.mrb[0].mxu0
      %1401 = vdwg.mxu0
      %v1402 = vmax.f32 %v1301, 0.0
      %v1403 = vmax.f32 %v1304, 0.0
      %v1404 = vmax.f32 %v1309, 0.0
      %v1405 = vmax.f32 %v1312, 0.0
      %v1406 = vmax.f32 %v1317, 0.0
      %v1407 = vmax.f32 %v1320, 0.0
      %v1408 = vmax.f32 %v1325, 0.0
      %v1409 = vmax.f32 %v1328, 0.0
      %v1410 = vmax.f32 %v1333, 0.0
      %v1411 = vmax.f32 %v1336, 0.0
      %v1412 = vmax.f32 %v1341, 0.0
      %v1413 = vmax.f32 %v1344, 0.0
      %v1414 = vmax.f32 %v1349, 0.0
      %v1415 = vmax.f32 %v1352, 0.0
      %v1416 = vmax.f32 %v1357, 0.0
      %v1417 = vmax.f32 %v1360, 0.0
      %v1418 = vmax.f32 %v1365, 0.0
      %v1419 = vmax.f32 %v1368, 0.0
      %v1420 = vmax.f32 %v1373, 0.0
      %v1421 = vmax.f32 %v1376, 0.0
      %v1422 = vmax.f32 %v1381, 0.0
      %v1423 = vmax.f32 %v1384, 0.0
      %v1424 = vmax.f32 %v1389, 0.0
      %v1425 = vmax.f32 %v1392, 0.0
      %v1426 = vmax.f32 %v1397, 0.0
      %v1427 = vmin.f32 %v1301, 0.0
      %v1428 = vmin.f32 %v1304, 0.0
      %v1429 = vmin.f32 %v1309, 0.0
      %v1430 = vmin.f32 %v1312, 0.0
      %v1431 = vmin.f32 %v1317, 0.0
      %v1432 = vmin.f32 %v1320, 0.0
      %v1433 = vmin.f32 %v1325, 0.0
      %v1434 = vmin.f32 %v1328, 0.0
      %v1435 = vmin.f32 %v1333, 0.0
      %v1436 = vmin.f32 %v1336, 0.0
      %v1437 = vmin.f32 %v1341, 0.0
      %v1438 = vmin.f32 %v1344, 0.0
      %v1439 = vmin.f32 %v1349, 0.0
      %v1440 = vmin.f32 %v1352, 0.0
      %v1441 = vmin.f32 %v1357, 0.0
      %v1442 = vmin.f32 %v1360, 0.0
      %v1443 = vmin.f32 %v1365, 0.0
      %v1444 = vmin.f32 %v1368, 0.0
      %v1445 = vmin.f32 %v1373, 0.0
      %v1446 = vmin.f32 %v1376, 0.0
      %v1447 = vmin.f32 %v1381, 0.0
      %v1448 = vmin.f32 %v1384, 0.0
      %v1449 = vmin.f32 %v1389, 0.0
      %v1450 = vmin.f32 %v1392, 0.0
      %v1451 = vmin.f32 %v1397, 0.0
      %v1452 = vmul.f32 %v586, %v1427
      %v1453 = vmul.f32 %v586, %v1428
      %v1454 = vmul.f32 %v586, %v1429
      %v1455 = vmul.f32 %v586, %v1430
      %v1456 = vmul.f32 %v586, %v1431
      %v1457 = vmul.f32 %v586, %v1432
      %v1458 = vmul.f32 %v586, %v1433
      %v1459 = vmul.f32 %v586, %v1434
      %v1460 = vmul.f32 %v586, %v1435
      %v1461 = vmul.f32 %v586, %v1436
      %v1462 = vmul.f32 %v586, %v1437
      %v1463 = vmul.f32 %v586, %v1438
      %v1464 = vmul.f32 %v586, %v1439
      %v1465 = vmul.f32 %v586, %v1440
      %v1466 = vmul.f32 %v586, %v1441
      %v1467 = vmul.f32 %v586, %v1442
      %v1468 = vmul.f32 %v586, %v1443
      %v1469 = vmul.f32 %v586, %v1444
      %v1470 = vmul.f32 %v586, %v1445
      %v1471 = vmul.f32 %v586, %v1446
      %v1472 = vmul.f32 %v586, %v1447
      %v1473 = vmul.f32 %v586, %v1448
      %v1474 = vmul.f32 %v586, %v1449
      %v1475 = vmul.f32 %v586, %v1450
      %v1476 = vmul.f32 %v586, %v1451
      %v1477 = vadd.f32 %v1402, %v1452
      %v1478 = vadd.f32 %v1403, %v1453
      %v1479 = vadd.f32 %v1404, %v1454
      %v1480 = vadd.f32 %v1405, %v1455
      %v1481 = vadd.f32 %v1406, %v1456
      %v1482 = vadd.f32 %v1407, %v1457
      %v1483 = vadd.f32 %v1408, %v1458
      %v1484 = vadd.f32 %v1409, %v1459
      %v1485 = vadd.f32 %v1410, %v1460
      %v1486 = vadd.f32 %v1411, %v1461
      %v1487 = vadd.f32 %v1412, %v1462
      %v1488 = vadd.f32 %v1413, %v1463
      %v1489 = vadd.f32 %v1414, %v1464
      %v1490 = vadd.f32 %v1415, %v1465
      %v1491 = vadd.f32 %v1416, %v1466
      %v1492 = vadd.f32 %v1417, %v1467
      %v1493 = vadd.f32 %v1418, %v1468
      %v1494 = vadd.f32 %v1419, %v1469
      %v1495 = vadd.f32 %v1420, %v1470
      %v1496 = vadd.f32 %v1421, %v1471
      %v1497 = vadd.f32 %v1422, %v1472
      %v1498 = vadd.f32 %v1423, %v1473
      %v1499 = vadd.f32 %v1424, %v1474
      %v1500 = vadd.f32 %v1425, %v1475
      %v1501 = vadd.f32 %v1426, %v1476
      %v1502 = vmul.f32 %v1477, %v641
      %v1503 = vmul.f32 %v1478, %v641
      %v1504 = vmul.f32 %v1479, %v641
      %v1505 = vmul.f32 %v1480, %v641
      %v1506 = vmul.f32 %v1481, %v641
      %v1507 = vmul.f32 %v1482, %v641
      %v1508 = vmul.f32 %v1483, %v641
      %v1509 = vmul.f32 %v1484, %v641
      %v1510 = vmul.f32 %v1485, %v641
      %v1511 = vmul.f32 %v1486, %v641
      %v1512 = vmul.f32 %v1487, %v641
      %v1513 = vmul.f32 %v1488, %v641
      %v1514 = vmul.f32 %v1489, %v641
      %v1515 = vmul.f32 %v1490, %v641
      %v1516 = vmul.f32 %v1491, %v641
      %v1517 = vmul.f32 %v1492, %v641
      %v1518 = vmul.f32 %v1493, %v641
      %v1519 = vmul.f32 %v1494, %v641
      %v1520 = vmul.f32 %v1495, %v641
      %v1521 = vmul.f32 %v1496, %v641
      %v1522 = vmul.f32 %v1497, %v641
      %v1523 = vmul.f32 %v1498, %v641
      %v1524 = vmul.f32 %v1499, %v641
      %v1525 = vmul.f32 %v1500, %v641
      %v1526 = vmul.f32 %v1501, %v641
      %v1527 = vadd.f32 %v1502, %v672
      %v1528 = vadd.f32 %v1503, %v672
      %v1529 = vadd.f32 %v1504, %v672
      %v1530 = vadd.f32 %v1505, %v672
      %v1531 = vadd.f32 %v1506, %v672
      %v1532 = vadd.f32 %v1507, %v672
      %v1533 = vadd.f32 %v1508, %v672
      %v1534 = vadd.f32 %v1509, %v672
      %v1535 = vadd.f32 %v1510, %v672
      %v1536 = vadd.f32 %v1511, %v672
      %v1537 = vadd.f32 %v1512, %v672
      %v1538 = vadd.f32 %v1513, %v672
      %v1539 = vadd.f32 %v1514, %v672
      %v1540 = vadd.f32 %v1515, %v672
      %v1541 = vadd.f32 %v1516, %v672
      %v1542 = vadd.f32 %v1517, %v672
      %v1543 = vadd.f32 %v1518, %v672
      %v1544 = vadd.f32 %v1519, %v672
      %v1545 = vadd.f32 %v1520, %v672
      %v1546 = vadd.f32 %v1521, %v672
      %v1547 = vadd.f32 %v1522, %v672
      %v1548 = vadd.f32 %v1523, %v672
      %v1549 = vadd.f32 %v1524, %v672
      %v1550 = vadd.f32 %v1525, %v672
      %v1551 = vadd.f32 %v1526, %v672
      %v1552 = vmax.f32 %v1113, %v1527
      %v1553 = vmax.f32 %v1114, %v1528
      %v1554 = vmax.f32 %v1115, %v1529
      %v1555 = vmax.f32 %v1116, %v1530
      %v1556 = vmax.f32 %v1117, %v1531
      %v1557 = vmax.f32 %v1118, %v1532
      %v1558 = vmax.f32 %v1119, %v1533
      %v1559 = vmax.f32 %v1120, %v1534
      %v1560 = vmax.f32 %v1121, %v1535
      %v1561 = vmax.f32 %v1122, %v1536
      %v1562 = vmax.f32 %v1123, %v1537
      %v1563 = vmax.f32 %v1124, %v1538
      %v1564 = vmax.f32 %v1125, %v1539
      %v1565 = vmax.f32 %v1126, %v1540
      %v1566 = vmax.f32 %v1127, %v1541
      %v1567 = vmax.f32 %v1128, %v1542
      %v1568 = vmax.f32 %v1129, %v1543
      %v1569 = vmax.f32 %v1130, %v1544
      %v1570 = vmax.f32 %v1131, %v1545
      %v1571 = vmax.f32 %v1132, %v1546
      %v1572 = vmax.f32 %v1133, %v1547
      %v1573 = vmax.f32 %v1134, %v1548
      %v1574 = vmax.f32 %v1135, %v1549
      %v1575 = vmax.f32 %v1136, %v1550
      %v1576 = vmax.f32 %v1137, %v1551
      %s1577 = scalar_lea.vmem %s247, 300
      %v1578 = vld [vmem:[%s1577] sm:$0xf]
      %v1579 = vld [vmem:[%s1577 + $0x4] sm:$0xf]
      %v1580 = vld [vmem:[%s1577 + $0x8] sm:$0xf]
      %v1581 = vld [vmem:[%s1577 + $0xc] sm:$0xf]
      %v1582 = vld [vmem:[%s1577 + $0x10] sm:$0xf]
      %v1583 = vld [vmem:[%s1577 + $0x14] sm:$0xf]
      %v1584 = vld [vmem:[%s1577 + $0x18] sm:$0xf]
      %v1585 = vld [vmem:[%s1577 + $0x1c] sm:$0xf]
      %v1586 = vld [vmem:[%s1577 + $0x20] sm:$0xf]
      %v1587 = vld [vmem:[%s1577 + $0x24] sm:$0xf]
      %v1588 = vld [vmem:[%s1577 + $0x28] sm:$0xf]
      %v1589 = vld [vmem:[%s1577 + $0x2c] sm:$0xf]
      %v1590 = vld [vmem:[%s1577 + $0x30] sm:$0xf]
      %v1591 = vld [vmem:[%s1577 + $0x34] sm:$0xf]
      %v1592 = vld [vmem:[%s1577 + $0x38] sm:$0xf]
      %v1593 = vld [vmem:[%s1577 + $0x3c] sm:$0xf]
      %v1594 = vld [vmem:[%s1577 + $0x40] sm:$0xf]
      %v1595 = vld [vmem:[%s1577 + $0x44] sm:$0xf]
      %v1596 = vld [vmem:[%s1577 + $0x48] sm:$0xf]
      %v1597 = vld [vmem:[%s1577 + $0x4c] sm:$0xf]
      %v1598 = vld [vmem:[%s1577 + $0x50] sm:$0xf]
      %v1599 = vld [vmem:[%s1577 + $0x54] sm:$0xf]
      %v1600 = vld [vmem:[%s1577 + $0x58] sm:$0xf]
      %v1601 = vld [vmem:[%s1577 + $0x5c] sm:$0xf]
      %v1602 = vld [vmem:[%s1577 + $0x60] sm:$0x3]
      %v1628 = vunpack.c.l.b16 %v1578
      %v1629 = vunpack.c.l.b16 %v1579
      %v1630 = vunpack.c.l.b16 %v1580
      %v1631 = vunpack.c.l.b16 %v1581
      %v1632 = vunpack.c.l.b16 %v1582
      %v1633 = vunpack.c.l.b16 %v1583
      %v1634 = vunpack.c.l.b16 %v1584
      %v1635 = vunpack.c.l.b16 %v1585
      %v1636 = vunpack.c.l.b16 %v1586
      %v1637 = vunpack.c.l.b16 %v1587
      %v1638 = vunpack.c.l.b16 %v1588
      %v1639 = vunpack.c.l.b16 %v1589
      %v1640 = vunpack.c.l.b16 %v1590
      %v1641 = vunpack.c.l.b16 %v1591
      %v1642 = vunpack.c.l.b16 %v1592
      %v1643 = vunpack.c.l.b16 %v1593
      %v1644 = vunpack.c.l.b16 %v1594
      %v1645 = vunpack.c.l.b16 %v1595
      %v1646 = vunpack.c.l.b16 %v1596
      %v1647 = vunpack.c.l.b16 %v1597
      %v1648 = vunpack.c.l.b16 %v1598
      %v1649 = vunpack.c.l.b16 %v1599
      %v1650 = vunpack.c.l.b16 %v1600
      %v1651 = vunpack.c.l.b16 %v1601
      %v1652 = vunpack.c.l.b16 %v1602
      %v1653 = vpack.c.b16 %v1629, %v1628
      %v1654 = vpack.c.b16 %v1631, %v1630
      %v1655 = vpack.c.b16 %v1633, %v1632
      %v1656 = vpack.c.b16 %v1635, %v1634
      %v1657 = vpack.c.b16 %v1637, %v1636
      %v1658 = vpack.c.b16 %v1639, %v1638
      %v1659 = vpack.c.b16 %v1641, %v1640
      %v1660 = vpack.c.b16 %v1643, %v1642
      %v1661 = vpack.c.b16 %v1645, %v1644
      %v1662 = vpack.c.b16 %v1647, %v1646
      %v1663 = vpack.c.b16 %v1649, %v1648
      %v1664 = vpack.c.b16 %v1651, %v1650
      %v1665 = vpack.c.b16 %v1652, %v1652
      %v1667 = vsel %vm360, %v1653, 0
      %v1670 = vsel %vm360, %v1654, 0
      %v1673 = vsel %vm360, %v1655, 0
      %v1676 = vsel %vm360, %v1656, 0
      %v1679 = vsel %vm360, %v1657, 0
      %v1682 = vsel %vm360, %v1658, 0
      %v1685 = vsel %vm360, %v1659, 0
      %v1688 = vsel %vm360, %v1660, 0
      %v1691 = vsel %vm360, %v1661, 0
      %v1694 = vsel %vm360, %v1662, 0
      %v1697 = vsel %vm360, %v1663, 0
      %v1700 = vsel %vm360, %v1664, 0
      %v1703 = vsel %vm360, %v1665, 0
      %1705 = vmatprep.subr.bf16.mxu0 0
      %1706 = vmatpush1.bf16.msra.mxu0 %v358
      %1707 = vmatprep.subr.bf16.mxu0 0
      %1708 = vmatpush1.bf16.msra.mxu0 0
      %1709 = vmatprep.subr.bf16.mxu0 0
      %1710 = vmatpush1.bf16.msra.mxu0 0
      %1711 = vmatprep.subr.bf16.mxu0 0
      %1712 = vmatpush1.bf16.msra.mxu0 0
      %1713 = vmatprep.subr.bf16.mxu0 0
      %1714 = vmatpush1.bf16.msra.mxu0 0
      %1715 = vmatprep.subr.bf16.mxu0 0
      %1716 = vmatpush1.bf16.msra.mxu0 0
      %1717 = vmatprep.subr.bf16.mxu0 0
      %1718 = vmatpush1.bf16.msra.mxu0 0
      %1719 = vmatprep.subr.bf16.mxu0 0
      %1720 = vmatpush1.bf16.msra.mxu0 0
      %1721 = vmatprep.subr.bf16.mxu0 0
      %1722 = vmatpush1.bf16.msra.mxu0 0
      %1723 = vmatprep.subr.bf16.mxu0 0
      %1724 = vmatpush1.bf16.msra.mxu0 0
      %1725 = vmatprep.subr.bf16.mxu0 0
      %1726 = vmatpush1.bf16.msra.mxu0 0
      %1727 = vmatprep.subr.bf16.mxu0 0
      %1728 = vmatpush1.bf16.msra.mxu0 0
      %1729 = vmatprep.subr.bf16.mxu0 0
      %1730 = vmatpush1.bf16.msra.mxu0 0
      %1731 = vmatprep.subr.bf16.mxu0 0
      %1732 = vmatpush1.bf16.msra.mxu0 0
      %1733 = vmatprep.subr.bf16.mxu0 0
      %1734 = vmatpush1.bf16.msra.mxu0 0
      %1735 = vmatprep.subr.bf16.mxu0 0
      %1736 = vmatpush1.bf16.msra.mxu0 0
      %1737 = vmatprep.mubr.bf16.mxu0 0
      %1738 = vmatmul.mubr.bf16.gmra.mrb[0].mxu0 %v1667
      %v1739 = vpop.f32.mrb[0].mxu0
      %v1740 = vadd.f32 %v289, %v1739
      %v1741 = vpop.f32.mrb[0].mxu0
      %v1742 = vpop.f32.mrb[0].mxu0
      %v1743 = vadd.f32 %v289, %v1742
      %v1744 = vpop.f32.mrb[0].mxu0
      %1745 = vmatprep.mubr.bf16.mxu0 0
      %1746 = vmatmul.mubr.bf16.gmra.mrb[0].mxu0 %v1670
      %v1747 = vpop.f32.mrb[0].mxu0
      %v1748 = vadd.f32 %v289, %v1747
      %v1749 = vpop.f32.mrb[0].mxu0
      %v1750 = vpop.f32.mrb[0].mxu0
      %v1751 = vadd.f32 %v289, %v1750
      %v1752 = vpop.f32.mrb[0].mxu0
      %1753 = vmatprep.mubr.bf16.mxu0 0
      %1754 = vmatmul.mubr.bf16.gmra.mrb[0].mxu0 %v1673
      %v1755 = vpop.f32.mrb[0].mxu0
      %v1756 = vadd.f32 %v289, %v1755
      %v1757 = vpop.f32.mrb[0].mxu0
      %v1758 = vpop.f32.mrb[0].mxu0
      %v1759 = vadd.f32 %v289, %v1758
      %v1760 = vpop.f32.mrb[0].mxu0
      %1761 = vmatprep.mubr.bf16.mxu0 0
      %1762 = vmatmul.mubr.bf16.gmra.mrb[0].mxu0 %v1676
      %v1763 = vpop.f32.mrb[0].mxu0
      %v1764 = vadd.f32 %v289, %v1763
      %v1765 = vpop.f32.mrb[0].mxu0
      %v1766 = vpop.f32.mrb[0].mxu0
      %v1767 = vadd.f32 %v289, %v1766
      %v1768 = vpop.f32.mrb[0].mxu0
      %1769 = vmatprep.mubr.bf16.mxu0 0
      %1770 = vmatmul.mubr.bf16.gmra.mrb[0].mxu0 %v1679
      %v1771 = vpop.f32.mrb[0].mxu0
      %v1772 = vadd.f32 %v289, %v1771
      %v1773 = vpop.f32.mrb[0].mxu0
      %v1774 = vpop.f32.mrb[0].mxu0
      %v1775 = vadd.f32 %v289, %v1774
      %v1776 = vpop.f32.mrb[0].mxu0
      %1777 = vmatprep.mubr.bf16.mxu0 0
      %1778 = vmatmul.mubr.bf16.gmra.mrb[0].mxu0 %v1682
      %v1779 = vpop.f32.mrb[0].mxu0
      %v1780 = vadd.f32 %v289, %v1779
      %v1781 = vpop.f32.mrb[0].mxu0
      %v1782 = vpop.f32.mrb[0].mxu0
      %v1783 = vadd.f32 %v289, %v1782
      %v1784 = vpop.f32.mrb[0].mxu0
      %1785 = vmatprep.mubr.bf16.mxu0 0
      %1786 = vmatmul.mubr.bf16.gmra.mrb[0].mxu0 %v1685
      %v1787 = vpop.f32.mrb[0].mxu0
      %v1788 = vadd.f32 %v289, %v1787
      %v1789 = vpop.f32.mrb[0].mxu0
      %v1790 = vpop.f32.mrb[0].mxu0
      %v1791 = vadd.f32 %v289, %v1790
      %v1792 = vpop.f32.mrb[0].mxu0
      %1793 = vmatprep.mubr.bf16.mxu0 0
      %1794 = vmatmul.mubr.bf16.gmra.mrb[0].mxu0 %v1688
      %v1795 = vpop.f32.mrb[0].mxu0
      %v1796 = vadd.f32 %v289, %v1795
      %v1797 = vpop.f32.mrb[0].mxu0
      %v1798 = vpop.f32.mrb[0].mxu0
      %v1799 = vadd.f32 %v289, %v1798
      %v1800 = vpop.f32.mrb[0].mxu0
      %1801 = vmatprep.mubr.bf16.mxu0 0
      %1802 = vmatmul.mubr.bf16.gmra.mrb[0].mxu0 %v1691
      %v1803 = vpop.f32.mrb[0].mxu0
      %v1804 = vadd.f32 %v289, %v1803
      %v1805 = vpop.f32.mrb[0].mxu0
      %v1806 = vpop.f32.mrb[0].mxu0
      %v1807 = vadd.f32 %v289, %v1806
      %v1808 = vpop.f32.mrb[0].mxu0
      %1809 = vmatprep.mubr.bf16.mxu0 0
      %1810 = vmatmul.mubr.bf16.gmra.mrb[0].mxu0 %v1694
      %v1811 = vpop.f32.mrb[0].mxu0
      %v1812 = vadd.f32 %v289, %v1811
      %v1813 = vpop.f32.mrb[0].mxu0
      %v1814 = vpop.f32.mrb[0].mxu0
      %v1815 = vadd.f32 %v289, %v1814
      %v1816 = vpop.f32.mrb[0].mxu0
      %1817 = vmatprep.mubr.bf16.mxu0 0
      %1818 = vmatmul.mubr.bf16.gmra.mrb[0].mxu0 %v1697
      %v1819 = vpop.f32.mrb[0].mxu0
      %v1820 = vadd.f32 %v289, %v1819
      %v1821 = vpop.f32.mrb[0].mxu0
      %v1822 = vpop.f32.mrb[0].mxu0
      %v1823 = vadd.f32 %v289, %v1822
      %v1824 = vpop.f32.mrb[0].mxu0
      %1825 = vmatprep.mubr.bf16.mxu0 0
      %1826 = vmatmul.mubr.bf16.gmra.mrb[0].mxu0 %v1700
      %v1827 = vpop.f32.mrb[0].mxu0
      %v1828 = vadd.f32 %v289, %v1827
      %v1829 = vpop.f32.mrb[0].mxu0
      %v1830 = vpop.f32.mrb[0].mxu0
      %v1831 = vadd.f32 %v289, %v1830
      %v1832 = vpop.f32.mrb[0].mxu0
      %1833 = vmatprep.mubr.bf16.mxu0 0
      %1834 = vmatmul.mubr.bf16.gmra.mrb[0].mxu0 %v1703
      %v1835 = vpop.f32.mrb[0].mxu0
      %v1836 = vadd.f32 %v289, %v1835
      %v1837 = vpop.f32.mrb[0].mxu0
      %v1838 = vpop.f32.mrb[0].mxu0
      %v1839 = vpop.f32.mrb[0].mxu0
      %1840 = vdwg.mxu0
      %v1841 = vmax.f32 %v1740, 0.0
      %v1842 = vmax.f32 %v1743, 0.0
      %v1843 = vmax.f32 %v1748, 0.0
      %v1844 = vmax.f32 %v1751, 0.0
      %v1845 = vmax.f32 %v1756, 0.0
      %v1846 = vmax.f32 %v1759, 0.0
      %v1847 = vmax.f32 %v1764, 0.0
      %v1848 = vmax.f32 %v1767, 0.0
      %v1849 = vmax.f32 %v1772, 0.0
      %v1850 = vmax.f32 %v1775, 0.0
      %v1851 = vmax.f32 %v1780, 0.0
      %v1852 = vmax.f32 %v1783, 0.0
      %v1853 = vmax.f32 %v1788, 0.0
      %v1854 = vmax.f32 %v1791, 0.0
      %v1855 = vmax.f32 %v1796, 0.0
      %v1856 = vmax.f32 %v1799, 0.0
      %v1857 = vmax.f32 %v1804, 0.0
      %v1858 = vmax.f32 %v1807, 0.0
      %v1859 = vmax.f32 %v1812, 0.0
      %v1860 = vmax.f32 %v1815, 0.0
      %v1861 = vmax.f32 %v1820, 0.0
      %v1862 = vmax.f32 %v1823, 0.0
      %v1863 = vmax.f32 %v1828, 0.0
      %v1864 = vmax.f32 %v1831, 0.0
      %v1865 = vmax.f32 %v1836, 0.0
      %v1866 = vmin.f32 %v1740, 0.0
      %v1867 = vmin.f32 %v1743, 0.0
      %v1868 = vmin.f32 %v1748, 0.0
      %v1869 = vmin.f32 %v1751, 0.0
      %v1870 = vmin.f32 %v1756, 0.0
      %v1871 = vmin.f32 %v1759, 0.0
      %v1872 = vmin.f32 %v1764, 0.0
      %v1873 = vmin.f32 %v1767, 0.0
      %v1874 = vmin.f32 %v1772, 0.0
      %v1875 = vmin.f32 %v1775, 0.0
      %v1876 = vmin.f32 %v1780, 0.0
      %v1877 = vmin.f32 %v1783, 0.0
      %v1878 = vmin.f32 %v1788, 0.0
      %v1879 = vmin.f32 %v1791, 0.0
      %v1880 = vmin.f32 %v1796, 0.0
      %v1881 = vmin.f32 %v1799, 0.0
      %v1882 = vmin.f32 %v1804, 0.0
      %v1883 = vmin.f32 %v1807, 0.0
      %v1884 = vmin.f32 %v1812, 0.0
      %v1885 = vmin.f32 %v1815, 0.0
      %v1886 = vmin.f32 %v1820, 0.0
      %v1887 = vmin.f32 %v1823, 0.0
      %v1888 = vmin.f32 %v1828, 0.0
      %v1889 = vmin.f32 %v1831, 0.0
      %v1890 = vmin.f32 %v1836, 0.0
      %v1891 = vmul.f32 %v586, %v1866
      %v1892 = vmul.f32 %v586, %v1867
      %v1893 = vmul.f32 %v586, %v1868
      %v1894 = vmul.f32 %v586, %v1869
      %v1895 = vmul.f32 %v586, %v1870
      %v1896 = vmul.f32 %v586, %v1871
      %v1897 = vmul.f32 %v586, %v1872
      %v1898 = vmul.f32 %v586, %v1873
      %v1899 = vmul.f32 %v586, %v1874
      %v1900 = vmul.f32 %v586, %v1875
      %v1901 = vmul.f32 %v586, %v1876
      %v1902 = vmul.f32 %v586, %v1877
      %v1903 = vmul.f32 %v586, %v1878
      %v1904 = vmul.f32 %v586, %v1879
      %v1905 = vmul.f32 %v586, %v1880
      %v1906 = vmul.f32 %v586, %v1881
      %v1907 = vmul.f32 %v586, %v1882
      %v1908 = vmul.f32 %v586, %v1883
      %v1909 = vmul.f32 %v586, %v1884
      %v1910 = vmul.f32 %v586, %v1885
      %v1911 = vmul.f32 %v586, %v1886
      %v1912 = vmul.f32 %v586, %v1887
      %v1913 = vmul.f32 %v586, %v1888
      %v1914 = vmul.f32 %v586, %v1889
      %v1915 = vmul.f32 %v586, %v1890
      %v1916 = vadd.f32 %v1841, %v1891
      %v1917 = vadd.f32 %v1842, %v1892
      %v1918 = vadd.f32 %v1843, %v1893
      %v1919 = vadd.f32 %v1844, %v1894
      %v1920 = vadd.f32 %v1845, %v1895
      %v1921 = vadd.f32 %v1846, %v1896
      %v1922 = vadd.f32 %v1847, %v1897
      %v1923 = vadd.f32 %v1848, %v1898
      %v1924 = vadd.f32 %v1849, %v1899
      %v1925 = vadd.f32 %v1850, %v1900
      %v1926 = vadd.f32 %v1851, %v1901
      %v1927 = vadd.f32 %v1852, %v1902
      %v1928 = vadd.f32 %v1853, %v1903
      %v1929 = vadd.f32 %v1854, %v1904
      %v1930 = vadd.f32 %v1855, %v1905
      %v1931 = vadd.f32 %v1856, %v1906
      %v1932 = vadd.f32 %v1857, %v1907
      %v1933 = vadd.f32 %v1858, %v1908
      %v1934 = vadd.f32 %v1859, %v1909
      %v1935 = vadd.f32 %v1860, %v1910
      %v1936 = vadd.f32 %v1861, %v1911
      %v1937 = vadd.f32 %v1862, %v1912
      %v1938 = vadd.f32 %v1863, %v1913
      %v1939 = vadd.f32 %v1864, %v1914
      %v1940 = vadd.f32 %v1865, %v1915
      %v1941 = vmul.f32 %v1916, %v641
      %v1942 = vmul.f32 %v1917, %v641
      %v1943 = vmul.f32 %v1918, %v641
      %v1944 = vmul.f32 %v1919, %v641
      %v1945 = vmul.f32 %v1920, %v641
      %v1946 = vmul.f32 %v1921, %v641
      %v1947 = vmul.f32 %v1922, %v641
      %v1948 = vmul.f32 %v1923, %v641
      %v1949 = vmul.f32 %v1924, %v641
      %v1950 = vmul.f32 %v1925, %v641
      %v1951 = vmul.f32 %v1926, %v641
      %v1952 = vmul.f32 %v1927, %v641
      %v1953 = vmul.f32 %v1928, %v641
      %v1954 = vmul.f32 %v1929, %v641
      %v1955 = vmul.f32 %v1930, %v641
      %v1956 = vmul.f32 %v1931, %v641
      %v1957 = vmul.f32 %v1932, %v641
      %v1958 = vmul.f32 %v1933, %v641
      %v1959 = vmul.f32 %v1934, %v641
      %v1960 = vmul.f32 %v1935, %v641
      %v1961 = vmul.f32 %v1936, %v641
      %v1962 = vmul.f32 %v1937, %v641
      %v1963 = vmul.f32 %v1938, %v641
      %v1964 = vmul.f32 %v1939, %v641
      %v1965 = vmul.f32 %v1940, %v641
      %v1966 = vadd.f32 %v1941, %v672
      %v1967 = vadd.f32 %v1942, %v672
      %v1968 = vadd.f32 %v1943, %v672
      %v1969 = vadd.f32 %v1944, %v672
      %v1970 = vadd.f32 %v1945, %v672
      %v1971 = vadd.f32 %v1946, %v672
      %v1972 = vadd.f32 %v1947, %v672
      %v1973 = vadd.f32 %v1948, %v672
      %v1974 = vadd.f32 %v1949, %v672
      %v1975 = vadd.f32 %v1950, %v672
      %v1976 = vadd.f32 %v1951, %v672
      %v1977 = vadd.f32 %v1952, %v672
      %v1978 = vadd.f32 %v1953, %v672
      %v1979 = vadd.f32 %v1954, %v672
      %v1980 = vadd.f32 %v1955, %v672
      %v1981 = vadd.f32 %v1956, %v672
      %v1982 = vadd.f32 %v1957, %v672
      %v1983 = vadd.f32 %v1958, %v672
      %v1984 = vadd.f32 %v1959, %v672
      %v1985 = vadd.f32 %v1960, %v672
      %v1986 = vadd.f32 %v1961, %v672
      %v1987 = vadd.f32 %v1962, %v672
      %v1988 = vadd.f32 %v1963, %v672
      %v1989 = vadd.f32 %v1964, %v672
      %v1990 = vadd.f32 %v1965, %v672
      %v1991 = vmax.f32 %v1552, %v1966
      %v1992 = vmax.f32 %v1553, %v1967
      %v1993 = vmax.f32 %v1554, %v1968
      %v1994 = vmax.f32 %v1555, %v1969
      %v1995 = vmax.f32 %v1556, %v1970
      %v1996 = vmax.f32 %v1557, %v1971
      %v1997 = vmax.f32 %v1558, %v1972
      %v1998 = vmax.f32 %v1559, %v1973
      %v1999 = vmax.f32 %v1560, %v1974
      %v2000 = vmax.f32 %v1561, %v1975
      %v2001 = vmax.f32 %v1562, %v1976
      %v2002 = vmax.f32 %v1563, %v1977
      %v2003 = vmax.f32 %v1564, %v1978
      %v2004 = vmax.f32 %v1565, %v1979
      %v2005 = vmax.f32 %v1566, %v1980
      %v2006 = vmax.f32 %v1567, %v1981
      %v2007 = vmax.f32 %v1568, %v1982
      %v2008 = vmax.f32 %v1569, %v1983
      %v2009 = vmax.f32 %v1570, %v1984
      %v2010 = vmax.f32 %v1571, %v1985
      %v2011 = vmax.f32 %v1572, %v1986
      %v2012 = vmax.f32 %v1573, %v1987
      %v2013 = vmax.f32 %v1574, %v1988
      %v2014 = vmax.f32 %v1575, %v1989
      %v2015 = vmax.f32 %v1576, %v1990
      %v2016 = vpack.c.bf16 %v1992, %v1991
      %v2017 = vpack.c.bf16 %v1994, %v1993
      %v2018 = vpack.c.bf16 %v1996, %v1995
      %v2019 = vpack.c.bf16 %v1998, %v1997
      %v2020 = vpack.c.bf16 %v2000, %v1999
      %v2021 = vpack.c.bf16 %v2002, %v2001
      %v2022 = vpack.c.bf16 %v2004, %v2003
      %v2023 = vpack.c.bf16 %v2006, %v2005
      %v2024 = vpack.c.bf16 %v2008, %v2007
      %v2025 = vpack.c.bf16 %v2010, %v2009
      %v2026 = vpack.c.bf16 %v2012, %v2011
      %v2027 = vpack.c.bf16 %v2014, %v2013
      %v2028 = vpack.c.bf16 %v2015, %v2015
      %v2042 = vunpack.c.l.b16 %v2016
      %v2043 = vunpack.c.h.b16 %v2016
      %v2044 = vunpack.c.l.b16 %v2017
      %v2045 = vunpack.c.h.b16 %v2017
      %v2046 = vunpack.c.l.b16 %v2018
      %v2047 = vunpack.c.h.b16 %v2018
      %v2048 = vunpack.c.l.b16 %v2019
      %v2049 = vunpack.c.h.b16 %v2019
      %v2050 = vunpack.c.l.b16 %v2020
      %v2051 = vunpack.c.h.b16 %v2020
      %v2052 = vunpack.c.l.b16 %v2021
      %v2053 = vunpack.c.h.b16 %v2021
      %v2054 = vunpack.c.l.b16 %v2022
      %v2055 = vunpack.c.h.b16 %v2022
      %v2056 = vunpack.c.l.b16 %v2023
      %v2057 = vunpack.c.h.b16 %v2023
      %v2058 = vunpack.c.l.b16 %v2024
      %v2059 = vunpack.c.h.b16 %v2024
      %v2060 = vunpack.c.l.b16 %v2025
      %v2061 = vunpack.c.h.b16 %v2025
      %v2062 = vunpack.c.l.b16 %v2026
      %v2063 = vunpack.c.h.b16 %v2026
      %v2064 = vunpack.c.l.b16 %v2027
      %v2065 = vunpack.c.h.b16 %v2027
      %v2066 = vunpack.c.l.b16 %v2028
      %v2067 = vpack.c.b16 %v2042, %v2042
      %v2068 = vpack.c.b16 %v2043, %v2043
      %v2069 = vpack.c.b16 %v2044, %v2044
      %v2070 = vpack.c.b16 %v2045, %v2045
      %v2071 = vpack.c.b16 %v2046, %v2046
      %v2072 = vpack.c.b16 %v2047, %v2047
      %v2073 = vpack.c.b16 %v2048, %v2048
      %v2074 = vpack.c.b16 %v2049, %v2049
      %v2075 = vpack.c.b16 %v2050, %v2050
      %v2076 = vpack.c.b16 %v2051, %v2051
      %v2077 = vpack.c.b16 %v2052, %v2052
      %v2078 = vpack.c.b16 %v2053, %v2053
      %v2079 = vpack.c.b16 %v2054, %v2054
      %v2080 = vpack.c.b16 %v2055, %v2055
      %v2081 = vpack.c.b16 %v2056, %v2056
      %v2082 = vpack.c.b16 %v2057, %v2057
      %v2083 = vpack.c.b16 %v2058, %v2058
      %v2084 = vpack.c.b16 %v2059, %v2059
      %v2085 = vpack.c.b16 %v2060, %v2060
      %v2086 = vpack.c.b16 %v2061, %v2061
      %v2087 = vpack.c.b16 %v2062, %v2062
      %v2088 = vpack.c.b16 %v2063, %v2063
      %v2089 = vpack.c.b16 %v2064, %v2064
      %v2090 = vpack.c.b16 %v2065, %v2065
      %v2091 = vpack.c.b16 %v2066, %v2066
      %vm2117 = vcmask 519168
      %2118 = vst.msk [vmem:[%s252] sm:$0xf] %vm2117, %v2067
      %2119 = vst.msk [vmem:[%s252 + $0x4] sm:$0xf] %vm2117, %v2068
      %2120 = vst.msk [vmem:[%s252 + $0x8] sm:$0xf] %vm2117, %v2069
      %2121 = vst.msk [vmem:[%s252 + $0xc] sm:$0xf] %vm2117, %v2070
      %2122 = vst.msk [vmem:[%s252 + $0x10] sm:$0xf] %vm2117, %v2071
      %2123 = vst.msk [vmem:[%s252 + $0x14] sm:$0xf] %vm2117, %v2072
      %2124 = vst.msk [vmem:[%s252 + $0x18] sm:$0xf] %vm2117, %v2073
      %2125 = vst.msk [vmem:[%s252 + $0x1c] sm:$0xf] %vm2117, %v2074
      %2126 = vst.msk [vmem:[%s252 + $0x20] sm:$0xf] %vm2117, %v2075
      %2127 = vst.msk [vmem:[%s252 + $0x24] sm:$0xf] %vm2117, %v2076
      %2128 = vst.msk [vmem:[%s252 + $0x28] sm:$0xf] %vm2117, %v2077
      %2129 = vst.msk [vmem:[%s252 + $0x2c] sm:$0xf] %vm2117, %v2078
      %2130 = vst.msk [vmem:[%s252 + $0x30] sm:$0xf] %vm2117, %v2079
      %2131 = vst.msk [vmem:[%s252 + $0x34] sm:$0xf] %vm2117, %v2080
      %2132 = vst.msk [vmem:[%s252 + $0x38] sm:$0xf] %vm2117, %v2081
      %2133 = vst.msk [vmem:[%s252 + $0x3c] sm:$0xf] %vm2117, %v2082
      %2134 = vst.msk [vmem:[%s252 + $0x40] sm:$0xf] %vm2117, %v2083
      %2135 = vst.msk [vmem:[%s252 + $0x44] sm:$0xf] %vm2117, %v2084
      %2136 = vst.msk [vmem:[%s252 + $0x48] sm:$0xf] %vm2117, %v2085
      %2137 = vst.msk [vmem:[%s252 + $0x4c] sm:$0xf] %vm2117, %v2086
      %2138 = vst.msk [vmem:[%s252 + $0x50] sm:$0xf] %vm2117, %v2087
      %2139 = vst.msk [vmem:[%s252 + $0x54] sm:$0xf] %vm2117, %v2088
      %2140 = vst.msk [vmem:[%s252 + $0x58] sm:$0xf] %vm2117, %v2089
      %2141 = vst.msk [vmem:[%s252 + $0x5c] sm:$0xf] %vm2117, %v2090
      %vm2142 = vcmask 517120
      %2143 = vst.msk [vmem:[%s252 + $0x60] sm:$0x3] %vm2142, %v2091
      %p2144 = scmp.lt.s32.totalorder %s18, 1
      %s2145 = scalar_select %p2144, %s18, 1
      %s2146 = smul.addr %s2145, 25
      %s2147 = smul.addr %s2146, 4
      %s2148 = scalar_lea.vmem %s6, %s2147
      // Predicated region
      $region45: #{fenet1_forward.3} parent=43 // pred_check
        %p2149 = pneg %p167
      $region46: #{fenet1_forward.3} parent=43 // pred_check_branch
        %2151 = sbr.rel (%p2149) target = $region48
      $region47: #{fenet1_forward.3} parent=43 // pred_region
        _
      $region48: #{fenet1_forward.3} parent=43 // pred_fallthru
        _
    $region44: #{fenet1_forward.3} parent=5 // pred_fallthru
      _
    %p2152 = scmp.le.s32.totalorder 2, %s13
    // Predicated region
    $region49: #{fenet1_forward.3} parent=5 // pred_check
      %p2153 = pneg %p2152
    $region50: #{fenet1_forward.3} parent=5 // pred_check_branch
      %2155 = sbr.rel (%p2153) target = $region52
    $region51: #{fenet1_forward.3} parent=5 // pred_region
      %s2156 = ssub.s32 %s13, 2
      // Predicated region
      $region53: #{fenet1_forward.3} parent=51 // pred_check
        %p2157 = pneg %p173
      $region54: #{fenet1_forward.3} parent=51 // pred_check_branch
        %2159 = sbr.rel (%p2157) target = $region56
      $region55: #{fenet1_forward.3} parent=51 // pred_region
        %p2160 = scmp.lt.s32.totalorder %s19, 1
        %s2161 = scalar_select %p2160, %s19, 1
        %s2162 = smul.addr %s2161, 25
        %s2163 = smul.addr %s2162, 4
        %s2164 = scalar_lea.vmem %s6, %s2163
      $region56: #{fenet1_forward.3} parent=51 // pred_fallthru
        _
    $region52: #{fenet1_forward.3} parent=5 // pred_fallthru
      _
  $region6: #{fenet1_forward.3} parent=0 // loop_footer
    %s17 = sadd.s32 1, %s13
  $region7: #{fenet1_forward.3} parent=0 // loop_footer_branch
    %12 = sbr.rel target = $region3
  $region8: #{fenet1_forward.3} parent=0 // loop_exit
    _

// kernel: fenet1_forward.4
$region0: #{fenet1_forward.4}
  #allocation0 [shape = 'u32[]', space=smem, size = 0x4, offset = 0x4, fixed_abs, tag = 'smem constant byte address 0x4 - core index']
  #allocation1 [shape = 'u32[144,128]{1,0:T(1,128)}', space=vmem, size = 0x12000, scoped, tag = 'internal scratch']
  #allocation2 [shape = 'f32[1]{0:T(128)S(6)}', space=smem, size = 0x200, scoped, tag = 'scoped memory for fenet1_forward.4']
  %s0 = inlined_call_operand.vmem [shape: bf16[2,4,36,1024], index: 0, kind: input, shape index: {}]
  %s1 = inlined_call_operand.vmem [shape: bf16[1024,64], index: 1, kind: input, shape index: {}]
  %s2 = inlined_call_operand.vmem [shape: f32[1,64], index: 2, kind: input, shape index: {}]
  %s3 = inlined_call_operand.vmem [shape: f32[1,64], index: 3, kind: input, shape index: {}]
  %s4 = inlined_call_operand.vmem [shape: f32[1,64], index: 4, kind: input, shape index: {}]
  %s5 = inlined_call_operand.<no memory space> [shape: f32[1], index: 5, kind: input, shape index: {}]
  %s6 = inlined_call_operand.vmem [shape: bf16[2,36,64], index: 6, kind: output, shape index: {}]
  %s7 = sld [smem:[#allocation0]]
  $region57: #{fenet1_forward.4} parent=0
    _
  %s9 = ssub.s32 1, %s7
  %s10 = scalar_select 0, %s9, %s7
  %11 = sst [smem:[#allocation2]] %s5
  loop: start=0, step=1, limit=4
  $region2: #{fenet1_forward.4} parent=0 // loop_pre_header
    _
  $region3: #{fenet1_forward.4} parent=0 // loop_header
    %s13 = sphi 0, %s17
    %p14 = scmp.ge.s32.totalorder %s13, 4
    %s23 = sphi 0, %s25
    %s26 = sphi 0, %s23
    %s27 = sphi 0, %s26
    %s43 = sphi 0, %s27
    %s47 = sphi 0, %s47
    %s49 = sphi 0, %s47
    %s50 = sphi 0, %s49
    %s64 = sphi 0, %s50
    %s68 = sphi 0, %s68
    %s70 = sphi 0, %s68
    %s71 = sphi 0, %s70
    %s85 = sphi 0, %s71
    %s89 = sphi 0, %s89
    %s91 = sphi 0, %s89
    %s92 = sphi 0, %s91
    %s106 = sphi 0, %s92
    %s110 = sphi 0, %s110
    %s112 = sphi 0, %s110
    %s113 = sphi 0, %s112
    %s127 = sphi 0, %s113
    %s131 = sphi 0, %s131
    %s133 = sphi 0, %s131
    %s134 = sphi 0, %s133
    %s148 = sphi 0, %s134
    %s154 = sphi 0, %s156
    %s157 = sphi 0, %s154
    %s158 = sphi 0, %s157
    %s174 = sphi 0, %s158
  $region4: #{fenet1_forward.4} parent=0 // loop_header_branch
    %16 = sbr.rel (%p14) target = $region8
  $region5: #{fenet1_forward.4} parent=0 // loop_body
    %s18 = ssub.s32 %s13, 1
    %s19 = ssub.s32 %s13, 2
    %s20 = sadd.s32 %s13, 1
    %s21 = ssub.s32 %s13, %s20
    %p22 = scmp.eq.s32.totalorder %s21, 0
    %s24 = sadd.s32 %s23, 1
    %s25 = scalar_select %p22, %s23, %s24
    %p28 = pneg %p22
    %p29 = scmp.eq.s32.totalorder %s13, 1
    %p30 = por %p28, %p29
    %p31 = scmp.ne.s32.totalorder %s23, %s26
    %p32 = scmp.eq.s32.totalorder %s13, 0
    %p33 = por %p31, %p32
    %p34 = scmp.ne.s32.totalorder %s23, %s26
    %p35 = scmp.eq.s32.totalorder %s18, 1
    %p36 = por %p34, %p35
    %p37 = scmp.ne.s32.totalorder %s26, %s27
    %p38 = scmp.eq.s32.totalorder %s18, 0
    %p39 = por %p37, %p38
    %p40 = scmp.ne.s32.totalorder %s26, %s27
    %p41 = scmp.eq.s32.totalorder %s19, 1
    %p42 = por %p40, %p41
    %p44 = scmp.ne.s32.totalorder %s27, %s43
    %p45 = scmp.eq.s32.totalorder %s19, 0
    %p46 = por %p44, %p45
    %s48 = sadd.s32 %s47, 1
    %p51 = scmp.eq.s32.totalorder %s13, 1
    %p52 = scmp.ne.s32.totalorder %s47, %s49
    %p53 = scmp.eq.s32.totalorder %s13, 0
    %p54 = por %p52, %p53
    %p55 = scmp.ne.s32.totalorder %s47, %s49
    %p56 = scmp.eq.s32.totalorder %s18, 1
    %p57 = por %p55, %p56
    %p58 = scmp.ne.s32.totalorder %s49, %s50
    %p59 = scmp.eq.s32.totalorder %s18, 0
    %p60 = por %p58, %p59
    %p61 = scmp.ne.s32.totalorder %s49, %s50
    %p62 = scmp.eq.s32.totalorder %s19, 1
    %p63 = por %p61, %p62
    %p65 = scmp.ne.s32.totalorder %s50, %s64
    %p66 = scmp.eq.s32.totalorder %s19, 0
    %p67 = por %p65, %p66
    %s69 = sadd.s32 %s68, 1
    %p72 = scmp.eq.s32.totalorder %s13, 1
    %p73 = scmp.ne.s32.totalorder %s68, %s70
    %p74 = scmp.eq.s32.totalorder %s13, 0
    %p75 = por %p73, %p74
    %p76 = scmp.ne.s32.totalorder %s68, %s70
    %p77 = scmp.eq.s32.totalorder %s18, 1
    %p78 = por %p76, %p77
    %p79 = scmp.ne.s32.totalorder %s70, %s71
    %p80 = scmp.eq.s32.totalorder %s18, 0
    %p81 = por %p79, %p80
    %p82 = scmp.ne.s32.totalorder %s70, %s71
    %p83 = scmp.eq.s32.totalorder %s19, 1
    %p84 = por %p82, %p83
    %p86 = scmp.ne.s32.totalorder %s71, %s85
    %p87 = scmp.eq.s32.totalorder %s19, 0
    %p88 = por %p86, %p87
    %s90 = sadd.s32 %s89, 1
    %p93 = scmp.eq.s32.totalorder %s13, 1
    %p94 = scmp.ne.s32.totalorder %s89, %s91
    %p95 = scmp.eq.s32.totalorder %s13, 0
    %p96 = por %p94, %p95
    %p97 = scmp.ne.s32.totalorder %s89, %s91
    %p98 = scmp.eq.s32.totalorder %s18, 1
    %p99 = por %p97, %p98
    %p100 = scmp.ne.s32.totalorder %s91, %s92
    %p101 = scmp.eq.s32.totalorder %s18, 0
    %p102 = por %p100, %p101
    %p103 = scmp.ne.s32.totalorder %s91, %s92
    %p104 = scmp.eq.s32.totalorder %s19, 1
    %p105 = por %p103, %p104
    %p107 = scmp.ne.s32.totalorder %s92, %s106
    %p108 = scmp.eq.s32.totalorder %s19, 0
    %p109 = por %p107, %p108
    %s111 = sadd.s32 %s110, 1
    %p114 = scmp.eq.s32.totalorder %s13, 1
    %p115 = scmp.ne.s32.totalorder %s110, %s112
    %p116 = scmp.eq.s32.totalorder %s13, 0
    %p117 = por %p115, %p116
    %p118 = scmp.ne.s32.totalorder %s110, %s112
    %p119 = scmp.eq.s32.totalorder %s18, 1
    %p120 = por %p118, %p119
    %p121 = scmp.ne.s32.totalorder %s112, %s113
    %p122 = scmp.eq.s32.totalorder %s18, 0
    %p123 = por %p121, %p122
    %p124 = scmp.ne.s32.totalorder %s112, %s113
    %p125 = scmp.eq.s32.totalorder %s19, 1
    %p126 = por %p124, %p125
    %p128 = scmp.ne.s32.totalorder %s113, %s127
    %p129 = scmp.eq.s32.totalorder %s19, 0
    %p130 = por %p128, %p129
    %s132 = sadd.s32 %s131, 1
    %p135 = scmp.eq.s32.totalorder %s13, 1
    %p136 = scmp.ne.s32.totalorder %s131, %s133
    %p137 = scmp.eq.s32.totalorder %s13, 0
    %p138 = por %p136, %p137
    %p139 = scmp.ne.s32.totalorder %s131, %s133
    %p140 = scmp.eq.s32.totalorder %s18, 1
    %p141 = por %p139, %p140
    %p142 = scmp.ne.s32.totalorder %s133, %s134
    %p143 = scmp.eq.s32.totalorder %s18, 0
    %p144 = por %p142, %p143
    %p145 = scmp.ne.s32.totalorder %s133, %s134
    %p146 = scmp.eq.s32.totalorder %s19, 1
    %p147 = por %p145, %p146
    %p149 = scmp.ne.s32.totalorder %s134, %s148
    %p150 = scmp.eq.s32.totalorder %s19, 0
    %p151 = por %p149, %p150
    %s152 = ssub.s32 %s13, %s20
    %p153 = scmp.eq.s32.totalorder %s152, 0
    %s155 = sadd.s32 %s154, 1
    %s156 = scalar_select %p153, %s154, %s155
    %p159 = pneg %p153
    %p160 = scmp.eq.s32.totalorder %s13, 1
    %p161 = por %p159, %p160
    %p162 = scmp.ne.s32.totalorder %s154, %s157
    %p163 = scmp.eq.s32.totalorder %s13, 0
    %p164 = por %p162, %p163
    %p165 = scmp.ne.s32.totalorder %s154, %s157
    %p166 = scmp.eq.s32.totalorder %s18, 1
    %p167 = por %p165, %p166
    %p168 = scmp.ne.s32.totalorder %s157, %s158
    %p169 = scmp.eq.s32.totalorder %s18, 0
    %p170 = por %p168, %p169
    %p171 = scmp.ne.s32.totalorder %s157, %s158
    %p172 = scmp.eq.s32.totalorder %s19, 1
    %p173 = por %p171, %p172
    %p175 = scmp.ne.s32.totalorder %s158, %s174
    %p176 = scmp.eq.s32.totalorder %s19, 0
    %p177 = por %p175, %p176
    %p178 = scmp.le.s32.totalorder 1, %s13
    %p179 = scmp.lt.s32.totalorder %s13, 3
    %p180 = pnand %p178, %p179
    %p181 = pneg %p180
    // Predicated region
    $region9: #{fenet1_forward.4} parent=5 // pred_check
      _
    $region10: #{fenet1_forward.4} parent=5 // pred_check_branch
      %183 = sbr.rel (%p180) target = $region12
    $region11: #{fenet1_forward.4} parent=5 // pred_region
      %s184 = ssub.s32 %s13, 1
      // Predicated region
      $region13: #{fenet1_forward.4} parent=11 // pred_check
        %p185 = pneg %p60
      $region14: #{fenet1_forward.4} parent=11 // pred_check_branch
        %187 = sbr.rel (%p185) target = $region16
      $region15: #{fenet1_forward.4} parent=11 // pred_region
        _
      $region16: #{fenet1_forward.4} parent=11 // pred_fallthru
        _
      // Predicated region
      $region17: #{fenet1_forward.4} parent=11 // pred_check
        %p188 = pneg %p81
      $region18: #{fenet1_forward.4} parent=11 // pred_check_branch
        %190 = sbr.rel (%p188) target = $region20
      $region19: #{fenet1_forward.4} parent=11 // pred_region
        _
      $region20: #{fenet1_forward.4} parent=11 // pred_fallthru
        _
      // Predicated region
      $region21: #{fenet1_forward.4} parent=11 // pred_check
        %p191 = pneg %p102
      $region22: #{fenet1_forward.4} parent=11 // pred_check_branch
        %193 = sbr.rel (%p191) target = $region24
      $region23: #{fenet1_forward.4} parent=11 // pred_region
        _
      $region24: #{fenet1_forward.4} parent=11 // pred_fallthru
        _
      // Predicated region
      $region25: #{fenet1_forward.4} parent=11 // pred_check
        %p194 = pneg %p123
      $region26: #{fenet1_forward.4} parent=11 // pred_check_branch
        %196 = sbr.rel (%p194) target = $region28
      $region27: #{fenet1_forward.4} parent=11 // pred_region
        _
      $region28: #{fenet1_forward.4} parent=11 // pred_fallthru
        _
      // Predicated region
      $region29: #{fenet1_forward.4} parent=11 // pred_check
        %p197 = pneg %p144
      $region30: #{fenet1_forward.4} parent=11 // pred_check_branch
        %199 = sbr.rel (%p197) target = $region32
      $region31: #{fenet1_forward.4} parent=11 // pred_region
        _
      $region32: #{fenet1_forward.4} parent=11 // pred_fallthru
        _
    $region12: #{fenet1_forward.4} parent=5 // pred_fallthru
      _
    %p200 = scmp.lt.s32.totalorder %s13, 2
    // Predicated region
    $region33: #{fenet1_forward.4} parent=5 // pred_check
      %p201 = pneg %p200
    $region34: #{fenet1_forward.4} parent=5 // pred_check_branch
      %203 = sbr.rel (%p201) target = $region36
    $region35: #{fenet1_forward.4} parent=5 // pred_region
      // Predicated region
      $region37: #{fenet1_forward.4} parent=35 // pred_check
        %p204 = pneg %p33
      $region38: #{fenet1_forward.4} parent=35 // pred_check_branch
        %206 = sbr.rel (%p204) target = $region40
      $region39: #{fenet1_forward.4} parent=35 // pred_region
        %p207 = scmp.lt.s32.totalorder %s13, 1
        %s208 = scalar_select %p207, %s13, 1
        %s209 = smul.addr %s208, 160
        %s210 = smul.addr %s209, 4
        %s211 = scalar_lea.vmem %s0, %s210
      $region40: #{fenet1_forward.4} parent=35 // pred_fallthru
        _
    $region36: #{fenet1_forward.4} parent=5 // pred_fallthru
      _
    %p212 = scmp.le.s32.totalorder 1, %s13
    %p213 = scmp.lt.s32.totalorder %s13, 3
    %p214 = pnand %p212, %p213
    %p215 = pneg %p214
    // Predicated region
    $region41: #{fenet1_forward.4} parent=5 // pred_check
      _
    $region42: #{fenet1_forward.4} parent=5 // pred_check_branch
      %217 = sbr.rel (%p214) target = $region44
    $region43: #{fenet1_forward.4} parent=5 // pred_region
      %s218 = ssub.s32 %s13, 1
      %p219 = scmp.lt.s32.totalorder %s18, 1
      %s220 = scalar_select %p219, %s18, 1
      %s221 = smul.addr %s220, 160
      %s222 = smul.addr %s221, 4
      %s223 = scalar_lea.vmem %s0, %s222
      %p224 = pneg %p39
      %p225 = pneg %p36
      %p226 = pneg %p60
      %p227 = pneg %p57
      %p228 = pneg %p81
      %p229 = pneg %p78
      %p230 = pneg %p102
      %p231 = pneg %p99
      %p232 = pneg %p123
      %p233 = pneg %p120
      %p234 = pneg %p144
      %p235 = pneg %p141
      %p236 = pneg %p170
      %p237 = pneg %p167
      %p238 = scmp.lt.s32.totalorder %s18, 1
      %s239 = scalar_select %p238, %s18, 1
      %s240 = smul.addr %s239, 5
      %s241 = smul.addr %s240, 4
      %s242 = scalar_lea.vmem %s6, %s241
      %p243 = scmp.lt.s32.totalorder %s18, 1
      %s244 = scalar_select %p243, %s18, 1
      %s245 = smul.addr %s244, 160
      %s246 = smul.addr %s245, 4
      %s247 = scalar_lea.vmem %s0, %s246
      %p248 = scmp.lt.s32.totalorder %s18, 1
      %s249 = scalar_select %p248, %s18, 1
      %s250 = smul.addr %s249, 5
      %s251 = smul.addr %s250, 4
      %s252 = scalar_lea.vmem %s6, %s251
      %v254 = vld [vmem:[%s1] sm:$0xf]
      %v255 = vld [vmem:[%s1 + $0x4] sm:$0xf]
      %v256 = vld [vmem:[%s1 + $0x8] sm:$0xf]
      %v257 = vld [vmem:[%s1 + $0xc] sm:$0xf]
      %v258 = vld [vmem:[%s1 + $0x10] sm:$0xf]
      %v259 = vld [vmem:[%s1 + $0x14] sm:$0xf]
      %v260 = vld [vmem:[%s1 + $0x18] sm:$0xf]
      %v261 = vld [vmem:[%s1 + $0x1c] sm:$0xf]
      %v262 = vld [vmem:[%s1 + $0x20] sm:$0xf]
      %v263 = vld [vmem:[%s1 + $0x24] sm:$0xf]
      %v264 = vld [vmem:[%s1 + $0x28] sm:$0xf]
      %v265 = vld [vmem:[%s1 + $0x2c] sm:$0xf]
      %v266 = vld [vmem:[%s1 + $0x30] sm:$0xf]
      %v267 = vld [vmem:[%s1 + $0x34] sm:$0xf]
      %v268 = vld [vmem:[%s1 + $0x38] sm:$0xf]
      %v269 = vld [vmem:[%s1 + $0x3c] sm:$0xf]
      %v270 = vld [vmem:[%s1 + $0x40] sm:$0xf]
      %v271 = vld [vmem:[%s1 + $0x44] sm:$0xf]
      %v272 = vld [vmem:[%s1 + $0x48] sm:$0xf]
      %v273 = vld [vmem:[%s1 + $0x4c] sm:$0xf]
      %v274 = vld [vmem:[%s1 + $0x50] sm:$0xf]
      %v275 = vld [vmem:[%s1 + $0x54] sm:$0xf]
      %v276 = vld [vmem:[%s1 + $0x58] sm:$0xf]
      %v277 = vld [vmem:[%s1 + $0x5c] sm:$0xf]
      %v278 = vld [vmem:[%s1 + $0x60] sm:$0xf]
      %v279 = vld [vmem:[%s1 + $0x64] sm:$0xf]
      %v280 = vld [vmem:[%s1 + $0x68] sm:$0xf]
      %v281 = vld [vmem:[%s1 + $0x6c] sm:$0xf]
      %v282 = vld [vmem:[%s1 + $0x70] sm:$0xf]
      %v283 = vld [vmem:[%s1 + $0x74] sm:$0xf]
      %v284 = vld [vmem:[%s1 + $0x78] sm:$0xf]
      %v285 = vld [vmem:[%s1 + $0x7c] sm:$0xf]
      %v286 = vld [vmem:[%s1 + $0x80] sm:$0xf]
      %v287 = vld [vmem:[%s1 + $0x84] sm:$0xf]
      %v288 = vld [vmem:[%s1 + $0x88] sm:$0xf]
      %v289 = vld [vmem:[%s1 + $0x8c] sm:$0xf]
      %v290 = vld [vmem:[%s1 + $0x90] sm:$0xf]
      %v291 = vld [vmem:[%s1 + $0x94] sm:$0xf]
      %v292 = vld [vmem:[%s1 + $0x98] sm:$0xf]
      %v293 = vld [vmem:[%s1 + $0x9c] sm:$0xf]
      %v294 = vld [vmem:[%s1 + $0xa0] sm:$0xf]
      %v295 = vld [vmem:[%s1 + $0xa4] sm:$0xf]
      %v296 = vld [vmem:[%s1 + $0xa8] sm:$0xf]
      %v297 = vld [vmem:[%s1 + $0xac] sm:$0xf]
      %v298 = vld [vmem:[%s1 + $0xb0] sm:$0xf]
      %v299 = vld [vmem:[%s1 + $0xb4] sm:$0xf]
      %v300 = vld [vmem:[%s1 + $0xb8] sm:$0xf]
      %v301 = vld [vmem:[%s1 + $0xbc] sm:$0xf]
      %v302 = vld [vmem:[%s1 + $0xc0] sm:$0xf]
      %v303 = vld [vmem:[%s1 + $0xc4] sm:$0xf]
      %v304 = vld [vmem:[%s1 + $0xc8] sm:$0xf]
      %v305 = vld [vmem:[%s1 + $0xcc] sm:$0xf]
      %v306 = vld [vmem:[%s1 + $0xd0] sm:$0xf]
      %v307 = vld [vmem:[%s1 + $0xd4] sm:$0xf]
      %v308 = vld [vmem:[%s1 + $0xd8] sm:$0xf]
      %v309 = vld [vmem:[%s1 + $0xdc] sm:$0xf]
      %v310 = vld [vmem:[%s1 + $0xe0] sm:$0xf]
      %v311 = vld [vmem:[%s1 + $0xe4] sm:$0xf]
      %v312 = vld [vmem:[%s1 + $0xe8] sm:$0xf]
      %v313 = vld [vmem:[%s1 + $0xec] sm:$0xf]
      %v314 = vld [vmem:[%s1 + $0xf0] sm:$0xf]
      %v315 = vld [vmem:[%s1 + $0xf4] sm:$0xf]
      %v316 = vld [vmem:[%s1 + $0xf8] sm:$0xf]
      %v317 = vld [vmem:[%s1 + $0xfc] sm:$0xf]
      %v318 = vld [vmem:[%s1 + $0x100] sm:$0xf]
      %v319 = vld [vmem:[%s1 + $0x104] sm:$0xf]
      %v320 = vld [vmem:[%s1 + $0x108] sm:$0xf]
      %v321 = vld [vmem:[%s1 + $0x10c] sm:$0xf]
      %v322 = vld [vmem:[%s1 + $0x110] sm:$0xf]
      %v323 = vld [vmem:[%s1 + $0x114] sm:$0xf]
      %v324 = vld [vmem:[%s1 + $0x118] sm:$0xf]
      %v325 = vld [vmem:[%s1 + $0x11c] sm:$0xf]
      %v326 = vld [vmem:[%s1 + $0x120] sm:$0xf]
      %v327 = vld [vmem:[%s1 + $0x124] sm:$0xf]
      %v328 = vld [vmem:[%s1 + $0x128] sm:$0xf]
      %v329 = vld [vmem:[%s1 + $0x12c] sm:$0xf]
      %v330 = vld [vmem:[%s1 + $0x130] sm:$0xf]
      %v331 = vld [vmem:[%s1 + $0x134] sm:$0xf]
      %v332 = vld [vmem:[%s1 + $0x138] sm:$0xf]
      %v333 = vld [vmem:[%s1 + $0x13c] sm:$0xf]
      %v334 = vld [vmem:[%s1 + $0x140] sm:$0xf]
      %v335 = vld [vmem:[%s1 + $0x144] sm:$0xf]
      %v336 = vld [vmem:[%s1 + $0x148] sm:$0xf]
      %v337 = vld [vmem:[%s1 + $0x14c] sm:$0xf]
      %v338 = vld [vmem:[%s1 + $0x150] sm:$0xf]
      %v339 = vld [vmem:[%s1 + $0x154] sm:$0xf]
      %v340 = vld [vmem:[%s1 + $0x158] sm:$0xf]
      %v341 = vld [vmem:[%s1 + $0x15c] sm:$0xf]
      %v342 = vld [vmem:[%s1 + $0x160] sm:$0xf]
      %v343 = vld [vmem:[%s1 + $0x164] sm:$0xf]
      %v344 = vld [vmem:[%s1 + $0x168] sm:$0xf]
      %v345 = vld [vmem:[%s1 + $0x16c] sm:$0xf]
      %v346 = vld [vmem:[%s1 + $0x170] sm:$0xf]
      %v347 = vld [vmem:[%s1 + $0x174] sm:$0xf]
      %v348 = vld [vmem:[%s1 + $0x178] sm:$0xf]
      %v349 = vld [vmem:[%s1 + $0x17c] sm:$0xf]
      %v350 = vld [vmem:[%s1 + $0x180] sm:$0xf]
      %v351 = vld [vmem:[%s1 + $0x184] sm:$0xf]
      %v352 = vld [vmem:[%s1 + $0x188] sm:$0xf]
      %v353 = vld [vmem:[%s1 + $0x18c] sm:$0xf]
      %v354 = vld [vmem:[%s1 + $0x190] sm:$0xf]
      %v355 = vld [vmem:[%s1 + $0x194] sm:$0xf]
      %v356 = vld [vmem:[%s1 + $0x198] sm:$0xf]
      %v357 = vld [vmem:[%s1 + $0x19c] sm:$0xf]
      %v358 = vld [vmem:[%s1 + $0x1a0] sm:$0xf]
      %v359 = vld [vmem:[%s1 + $0x1a4] sm:$0xf]
      %v360 = vld [vmem:[%s1 + $0x1a8] sm:$0xf]
      %v361 = vld [vmem:[%s1 + $0x1ac] sm:$0xf]
      %v362 = vld [vmem:[%s1 + $0x1b0] sm:$0xf]
      %v363 = vld [vmem:[%s1 + $0x1b4] sm:$0xf]
      %v364 = vld [vmem:[%s1 + $0x1b8] sm:$0xf]
      %v365 = vld [vmem:[%s1 + $0x1bc] sm:$0xf]
      %v366 = vld [vmem:[%s1 + $0x1c0] sm:$0xf]
      %v367 = vld [vmem:[%s1 + $0x1c4] sm:$0xf]
      %v368 = vld [vmem:[%s1 + $0x1c8] sm:$0xf]
      %v369 = vld [vmem:[%s1 + $0x1cc] sm:$0xf]
      %v370 = vld [vmem:[%s1 + $0x1d0] sm:$0xf]
      %v371 = vld [vmem:[%s1 + $0x1d4] sm:$0xf]
      %v372 = vld [vmem:[%s1 + $0x1d8] sm:$0xf]
      %v373 = vld [vmem:[%s1 + $0x1dc] sm:$0xf]
      %v374 = vld [vmem:[%s1 + $0x1e0] sm:$0xf]
      %v375 = vld [vmem:[%s1 + $0x1e4] sm:$0xf]
      %v376 = vld [vmem:[%s1 + $0x1e8] sm:$0xf]
      %v377 = vld [vmem:[%s1 + $0x1ec] sm:$0xf]
      %v378 = vld [vmem:[%s1 + $0x1f0] sm:$0xf]
      %v379 = vld [vmem:[%s1 + $0x1f4] sm:$0xf]
      %v380 = vld [vmem:[%s1 + $0x1f8] sm:$0xf]
      %v381 = vld [vmem:[%s1 + $0x1fc] sm:$0xf]
      %v382 = vld [vmem:[%s2] sm:$0x1]
      %v383 = vld [vmem:[%s3] sm:$0x1]
      %v384 = vld [vmem:[%s4] sm:$0x1]
      %s385 = sld [smem:[#allocation2]]
      %v386 = vld [vmem:[%s247] sm:$0xff]
      %v387 = vld [vmem:[%s247 + $0x8] sm:$0xff]
      %v388 = vld [vmem:[%s247 + $0x10] sm:$0xff]
      %v389 = vld [vmem:[%s247 + $0x18] sm:$0xff]
      %v390 = vld [vmem:[%s247 + $0x20] sm:$0xff]
      %v391 = vld [vmem:[%s247 + $0x28] sm:$0xff]
      %v392 = vld [vmem:[%s247 + $0x30] sm:$0xff]
      %v393 = vld [vmem:[%s247 + $0x38] sm:$0xff]
      %v394 = vld [vmem:[%s247 + $0x40] sm:$0xff]
      %v395 = vld [vmem:[%s247 + $0x48] sm:$0xff]
      %v396 = vld [vmem:[%s247 + $0x50] sm:$0xff]
      %v397 = vld [vmem:[%s247 + $0x58] sm:$0xff]
      %v398 = vld [vmem:[%s247 + $0x60] sm:$0xff]
      %v399 = vld [vmem:[%s247 + $0x68] sm:$0xff]
      %v400 = vld [vmem:[%s247 + $0x70] sm:$0xff]
      %v401 = vld [vmem:[%s247 + $0x78] sm:$0xff]
      %v402 = vld [vmem:[%s247 + $0x80] sm:$0x33]
      %v403 = vld [vmem:[%s247 + $0x88] sm:$0x33]
      %v404 = vld [vmem:[%s247 + $0x90] sm:$0x33]
      %v405 = vld [vmem:[%s247 + $0x98] sm:$0x33]
      %v407 = vlaneseq
      %v408 = vshrl.u32 %v407, 7
      %v409 = vsub.s32 0, %v408
      %v410 = vrot.slane %v382, %v409
      %v432 = vunpack.c.l.b16 %v386
      %v433 = vunpack.c.h.b16 %v386
      %v434 = vunpack.c.l.b16 %v387
      %v435 = vunpack.c.h.b16 %v387
      %v436 = vunpack.c.l.b16 %v388
      %v437 = vunpack.c.h.b16 %v388
      %v438 = vunpack.c.l.b16 %v389
      %v439 = vunpack.c.h.b16 %v389
      %v440 = vunpack.c.l.b16 %v390
      %v441 = vunpack.c.h.b16 %v390
      %v442 = vunpack.c.l.b16 %v391
      %v443 = vunpack.c.h.b16 %v391
      %v444 = vunpack.c.l.b16 %v392
      %v445 = vunpack.c.h.b16 %v392
      %v446 = vunpack.c.l.b16 %v393
      %v447 = vunpack.c.h.b16 %v393
      %v448 = vunpack.c.l.b16 %v394
      %v449 = vunpack.c.h.b16 %v394
      %v450 = vunpack.c.l.b16 %v395
      %v451 = vunpack.c.h.b16 %v395
      %v452 = vunpack.c.l.b16 %v396
      %v453 = vunpack.c.h.b16 %v396
      %v454 = vunpack.c.l.b16 %v397
      %v455 = vunpack.c.h.b16 %v397
      %v456 = vunpack.c.l.b16 %v398
      %v457 = vunpack.c.h.b16 %v398
      %v458 = vunpack.c.l.b16 %v399
      %v459 = vunpack.c.h.b16 %v399
      %v460 = vunpack.c.l.b16 %v400
      %v461 = vunpack.c.h.b16 %v400
      %v462 = vunpack.c.l.b16 %v401
      %v463 = vunpack.c.h.b16 %v401
      %v464 = vunpack.c.l.b16 %v402
      %v465 = vunpack.c.h.b16 %v402
      %v466 = vunpack.c.l.b16 %v403
      %v467 = vunpack.c.h.b16 %v403
      %v468 = vunpack.c.l.b16 %v404
      %v469 = vunpack.c.h.b16 %v404
      %v470 = vunpack.c.l.b16 %v405
      %v471 = vunpack.c.h.b16 %v405
      %v472 = vpack.c.b16 %v440, %v432
      %v473 = vpack.c.b16 %v441, %v433
      %v474 = vpack.c.b16 %v442, %v434
      %v475 = vpack.c.b16 %v443, %v435
      %v476 = vpack.c.b16 %v444, %v436
      %v477 = vpack.c.b16 %v445, %v437
      %v478 = vpack.c.b16 %v446, %v438
      %v479 = vpack.c.b16 %v447, %v439
      %v480 = vpack.c.b16 %v456, %v448
      %v481 = vpack.c.b16 %v457, %v449
      %v482 = vpack.c.b16 %v458, %v450
      %v483 = vpack.c.b16 %v459, %v451
      %v484 = vpack.c.b16 %v460, %v452
      %v485 = vpack.c.b16 %v461, %v453
      %v486 = vpack.c.b16 %v462, %v454
      %v487 = vpack.c.b16 %v463, %v455
      %v488 = vpack.c.b16 %v464, %v464
      %v489 = vpack.c.b16 %v465, %v465
      %v490 = vpack.c.b16 %v466, %v466
      %v491 = vpack.c.b16 %v467, %v467
      %v492 = vpack.c.b16 %v468, %v468
      %v493 = vpack.c.b16 %v469, %v469
      %v494 = vpack.c.b16 %v470, %v470
      %v495 = vpack.c.b16 %v471, %v471
      %v648 = vunpack.c.l.b16 %v254
      %v649 = vunpack.c.l.b16 %v255
      %v650 = vunpack.c.l.b16 %v256
      %v651 = vunpack.c.l.b16 %v257
      %v652 = vunpack.c.l.b16 %v258
      %v653 = vunpack.c.l.b16 %v259
      %v654 = vunpack.c.l.b16 %v260
      %v655 = vunpack.c.l.b16 %v261
      %v656 = vunpack.c.l.b16 %v262
      %v657 = vunpack.c.l.b16 %v263
      %v658 = vunpack.c.l.b16 %v264
      %v659 = vunpack.c.l.b16 %v265
      %v660 = vunpack.c.l.b16 %v266
      %v661 = vunpack.c.l.b16 %v267
      %v662 = vunpack.c.l.b16 %v268
      %v663 = vunpack.c.l.b16 %v269
      %v664 = vunpack.c.l.b16 %v270
      %v665 = vunpack.c.l.b16 %v271
      %v666 = vunpack.c.l.b16 %v272
      %v667 = vunpack.c.l.b16 %v273
      %v668 = vunpack.c.l.b16 %v274
      %v669 = vunpack.c.l.b16 %v275
      %v670 = vunpack.c.l.b16 %v276
      %v671 = vunpack.c.l.b16 %v277
      %v672 = vunpack.c.l.b16 %v278
      %v673 = vunpack.c.l.b16 %v279
      %v674 = vunpack.c.l.b16 %v280
      %v675 = vunpack.c.l.b16 %v281
      %v676 = vunpack.c.l.b16 %v282
      %v677 = vunpack.c.l.b16 %v283
      %v678 = vunpack.c.l.b16 %v284
      %v679 = vunpack.c.l.b16 %v285
      %v680 = vunpack.c.l.b16 %v286
      %v681 = vunpack.c.l.b16 %v287
      %v682 = vunpack.c.l.b16 %v288
      %v683 = vunpack.c.l.b16 %v289
      %v684 = vunpack.c.l.b16 %v290
      %v685 = vunpack.c.l.b16 %v291
      %v686 = vunpack.c.l.b16 %v292
      %v687 = vunpack.c.l.b16 %v293
      %v688 = vunpack.c.l.b16 %v294
      %v689 = vunpack.c.l.b16 %v295
      %v690 = vunpack.c.l.b16 %v296
      %v691 = vunpack.c.l.b16 %v297
      %v692 = vunpack.c.l.b16 %v298
      %v693 = vunpack.c.l.b16 %v299
      %v694 = vunpack.c.l.b16 %v300
      %v695 = vunpack.c.l.b16 %v301
      %v696 = vunpack.c.l.b16 %v302
      %v697 = vunpack.c.l.b16 %v303
      %v698 = vunpack.c.l.b16 %v304
      %v699 = vunpack.c.l.b16 %v305
      %v700 = vunpack.c.l.b16 %v306
      %v701 = vunpack.c.l.b16 %v307
      %v702 = vunpack.c.l.b16 %v308
      %v703 = vunpack.c.l.b16 %v309
      %v704 = vunpack.c.l.b16 %v310
      %v705 = vunpack.c.l.b16 %v311
      %v706 = vunpack.c.l.b16 %v312
      %v707 = vunpack.c.l.b16 %v313
      %v708 = vunpack.c.l.b16 %v314
      %v709 = vunpack.c.l.b16 %v315
      %v710 = vunpack.c.l.b16 %v316
      %v711 = vunpack.c.l.b16 %v317
      %v712 = vunpack.c.l.b16 %v318
      %v713 = vunpack.c.l.b16 %v319
      %v714 = vunpack.c.l.b16 %v320
      %v715 = vunpack.c.l.b16 %v321
      %v716 = vunpack.c.l.b16 %v322
      %v717 = vunpack.c.l.b16 %v323
      %v718 = vunpack.c.l.b16 %v324
      %v719 = vunpack.c.l.b16 %v325
      %v720 = vunpack.c.l.b16 %v326
      %v721 = vunpack.c.l.b16 %v327
      %v722 = vunpack.c.l.b16 %v328
      %v723 = vunpack.c.l.b16 %v329
      %v724 = vunpack.c.l.b16 %v330
      %v725 = vunpack.c.l.b16 %v331
      %v726 = vunpack.c.l.b16 %v332
      %v727 = vunpack.c.l.b16 %v333
      %v728 = vunpack.c.l.b16 %v334
      %v729 = vunpack.c.l.b16 %v335
      %v730 = vunpack.c.l.b16 %v336
      %v731 = vunpack.c.l.b16 %v337
      %v732 = vunpack.c.l.b16 %v338
      %v733 = vunpack.c.l.b16 %v339
      %v734 = vunpack.c.l.b16 %v340
      %v735 = vunpack.c.l.b16 %v341
      %v736 = vunpack.c.l.b16 %v342
      %v737 = vunpack.c.l.b16 %v343
      %v738 = vunpack.c.l.b16 %v344
      %v739 = vunpack.c.l.b16 %v345
      %v740 = vunpack.c.l.b16 %v346
      %v741 = vunpack.c.l.b16 %v347
      %v742 = vunpack.c.l.b16 %v348
      %v743 = vunpack.c.l.b16 %v349
      %v744 = vunpack.c.l.b16 %v350
      %v745 = vunpack.c.l.b16 %v351
      %v746 = vunpack.c.l.b16 %v352
      %v747 = vunpack.c.l.b16 %v353
      %v748 = vunpack.c.l.b16 %v354
      %v749 = vunpack.c.l.b16 %v355
      %v750 = vunpack.c.l.b16 %v356
      %v751 = vunpack.c.l.b16 %v357
      %v752 = vunpack.c.l.b16 %v358
      %v753 = vunpack.c.l.b16 %v359
      %v754 = vunpack.c.l.b16 %v360
      %v755 = vunpack.c.l.b16 %v361
      %v756 = vunpack.c.l.b16 %v362
      %v757 = vunpack.c.l.b16 %v363
      %v758 = vunpack.c.l.b16 %v364
      %v759 = vunpack.c.l.b16 %v365
      %v760 = vunpack.c.l.b16 %v366
      %v761 = vunpack.c.l.b16 %v367
      %v762 = vunpack.c.l.b16 %v368
      %v763 = vunpack.c.l.b16 %v369
      %v764 = vunpack.c.l.b16 %v370
      %v765 = vunpack.c.l.b16 %v371
      %v766 = vunpack.c.l.b16 %v372
      %v767 = vunpack.c.l.b16 %v373
      %v768 = vunpack.c.l.b16 %v374
      %v769 = vunpack.c.l.b16 %v375
      %v770 = vunpack.c.l.b16 %v376
      %v771 = vunpack.c.l.b16 %v377
      %v772 = vunpack.c.l.b16 %v378
      %v773 = vunpack.c.l.b16 %v379
      %v774 = vunpack.c.l.b16 %v380
      %v775 = vunpack.c.l.b16 %v381
      %v776 = vpack.c.b16 %v649, %v648
      %v777 = vpack.c.b16 %v651, %v650
      %v778 = vpack.c.b16 %v653, %v652
      %v779 = vpack.c.b16 %v655, %v654
      %v780 = vpack.c.b16 %v657, %v656
      %v781 = vpack.c.b16 %v659, %v658
      %v782 = vpack.c.b16 %v661, %v660
      %v783 = vpack.c.b16 %v663, %v662
      %v784 = vpack.c.b16 %v665, %v664
      %v785 = vpack.c.b16 %v667, %v666
      %v786 = vpack.c.b16 %v669, %v668
      %v787 = vpack.c.b16 %v671, %v670
      %v788 = vpack.c.b16 %v673, %v672
      %v789 = vpack.c.b16 %v675, %v674
      %v790 = vpack.c.b16 %v677, %v676
      %v791 = vpack.c.b16 %v679, %v678
      %v792 = vpack.c.b16 %v681, %v680
      %v793 = vpack.c.b16 %v683, %v682
      %v794 = vpack.c.b16 %v685, %v684
      %v795 = vpack.c.b16 %v687, %v686
      %v796 = vpack.c.b16 %v689, %v688
      %v797 = vpack.c.b16 %v691, %v690
      %v798 = vpack.c.b16 %v693, %v692
      %v799 = vpack.c.b16 %v695, %v694
      %v800 = vpack.c.b16 %v697, %v696
      %v801 = vpack.c.b16 %v699, %v698
      %v802 = vpack.c.b16 %v701, %v700
      %v803 = vpack.c.b16 %v703, %v702
      %v804 = vpack.c.b16 %v705, %v704
      %v805 = vpack.c.b16 %v707, %v706
      %v806 = vpack.c.b16 %v709, %v708
      %v807 = vpack.c.b16 %v711, %v710
      %v808 = vpack.c.b16 %v713, %v712
      %v809 = vpack.c.b16 %v715, %v714
      %v810 = vpack.c.b16 %v717, %v716
      %v811 = vpack.c.b16 %v719, %v718
      %v812 = vpack.c.b16 %v721, %v720
      %v813 = vpack.c.b16 %v723, %v722
      %v814 = vpack.c.b16 %v725, %v724
      %v815 = vpack.c.b16 %v727, %v726
      %v816 = vpack.c.b16 %v729, %v728
      %v817 = vpack.c.b16 %v731, %v730
      %v818 = vpack.c.b16 %v733, %v732
      %v819 = vpack.c.b16 %v735, %v734
      %v820 = vpack.c.b16 %v737, %v736
      %v821 = vpack.c.b16 %v739, %v738
      %v822 = vpack.c.b16 %v741, %v740
      %v823 = vpack.c.b16 %v743, %v742
      %v824 = vpack.c.b16 %v745, %v744
      %v825 = vpack.c.b16 %v747, %v746
      %v826 = vpack.c.b16 %v749, %v748
      %v827 = vpack.c.b16 %v751, %v750
      %v828 = vpack.c.b16 %v753, %v752
      %v829 = vpack.c.b16 %v755, %v754
      %v830 = vpack.c.b16 %v757, %v756
      %v831 = vpack.c.b16 %v759, %v758
      %v832 = vpack.c.b16 %v761, %v760
      %v833 = vpack.c.b16 %v763, %v762
      %v834 = vpack.c.b16 %v765, %v764
      %v835 = vpack.c.b16 %v767, %v766
      %v836 = vpack.c.b16 %v769, %v768
      %v837 = vpack.c.b16 %v771, %v770
      %v838 = vpack.c.b16 %v773, %v772
      %v839 = vpack.c.b16 %v775, %v774
      %904 = vmatprep.subr.bf16.mxu0 0
      %905 = vmatpush1.bf16.msra.mxu0 %v776
      %906 = vmatprep.subr.bf16.mxu0 0
      %907 = vmatpush1.bf16.msra.mxu0 %v777
      %908 = vmatprep.subr.bf16.mxu0 0
      %909 = vmatpush1.bf16.msra.mxu0 %v778
      %910 = vmatprep.subr.bf16.mxu0 0
      %911 = vmatpush1.bf16.msra.mxu0 %v779
      %912 = vmatprep.subr.bf16.mxu0 0
      %913 = vmatpush1.bf16.msra.mxu0 %v780
      %914 = vmatprep.subr.bf16.mxu0 0
      %915 = vmatpush1.bf16.msra.mxu0 %v781
      %916 = vmatprep.subr.bf16.mxu0 0
      %917 = vmatpush1.bf16.msra.mxu0 %v782
      %918 = vmatprep.subr.bf16.mxu0 0
      %919 = vmatpush1.bf16.msra.mxu0 %v783
      %920 = vmatprep.subr.bf16.mxu0 0
      %921 = vmatpush1.bf16.msra.mxu0 %v784
      %922 = vmatprep.subr.bf16.mxu0 0
      %923 = vmatpush1.bf16.msra.mxu0 %v785
      %924 = vmatprep.subr.bf16.mxu0 0
      %925 = vmatpush1.bf16.msra.mxu0 %v786
      %926 = vmatprep.subr.bf16.mxu0 0
      %927 = vmatpush1.bf16.msra.mxu0 %v787
      %928 = vmatprep.subr.bf16.mxu0 0
      %929 = vmatpush1.bf16.msra.mxu0 %v788
      %930 = vmatprep.subr.bf16.mxu0 0
      %931 = vmatpush1.bf16.msra.mxu0 %v789
      %932 = vmatprep.subr.bf16.mxu0 0
      %933 = vmatpush1.bf16.msra.mxu0 %v790
      %934 = vmatprep.subr.bf16.mxu0 0
      %935 = vmatpush1.bf16.msra.mxu0 %v791
      %936 = vmatprep.mubr.bf16.mxu0 %v473
      %937 = vmatmul.mubr.bf16.gmra.mrb[0].mxu0 %v472
      %v938 = vpop.f32.mrb[0].mxu0
      %v939 = vadd.f32 %v410, %v938
      %v940 = vpop.f32.mrb[0].mxu0
      %v941 = vpop.f32.mrb[0].mxu0
      %v942 = vadd.f32 %v410, %v941
      %v943 = vpop.f32.mrb[0].mxu0
      %944 = vmatprep.mubr.bf16.mxu0 %v481
      %945 = vmatmul.mubr.bf16.gmra.mrb[0].mxu0 %v480
      %v946 = vpop.f32.mrb[0].mxu0
      %v947 = vadd.f32 %v410, %v946
      %v948 = vpop.f32.mrb[0].mxu0
      %v949 = vpop.f32.mrb[0].mxu0
      %v950 = vadd.f32 %v410, %v949
      %v951 = vpop.f32.mrb[0].mxu0
      %952 = vmatprep.mubr.bf16.mxu0 %v489
      %953 = vmatmul.mubr.bf16.gmra.mrb[0].mxu0 %v488
      %v954 = vpop.f32.mrb[0].mxu0
      %v955 = vadd.f32 %v410, %v954
      %v956 = vpop.f32.mrb[0].mxu0
      %v957 = vpop.f32.mrb[0].mxu0
      %v958 = vpop.f32.mrb[0].mxu0
      %959 = vdwg.mxu0
      %960 = vmatprep.subr.bf16.mxu0 0
      %961 = vmatpush1.bf16.msra.mxu0 %v792
      %962 = vmatprep.subr.bf16.mxu0 0
      %963 = vmatpush1.bf16.msra.mxu0 %v793
      %964 = vmatprep.subr.bf16.mxu0 0
      %965 = vmatpush1.bf16.msra.mxu0 %v794
      %966 = vmatprep.subr.bf16.mxu0 0
      %967 = vmatpush1.bf16.msra.mxu0 %v795
      %968 = vmatprep.subr.bf16.mxu0 0
      %969 = vmatpush1.bf16.msra.mxu0 %v796
      %970 = vmatprep.subr.bf16.mxu0 0
      %971 = vmatpush1.bf16.msra.mxu0 %v797
      %972 = vmatprep.subr.bf16.mxu0 0
      %973 = vmatpush1.bf16.msra.mxu0 %v798
      %974 = vmatprep.subr.bf16.mxu0 0
      %975 = vmatpush1.bf16.msra.mxu0 %v799
      %976 = vmatprep.subr.bf16.mxu0 0
      %977 = vmatpush1.bf16.msra.mxu0 %v800
      %978 = vmatprep.subr.bf16.mxu0 0
      %979 = vmatpush1.bf16.msra.mxu0 %v801
      %980 = vmatprep.subr.bf16.mxu0 0
      %981 = vmatpush1.bf16.msra.mxu0 %v802
      %982 = vmatprep.subr.bf16.mxu0 0
      %983 = vmatpush1.bf16.msra.mxu0 %v803
      %984 = vmatprep.subr.bf16.mxu0 0
      %985 = vmatpush1.bf16.msra.mxu0 %v804
      %986 = vmatprep.subr.bf16.mxu0 0
      %987 = vmatpush1.bf16.msra.mxu0 %v805
      %988 = vmatprep.subr.bf16.mxu0 0
      %989 = vmatpush1.bf16.msra.mxu0 %v806
      %990 = vmatprep.subr.bf16.mxu0 0
      %991 = vmatpush1.bf16.msra.mxu0 %v807
      %992 = vmatprep.mubr.bf16.mxu0 %v475
      %993 = vmatmul.mubr.bf16.gmra.mrb[0].mxu0 %v474
      %v994 = vpop.f32.mrb[0].mxu0
      %v995 = vadd.f32 %v939, %v994
      %v996 = vpop.f32.mrb[0].mxu0
      %v997 = vpop.f32.mrb[0].mxu0
      %v998 = vadd.f32 %v942, %v997
      %v999 = vpop.f32.mrb[0].mxu0
      %1000 = vmatprep.mubr.bf16.mxu0 %v483
      %1001 = vmatmul.mubr.bf16.gmra.mrb[0].mxu0 %v482
      %v1002 = vpop.f32.mrb[0].mxu0
      %v1003 = vadd.f32 %v947, %v1002
      %v1004 = vpop.f32.mrb[0].mxu0
      %v1005 = vpop.f32.mrb[0].mxu0
      %v1006 = vadd.f32 %v950, %v1005
      %v1007 = vpop.f32.mrb[0].mxu0
      %1008 = vmatprep.mubr.bf16.mxu0 %v491
      %1009 = vmatmul.mubr.bf16.gmra.mrb[0].mxu0 %v490
      %v1010 = vpop.f32.mrb[0].mxu0
      %v1011 = vadd.f32 %v955, %v1010
      %v1012 = vpop.f32.mrb[0].mxu0
      %v1013 = vpop.f32.mrb[0].mxu0
      %v1014 = vpop.f32.mrb[0].mxu0
      %1015 = vdwg.mxu0
      %1016 = vmatprep.subr.bf16.mxu0 0
      %1017 = vmatpush1.bf16.msra.mxu0 %v808
      %1018 = vmatprep.subr.bf16.mxu0 0
      %1019 = vmatpush1.bf16.msra.mxu0 %v809
      %1020 = vmatprep.subr.bf16.mxu0 0
      %1021 = vmatpush1.bf16.msra.mxu0 %v810
      %1022 = vmatprep.subr.bf16.mxu0 0
      %1023 = vmatpush1.bf16.msra.mxu0 %v811
      %1024 = vmatprep.subr.bf16.mxu0 0
      %1025 = vmatpush1.bf16.msra.mxu0 %v812
      %1026 = vmatprep.subr.bf16.mxu0 0
      %1027 = vmatpush1.bf16.msra.mxu0 %v813
      %1028 = vmatprep.subr.bf16.mxu0 0
      %1029 = vmatpush1.bf16.msra.mxu0 %v814
      %1030 = vmatprep.subr.bf16.mxu0 0
      %1031 = vmatpush1.bf16.msra.mxu0 %v815
      %1032 = vmatprep.subr.bf16.mxu0 0
      %1033 = vmatpush1.bf16.msra.mxu0 %v816
      %1034 = vmatprep.subr.bf16.mxu0 0
      %1035 = vmatpush1.bf16.msra.mxu0 %v817
      %1036 = vmatprep.subr.bf16.mxu0 0
      %1037 = vmatpush1.bf16.msra.mxu0 %v818
      %1038 = vmatprep.subr.bf16.mxu0 0
      %1039 = vmatpush1.bf16.msra.mxu0 %v819
      %1040 = vmatprep.subr.bf16.mxu0 0
      %1041 = vmatpush1.bf16.msra.mxu0 %v820
      %1042 = vmatprep.subr.bf16.mxu0 0
      %1043 = vmatpush1.bf16.msra.mxu0 %v821
      %1044 = vmatprep.subr.bf16.mxu0 0
      %1045 = vmatpush1.bf16.msra.mxu0 %v822
      %1046 = vmatprep.subr.bf16.mxu0 0
      %1047 = vmatpush1.bf16.msra.mxu0 %v823
      %1048 = vmatprep.mubr.bf16.mxu0 %v477
      %1049 = vmatmul.mubr.bf16.gmra.mrb[0].mxu0 %v476
      %v1050 = vpop.f32.mrb[0].mxu0
      %v1051 = vadd.f32 %v995, %v1050
      %v1052 = vpop.f32.mrb[0].mxu0
      %v1053 = vpop.f32.mrb[0].mxu0
      %v1054 = vadd.f32 %v998, %v1053
      %v1055 = vpop.f32.mrb[0].mxu0
      %1056 = vmatprep.mubr.bf16.mxu0 %v485
      %1057 = vmatmul.mubr.bf16.gmra.mrb[0].mxu0 %v484
      %v1058 = vpop.f32.mrb[0].mxu0
      %v1059 = vadd.f32 %v1003, %v1058
      %v1060 = vpop.f32.mrb[0].mxu0
      %v1061 = vpop.f32.mrb[0].mxu0
      %v1062 = vadd.f32 %v1006, %v1061
      %v1063 = vpop.f32.mrb[0].mxu0
      %1064 = vmatprep.mubr.bf16.mxu0 %v493
      %1065 = vmatmul.mubr.bf16.gmra.mrb[0].mxu0 %v492
      %v1066 = vpop.f32.mrb[0].mxu0
      %v1067 = vadd.f32 %v1011, %v1066
      %v1068 = vpop.f32.mrb[0].mxu0
      %v1069 = vpop.f32.mrb[0].mxu0
      %v1070 = vpop.f32.mrb[0].mxu0
      %1071 = vdwg.mxu0
      %1072 = vmatprep.subr.bf16.mxu0 0
      %1073 = vmatpush1.bf16.msra.mxu0 %v824
      %1074 = vmatprep.subr.bf16.mxu0 0
      %1075 = vmatpush1.bf16.msra.mxu0 %v825
      %1076 = vmatprep.subr.bf16.mxu0 0
      %1077 = vmatpush1.bf16.msra.mxu0 %v826
      %1078 = vmatprep.subr.bf16.mxu0 0
      %1079 = vmatpush1.bf16.msra.mxu0 %v827
      %1080 = vmatprep.subr.bf16.mxu0 0
      %1081 = vmatpush1.bf16.msra.mxu0 %v828
      %1082 = vmatprep.subr.bf16.mxu0 0
      %1083 = vmatpush1.bf16.msra.mxu0 %v829
      %1084 = vmatprep.subr.bf16.mxu0 0
      %1085 = vmatpush1.bf16.msra.mxu0 %v830
      %1086 = vmatprep.subr.bf16.mxu0 0
      %1087 = vmatpush1.bf16.msra.mxu0 %v831
      %1088 = vmatprep.subr.bf16.mxu0 0
      %1089 = vmatpush1.bf16.msra.mxu0 %v832
      %1090 = vmatprep.subr.bf16.mxu0 0
      %1091 = vmatpush1.bf16.msra.mxu0 %v833
      %1092 = vmatprep.subr.bf16.mxu0 0
      %1093 = vmatpush1.bf16.msra.mxu0 %v834
      %1094 = vmatprep.subr.bf16.mxu0 0
      %1095 = vmatpush1.bf16.msra.mxu0 %v835
      %1096 = vmatprep.subr.bf16.mxu0 0
      %1097 = vmatpush1.bf16.msra.mxu0 %v836
      %1098 = vmatprep.subr.bf16.mxu0 0
      %1099 = vmatpush1.bf16.msra.mxu0 %v837
      %1100 = vmatprep.subr.bf16.mxu0 0
      %1101 = vmatpush1.bf16.msra.mxu0 %v838
      %1102 = vmatprep.subr.bf16.mxu0 0
      %1103 = vmatpush1.bf16.msra.mxu0 %v839
      %1104 = vmatprep.mubr.bf16.mxu0 %v479
      %1105 = vmatmul.mubr.bf16.gmra.mrb[0].mxu0 %v478
      %v1106 = vpop.f32.mrb[0].mxu0
      %v1107 = vadd.f32 %v1051, %v1106
      %v1108 = vpop.f32.mrb[0].mxu0
      %v1109 = vpop.f32.mrb[0].mxu0
      %v1110 = vadd.f32 %v1054, %v1109
      %v1111 = vpop.f32.mrb[0].mxu0
      %1112 = vmatprep.mubr.bf16.mxu0 %v487
      %1113 = vmatmul.mubr.bf16.gmra.mrb[0].mxu0 %v486
      %v1114 = vpop.f32.mrb[0].mxu0
      %v1115 = vadd.f32 %v1059, %v1114
      %v1116 = vpop.f32.mrb[0].mxu0
      %v1117 = vpop.f32.mrb[0].mxu0
      %v1118 = vadd.f32 %v1062, %v1117
      %v1119 = vpop.f32.mrb[0].mxu0
      %1120 = vmatprep.mubr.bf16.mxu0 %v495
      %1121 = vmatmul.mubr.bf16.gmra.mrb[0].mxu0 %v494
      %v1122 = vpop.f32.mrb[0].mxu0
      %v1123 = vadd.f32 %v1067, %v1122
      %v1124 = vpop.f32.mrb[0].mxu0
      %v1125 = vpop.f32.mrb[0].mxu0
      %v1126 = vpop.f32.mrb[0].mxu0
      %1127 = vdwg.mxu0
      %v1128 = vmax.f32 %v1107, 0.0
      %v1129 = vmax.f32 %v1110, 0.0
      %v1130 = vmax.f32 %v1115, 0.0
      %v1131 = vmax.f32 %v1118, 0.0
      %v1132 = vmax.f32 %v1123, 0.0
      %v1133 = vmin.f32 %v1107, 0.0
      %v1134 = vmin.f32 %v1110, 0.0
      %v1135 = vmin.f32 %v1115, 0.0
      %v1136 = vmin.f32 %v1118, 0.0
      %v1137 = vmin.f32 %v1123, 0.0
      %v1138 = vstv %s385
      %v1139 = vmul.f32 %v1138, %v1133
      %v1140 = vmul.f32 %v1138, %v1134
      %v1141 = vmul.f32 %v1138, %v1135
      %v1142 = vmul.f32 %v1138, %v1136
      %v1143 = vmul.f32 %v1138, %v1137
      %v1144 = vadd.f32 %v1128, %v1139
      %v1145 = vadd.f32 %v1129, %v1140
      %v1146 = vadd.f32 %v1130, %v1141
      %v1147 = vadd.f32 %v1131, %v1142
      %v1148 = vadd.f32 %v1132, %v1143
      %v1150 = vlaneseq
      %v1151 = vshrl.u32 %v1150, 7
      %v1152 = vsub.s32 0, %v1151
      %v1153 = vrot.slane %v383, %v1152
      %v1155 = vmul.f32 %v1144, %v1153
      %v1156 = vmul.f32 %v1145, %v1153
      %v1157 = vmul.f32 %v1146, %v1153
      %v1158 = vmul.f32 %v1147, %v1153
      %v1159 = vmul.f32 %v1148, %v1153
      %v1161 = vlaneseq
      %v1162 = vshrl.u32 %v1161, 7
      %v1163 = vsub.s32 0, %v1162
      %v1164 = vrot.slane %v384, %v1163
      %v1166 = vadd.f32 %v1155, %v1164
      %v1167 = vadd.f32 %v1156, %v1164
      %v1168 = vadd.f32 %v1157, %v1164
      %v1169 = vadd.f32 %v1158, %v1164
      %v1170 = vadd.f32 %v1159, %v1164
      %s1171 = scalar_lea.vmem %s247, 160
      %v1172 = vld [vmem:[%s1171] sm:$0xff]
      %v1173 = vld [vmem:[%s1171 + $0x8] sm:$0xff]
      %v1174 = vld [vmem:[%s1171 + $0x10] sm:$0xff]
      %v1175 = vld [vmem:[%s1171 + $0x18] sm:$0xff]
      %v1176 = vld [vmem:[%s1171 + $0x20] sm:$0xff]
      %v1177 = vld [vmem:[%s1171 + $0x28] sm:$0xff]
      %v1178 = vld [vmem:[%s1171 + $0x30] sm:$0xff]
      %v1179 = vld [vmem:[%s1171 + $0x38] sm:$0xff]
      %v1180 = vld [vmem:[%s1171 + $0x40] sm:$0xff]
      %v1181 = vld [vmem:[%s1171 + $0x48] sm:$0xff]
      %v1182 = vld [vmem:[%s1171 + $0x50] sm:$0xff]
      %v1183 = vld [vmem:[%s1171 + $0x58] sm:$0xff]
      %v1184 = vld [vmem:[%s1171 + $0x60] sm:$0xff]
      %v1185 = vld [vmem:[%s1171 + $0x68] sm:$0xff]
      %v1186 = vld [vmem:[%s1171 + $0x70] sm:$0xff]
      %v1187 = vld [vmem:[%s1171 + $0x78] sm:$0xff]
      %v1188 = vld [vmem:[%s1171 + $0x80] sm:$0x33]
      %v1189 = vld [vmem:[%s1171 + $0x88] sm:$0x33]
      %v1190 = vld [vmem:[%s1171 + $0x90] sm:$0x33]
      %v1191 = vld [vmem:[%s1171 + $0x98] sm:$0x33]
      %v1212 = vunpack.c.l.b16 %v1172
      %v1213 = vunpack.c.h.b16 %v1172
      %v1214 = vunpack.c.l.b16 %v1173
      %v1215 = vunpack.c.h.b16 %v1173
      %v1216 = vunpack.c.l.b16 %v1174
      %v1217 = vunpack.c.h.b16 %v1174
      %v1218 = vunpack.c.l.b16 %v1175
      %v1219 = vunpack.c.h.b16 %v1175
      %v1220 = vunpack.c.l.b16 %v1176
      %v1221 = vunpack.c.h.b16 %v1176
      %v1222 = vunpack.c.l.b16 %v1177
      %v1223 = vunpack.c.h.b16 %v1177
      %v1224 = vunpack.c.l.b16 %v1178
      %v1225 = vunpack.c.h.b16 %v1178
      %v1226 = vunpack.c.l.b16 %v1179
      %v1227 = vunpack.c.h.b16 %v1179
      %v1228 = vunpack.c.l.b16 %v1180
      %v1229 = vunpack.c.h.b16 %v1180
      %v1230 = vunpack.c.l.b16 %v1181
      %v1231 = vunpack.c.h.b16 %v1181
      %v1232 = vunpack.c.l.b16 %v1182
      %v1233 = vunpack.c.h.b16 %v1182
      %v1234 = vunpack.c.l.b16 %v1183
      %v1235 = vunpack.c.h.b16 %v1183
      %v1236 = vunpack.c.l.b16 %v1184
      %v1237 = vunpack.c.h.b16 %v1184
      %v1238 = vunpack.c.l.b16 %v1185
      %v1239 = vunpack.c.h.b16 %v1185
      %v1240 = vunpack.c.l.b16 %v1186
      %v1241 = vunpack.c.h.b16 %v1186
      %v1242 = vunpack.c.l.b16 %v1187
      %v1243 = vunpack.c.h.b16 %v1187
      %v1244 = vunpack.c.l.b16 %v1188
      %v1245 = vunpack.c.h.b16 %v1188
      %v1246 = vunpack.c.l.b16 %v1189
      %v1247 = vunpack.c.h.b16 %v1189
      %v1248 = vunpack.c.l.b16 %v1190
      %v1249 = vunpack.c.h.b16 %v1190
      %v1250 = vunpack.c.l.b16 %v1191
      %v1251 = vunpack.c.h.b16 %v1191
      %v1252 = vpack.c.b16 %v1220, %v1212
      %v1253 = vpack.c.b16 %v1221, %v1213
      %v1254 = vpack.c.b16 %v1222, %v1214
      %v1255 = vpack.c.b16 %v1223, %v1215
      %v1256 = vpack.c.b16 %v1224, %v1216
      %v1257 = vpack.c.b16 %v1225, %v1217
      %v1258 = vpack.c.b16 %v1226, %v1218
      %v1259 = vpack.c.b16 %v1227, %v1219
      %v1260 = vpack.c.b16 %v1236, %v1228
      %v1261 = vpack.c.b16 %v1237, %v1229
      %v1262 = vpack.c.b16 %v1238, %v1230
      %v1263 = vpack.c.b16 %v1239, %v1231
      %v1264 = vpack.c.b16 %v1240, %v1232
      %v1265 = vpack.c.b16 %v1241, %v1233
      %v1266 = vpack.c.b16 %v1242, %v1234
      %v1267 = vpack.c.b16 %v1243, %v1235
      %v1268 = vpack.c.b16 %v1244, %v1244
      %v1269 = vpack.c.b16 %v1245, %v1245
      %v1270 = vpack.c.b16 %v1246, %v1246
      %v1271 = vpack.c.b16 %v1247, %v1247
      %v1272 = vpack.c.b16 %v1248, %v1248
      %v1273 = vpack.c.b16 %v1249, %v1249
      %v1274 = vpack.c.b16 %v1250, %v1250
      %v1275 = vpack.c.b16 %v1251, %v1251
      %1300 = vmatprep.subr.bf16.mxu0 0
      %1301 = vmatpush1.bf16.msra.mxu0 %v776
      %1302 = vmatprep.subr.bf16.mxu0 0
      %1303 = vmatpush1.bf16.msra.mxu0 %v777
      %1304 = vmatprep.subr.bf16.mxu0 0
      %1305 = vmatpush1.bf16.msra.mxu0 %v778
      %1306 = vmatprep.subr.bf16.mxu0 0
      %1307 = vmatpush1.bf16.msra.mxu0 %v779
      %1308 = vmatprep.subr.bf16.mxu0 0
      %1309 = vmatpush1.bf16.msra.mxu0 %v780
      %1310 = vmatprep.subr.bf16.mxu0 0
      %1311 = vmatpush1.bf16.msra.mxu0 %v781
      %1312 = vmatprep.subr.bf16.mxu0 0
      %1313 = vmatpush1.bf16.msra.mxu0 %v782
      %1314 = vmatprep.subr.bf16.mxu0 0
      %1315 = vmatpush1.bf16.msra.mxu0 %v783
      %1316 = vmatprep.subr.bf16.mxu0 0
      %1317 = vmatpush1.bf16.msra.mxu0 %v784
      %1318 = vmatprep.subr.bf16.mxu0 0
      %1319 = vmatpush1.bf16.msra.mxu0 %v785
      %1320 = vmatprep.subr.bf16.mxu0 0
      %1321 = vmatpush1.bf16.msra.mxu0 %v786
      %1322 = vmatprep.subr.bf16.mxu0 0
      %1323 = vmatpush1.bf16.msra.mxu0 %v787
      %1324 = vmatprep.subr.bf16.mxu0 0
      %1325 = vmatpush1.bf16.msra.mxu0 %v788
      %1326 = vmatprep.subr.bf16.mxu0 0
      %1327 = vmatpush1.bf16.msra.mxu0 %v789
      %1328 = vmatprep.subr.bf16.mxu0 0
      %1329 = vmatpush1.bf16.msra.mxu0 %v790
      %1330 = vmatprep.subr.bf16.mxu0 0
      %1331 = vmatpush1.bf16.msra.mxu0 %v791
      %1332 = vmatprep.mubr.bf16.mxu0 %v1253
      %1333 = vmatmul.mubr.bf16.gmra.mrb[0].mxu0 %v1252
      %v1334 = vpop.f32.mrb[0].mxu0
      %v1335 = vadd.f32 %v410, %v1334
      %v1336 = vpop.f32.mrb[0].mxu0
      %v1337 = vpop.f32.mrb[0].mxu0
      %v1338 = vadd.f32 %v410, %v1337
      %v1339 = vpop.f32.mrb[0].mxu0
      %1340 = vmatprep.mubr.bf16.mxu0 %v1261
      %1341 = vmatmul.mubr.bf16.gmra.mrb[0].mxu0 %v1260
      %v1342 = vpop.f32.mrb[0].mxu0
      %v1343 = vadd.f32 %v410, %v1342
      %v1344 = vpop.f32.mrb[0].mxu0
      %v1345 = vpop.f32.mrb[0].mxu0
      %v1346 = vadd.f32 %v410, %v1345
      %v1347 = vpop.f32.mrb[0].mxu0
      %1348 = vmatprep.mubr.bf16.mxu0 %v1269
      %1349 = vmatmul.mubr.bf16.gmra.mrb[0].mxu0 %v1268
      %v1350 = vpop.f32.mrb[0].mxu0
      %v1351 = vadd.f32 %v410, %v1350
      %v1352 = vpop.f32.mrb[0].mxu0
      %v1353 = vpop.f32.mrb[0].mxu0
      %v1354 = vpop.f32.mrb[0].mxu0
      %1355 = vdwg.mxu0
      %1356 = vmatprep.subr.bf16.mxu0 0
      %1357 = vmatpush1.bf16.msra.mxu0 %v792
      %1358 = vmatprep.subr.bf16.mxu0 0
      %1359 = vmatpush1.bf16.msra.mxu0 %v793
      %1360 = vmatprep.subr.bf16.mxu0 0
      %1361 = vmatpush1.bf16.msra.mxu0 %v794
      %1362 = vmatprep.subr.bf16.mxu0 0
      %1363 = vmatpush1.bf16.msra.mxu0 %v795
      %1364 = vmatprep.subr.bf16.mxu0 0
      %1365 = vmatpush1.bf16.msra.mxu0 %v796
      %1366 = vmatprep.subr.bf16.mxu0 0
      %1367 = vmatpush1.bf16.msra.mxu0 %v797
      %1368 = vmatprep.subr.bf16.mxu0 0
      %1369 = vmatpush1.bf16.msra.mxu0 %v798
      %1370 = vmatprep.subr.bf16.mxu0 0
      %1371 = vmatpush1.bf16.msra.mxu0 %v799
      %1372 = vmatprep.subr.bf16.mxu0 0
      %1373 = vmatpush1.bf16.msra.mxu0 %v800
      %1374 = vmatprep.subr.bf16.mxu0 0
      %1375 = vmatpush1.bf16.msra.mxu0 %v801
      %1376 = vmatprep.subr.bf16.mxu0 0
      %1377 = vmatpush1.bf16.msra.mxu0 %v802
      %1378 = vmatprep.subr.bf16.mxu0 0
      %1379 = vmatpush1.bf16.msra.mxu0 %v803
      %1380 = vmatprep.subr.bf16.mxu0 0
      %1381 = vmatpush1.bf16.msra.mxu0 %v804
      %1382 = vmatprep.subr.bf16.mxu0 0
      %1383 = vmatpush1.bf16.msra.mxu0 %v805
      %1384 = vmatprep.subr.bf16.mxu0 0
      %1385 = vmatpush1.bf16.msra.mxu0 %v806
      %1386 = vmatprep.subr.bf16.mxu0 0
      %1387 = vmatpush1.bf16.msra.mxu0 %v807
      %1388 = vmatprep.mubr.bf16.mxu0 %v1255
      %1389 = vmatmul.mubr.bf16.gmra.mrb[0].mxu0 %v1254
      %v1390 = vpop.f32.mrb[0].mxu0
      %v1391 = vadd.f32 %v1335, %v1390
      %v1392 = vpop.f32.mrb[0].mxu0
      %v1393 = vpop.f32.mrb[0].mxu0
      %v1394 = vadd.f32 %v1338, %v1393
      %v1395 = vpop.f32.mrb[0].mxu0
      %1396 = vmatprep.mubr.bf16.mxu0 %v1263
      %1397 = vmatmul.mubr.bf16.gmra.mrb[0].mxu0 %v1262
      %v1398 = vpop.f32.mrb[0].mxu0
      %v1399 = vadd.f32 %v1343, %v1398
      %v1400 = vpop.f32.mrb[0].mxu0
      %v1401 = vpop.f32.mrb[0].mxu0
      %v1402 = vadd.f32 %v1346, %v1401
      %v1403 = vpop.f32.mrb[0].mxu0
      %1404 = vmatprep.mubr.bf16.mxu0 %v1271
      %1405 = vmatmul.mubr.bf16.gmra.mrb[0].mxu0 %v1270
      %v1406 = vpop.f32.mrb[0].mxu0
      %v1407 = vadd.f32 %v1351, %v1406
      %v1408 = vpop.f32.mrb[0].mxu0
      %v1409 = vpop.f32.mrb[0].mxu0
      %v1410 = vpop.f32.mrb[0].mxu0
      %1411 = vdwg.mxu0
      %1412 = vmatprep.subr.bf16.mxu0 0
      %1413 = vmatpush1.bf16.msra.mxu0 %v808
      %1414 = vmatprep.subr.bf16.mxu0 0
      %1415 = vmatpush1.bf16.msra.mxu0 %v809
      %1416 = vmatprep.subr.bf16.mxu0 0
      %1417 = vmatpush1.bf16.msra.mxu0 %v810
      %1418 = vmatprep.subr.bf16.mxu0 0
      %1419 = vmatpush1.bf16.msra.mxu0 %v811
      %1420 = vmatprep.subr.bf16.mxu0 0
      %1421 = vmatpush1.bf16.msra.mxu0 %v812
      %1422 = vmatprep.subr.bf16.mxu0 0
      %1423 = vmatpush1.bf16.msra.mxu0 %v813
      %1424 = vmatprep.subr.bf16.mxu0 0
      %1425 = vmatpush1.bf16.msra.mxu0 %v814
      %1426 = vmatprep.subr.bf16.mxu0 0
      %1427 = vmatpush1.bf16.msra.mxu0 %v815
      %1428 = vmatprep.subr.bf16.mxu0 0
      %1429 = vmatpush1.bf16.msra.mxu0 %v816
      %1430 = vmatprep.subr.bf16.mxu0 0
      %1431 = vmatpush1.bf16.msra.mxu0 %v817
      %1432 = vmatprep.subr.bf16.mxu0 0
      %1433 = vmatpush1.bf16.msra.mxu0 %v818
      %1434 = vmatprep.subr.bf16.mxu0 0
      %1435 = vmatpush1.bf16.msra.mxu0 %v819
      %1436 = vmatprep.subr.bf16.mxu0 0
      %1437 = vmatpush1.bf16.msra.mxu0 %v820
      %1438 = vmatprep.subr.bf16.mxu0 0
      %1439 = vmatpush1.bf16.msra.mxu0 %v821
      %1440 = vmatprep.subr.bf16.mxu0 0
      %1441 = vmatpush1.bf16.msra.mxu0 %v822
      %1442 = vmatprep.subr.bf16.mxu0 0
      %1443 = vmatpush1.bf16.msra.mxu0 %v823
      %1444 = vmatprep.mubr.bf16.mxu0 %v1257
      %1445 = vmatmul.mubr.bf16.gmra.mrb[0].mxu0 %v1256
      %v1446 = vpop.f32.mrb[0].mxu0
      %v1447 = vadd.f32 %v1391, %v1446
      %v1448 = vpop.f32.mrb[0].mxu0
      %v1449 = vpop.f32.mrb[0].mxu0
      %v1450 = vadd.f32 %v1394, %v1449
      %v1451 = vpop.f32.mrb[0].mxu0
      %1452 = vmatprep.mubr.bf16.mxu0 %v1265
      %1453 = vmatmul.mubr.bf16.gmra.mrb[0].mxu0 %v1264
      %v1454 = vpop.f32.mrb[0].mxu0
      %v1455 = vadd.f32 %v1399, %v1454
      %v1456 = vpop.f32.mrb[0].mxu0
      %v1457 = vpop.f32.mrb[0].mxu0
      %v1458 = vadd.f32 %v1402, %v1457
      %v1459 = vpop.f32.mrb[0].mxu0
      %1460 = vmatprep.mubr.bf16.mxu0 %v1273
      %1461 = vmatmul.mubr.bf16.gmra.mrb[0].mxu0 %v1272
      %v1462 = vpop.f32.mrb[0].mxu0
      %v1463 = vadd.f32 %v1407, %v1462
      %v1464 = vpop.f32.mrb[0].mxu0
      %v1465 = vpop.f32.mrb[0].mxu0
      %v1466 = vpop.f32.mrb[0].mxu0
      %1467 = vdwg.mxu0
      %1468 = vmatprep.subr.bf16.mxu0 0
      %1469 = vmatpush1.bf16.msra.mxu0 %v824
      %1470 = vmatprep.subr.bf16.mxu0 0
      %1471 = vmatpush1.bf16.msra.mxu0 %v825
      %1472 = vmatprep.subr.bf16.mxu0 0
      %1473 = vmatpush1.bf16.msra.mxu0 %v826
      %1474 = vmatprep.subr.bf16.mxu0 0
      %1475 = vmatpush1.bf16.msra.mxu0 %v827
      %1476 = vmatprep.subr.bf16.mxu0 0
      %1477 = vmatpush1.bf16.msra.mxu0 %v828
      %1478 = vmatprep.subr.bf16.mxu0 0
      %1479 = vmatpush1.bf16.msra.mxu0 %v829
      %1480 = vmatprep.subr.bf16.mxu0 0
      %1481 = vmatpush1.bf16.msra.mxu0 %v830
      %1482 = vmatprep.subr.bf16.mxu0 0
      %1483 = vmatpush1.bf16.msra.mxu0 %v831
      %1484 = vmatprep.subr.bf16.mxu0 0
      %1485 = vmatpush1.bf16.msra.mxu0 %v832
      %1486 = vmatprep.subr.bf16.mxu0 0
      %1487 = vmatpush1.bf16.msra.mxu0 %v833
      %1488 = vmatprep.subr.bf16.mxu0 0
      %1489 = vmatpush1.bf16.msra.mxu0 %v834
      %1490 = vmatprep.subr.bf16.mxu0 0
      %1491 = vmatpush1.bf16.msra.mxu0 %v835
      %1492 = vmatprep.subr.bf16.mxu0 0
      %1493 = vmatpush1.bf16.msra.mxu0 %v836
      %1494 = vmatprep.subr.bf16.mxu0 0
      %1495 = vmatpush1.bf16.msra.mxu0 %v837
      %1496 = vmatprep.subr.bf16.mxu0 0
      %1497 = vmatpush1.bf16.msra.mxu0 %v838
      %1498 = vmatprep.subr.bf16.mxu0 0
      %1499 = vmatpush1.bf16.msra.mxu0 %v839
      %1500 = vmatprep.mubr.bf16.mxu0 %v1259
      %1501 = vmatmul.mubr.bf16.gmra.mrb[0].mxu0 %v1258
      %v1502 = vpop.f32.mrb[0].mxu0
      %v1503 = vadd.f32 %v1447, %v1502
      %v1504 = vpop.f32.mrb[0].mxu0
      %v1505 = vpop.f32.mrb[0].mxu0
      %v1506 = vadd.f32 %v1450, %v1505
      %v1507 = vpop.f32.mrb[0].mxu0
      %1508 = vmatprep.mubr.bf16.mxu0 %v1267
      %1509 = vmatmul.mubr.bf16.gmra.mrb[0].mxu0 %v1266
      %v1510 = vpop.f32.mrb[0].mxu0
      %v1511 = vadd.f32 %v1455, %v1510
      %v1512 = vpop.f32.mrb[0].mxu0
      %v1513 = vpop.f32.mrb[0].mxu0
      %v1514 = vadd.f32 %v1458, %v1513
      %v1515 = vpop.f32.mrb[0].mxu0
      %1516 = vmatprep.mubr.bf16.mxu0 %v1275
      %1517 = vmatmul.mubr.bf16.gmra.mrb[0].mxu0 %v1274
      %v1518 = vpop.f32.mrb[0].mxu0
      %v1519 = vadd.f32 %v1463, %v1518
      %v1520 = vpop.f32.mrb[0].mxu0
      %v1521 = vpop.f32.mrb[0].mxu0
      %v1522 = vpop.f32.mrb[0].mxu0
      %1523 = vdwg.mxu0
      %v1524 = vmax.f32 %v1503, 0.0
      %v1525 = vmax.f32 %v1506, 0.0
      %v1526 = vmax.f32 %v1511, 0.0
      %v1527 = vmax.f32 %v1514, 0.0
      %v1528 = vmax.f32 %v1519, 0.0
      %v1529 = vmin.f32 %v1503, 0.0
      %v1530 = vmin.f32 %v1506, 0.0
      %v1531 = vmin.f32 %v1511, 0.0
      %v1532 = vmin.f32 %v1514, 0.0
      %v1533 = vmin.f32 %v1519, 0.0
      %v1534 = vmul.f32 %v1138, %v1529
      %v1535 = vmul.f32 %v1138, %v1530
      %v1536 = vmul.f32 %v1138, %v1531
      %v1537 = vmul.f32 %v1138, %v1532
      %v1538 = vmul.f32 %v1138, %v1533
      %v1539 = vadd.f32 %v1524, %v1534
      %v1540 = vadd.f32 %v1525, %v1535
      %v1541 = vadd.f32 %v1526, %v1536
      %v1542 = vadd.f32 %v1527, %v1537
      %v1543 = vadd.f32 %v1528, %v1538
      %v1544 = vmul.f32 %v1539, %v1153
      %v1545 = vmul.f32 %v1540, %v1153
      %v1546 = vmul.f32 %v1541, %v1153
      %v1547 = vmul.f32 %v1542, %v1153
      %v1548 = vmul.f32 %v1543, %v1153
      %v1549 = vadd.f32 %v1544, %v1164
      %v1550 = vadd.f32 %v1545, %v1164
      %v1551 = vadd.f32 %v1546, %v1164
      %v1552 = vadd.f32 %v1547, %v1164
      %v1553 = vadd.f32 %v1548, %v1164
      %v1554 = vmax.f32 %v1166, %v1549
      %v1555 = vmax.f32 %v1167, %v1550
      %v1556 = vmax.f32 %v1168, %v1551
      %v1557 = vmax.f32 %v1169, %v1552
      %v1558 = vmax.f32 %v1170, %v1553
      %s1559 = scalar_lea.vmem %s247, 320
      %v1560 = vld [vmem:[%s1559] sm:$0xff]
      %v1561 = vld [vmem:[%s1559 + $0x8] sm:$0xff]
      %v1562 = vld [vmem:[%s1559 + $0x10] sm:$0xff]
      %v1563 = vld [vmem:[%s1559 + $0x18] sm:$0xff]
      %v1564 = vld [vmem:[%s1559 + $0x20] sm:$0xff]
      %v1565 = vld [vmem:[%s1559 + $0x28] sm:$0xff]
      %v1566 = vld [vmem:[%s1559 + $0x30] sm:$0xff]
      %v1567 = vld [vmem:[%s1559 + $0x38] sm:$0xff]
      %v1568 = vld [vmem:[%s1559 + $0x40] sm:$0xff]
      %v1569 = vld [vmem:[%s1559 + $0x48] sm:$0xff]
      %v1570 = vld [vmem:[%s1559 + $0x50] sm:$0xff]
      %v1571 = vld [vmem:[%s1559 + $0x58] sm:$0xff]
      %v1572 = vld [vmem:[%s1559 + $0x60] sm:$0xff]
      %v1573 = vld [vmem:[%s1559 + $0x68] sm:$0xff]
      %v1574 = vld [vmem:[%s1559 + $0x70] sm:$0xff]
      %v1575 = vld [vmem:[%s1559 + $0x78] sm:$0xff]
      %v1576 = vld [vmem:[%s1559 + $0x80] sm:$0x33]
      %v1577 = vld [vmem:[%s1559 + $0x88] sm:$0x33]
      %v1578 = vld [vmem:[%s1559 + $0x90] sm:$0x33]
      %v1579 = vld [vmem:[%s1559 + $0x98] sm:$0x33]
      %v1600 = vunpack.c.l.b16 %v1560
      %v1601 = vunpack.c.h.b16 %v1560
      %v1602 = vunpack.c.l.b16 %v1561
      %v1603 = vunpack.c.h.b16 %v1561
      %v1604 = vunpack.c.l.b16 %v1562
      %v1605 = vunpack.c.h.b16 %v1562
      %v1606 = vunpack.c.l.b16 %v1563
      %v1607 = vunpack.c.h.b16 %v1563
      %v1608 = vunpack.c.l.b16 %v1564
      %v1609 = vunpack.c.h.b16 %v1564
      %v1610 = vunpack.c.l.b16 %v1565
      %v1611 = vunpack.c.h.b16 %v1565
      %v1612 = vunpack.c.l.b16 %v1566
      %v1613 = vunpack.c.h.b16 %v1566
      %v1614 = vunpack.c.l.b16 %v1567
      %v1615 = vunpack.c.h.b16 %v1567
      %v1616 = vunpack.c.l.b16 %v1568
      %v1617 = vunpack.c.h.b16 %v1568
      %v1618 = vunpack.c.l.b16 %v1569
      %v1619 = vunpack.c.h.b16 %v1569
      %v1620 = vunpack.c.l.b16 %v1570
      %v1621 = vunpack.c.h.b16 %v1570
      %v1622 = vunpack.c.l.b16 %v1571
      %v1623 = vunpack.c.h.b16 %v1571
      %v1624 = vunpack.c.l.b16 %v1572
      %v1625 = vunpack.c.h.b16 %v1572
      %v1626 = vunpack.c.l.b16 %v1573
      %v1627 = vunpack.c.h.b16 %v1573
      %v1628 = vunpack.c.l.b16 %v1574
      %v1629 = vunpack.c.h.b16 %v1574
      %v1630 = vunpack.c.l.b16 %v1575
      %v1631 = vunpack.c.h.b16 %v1575
      %v1632 = vunpack.c.l.b16 %v1576
      %v1633 = vunpack.c.h.b16 %v1576
      %v1634 = vunpack.c.l.b16 %v1577
      %v1635 = vunpack.c.h.b16 %v1577
      %v1636 = vunpack.c.l.b16 %v1578
      %v1637 = vunpack.c.h.b16 %v1578
      %v1638 = vunpack.c.l.b16 %v1579
      %v1639 = vunpack.c.h.b16 %v1579
      %v1640 = vpack.c.b16 %v1608, %v1600
      %v1641 = vpack.c.b16 %v1609, %v1601
      %v1642 = vpack.c.b16 %v1610, %v1602
      %v1643 = vpack.c.b16 %v1611, %v1603
      %v1644 = vpack.c.b16 %v1612, %v1604
      %v1645 = vpack.c.b16 %v1613, %v1605
      %v1646 = vpack.c.b16 %v1614, %v1606
      %v1647 = vpack.c.b16 %v1615, %v1607
      %v1648 = vpack.c.b16 %v1624, %v1616
      %v1649 = vpack.c.b16 %v1625, %v1617
      %v1650 = vpack.c.b16 %v1626, %v1618
      %v1651 = vpack.c.b16 %v1627, %v1619
      %v1652 = vpack.c.b16 %v1628, %v1620
      %v1653 = vpack.c.b16 %v1629, %v1621
      %v1654 = vpack.c.b16 %v1630, %v1622
      %v1655 = vpack.c.b16 %v1631, %v1623
      %v1656 = vpack.c.b16 %v1632, %v1632
      %v1657 = vpack.c.b16 %v1633, %v1633
      %v1658 = vpack.c.b16 %v1634, %v1634
      %v1659 = vpack.c.b16 %v1635, %v1635
      %v1660 = vpack.c.b16 %v1636, %v1636
      %v1661 = vpack.c.b16 %v1637, %v1637
      %v1662 = vpack.c.b16 %v1638, %v1638
      %v1663 = vpack.c.b16 %v1639, %v1639
      %1688 = vmatprep.subr.bf16.mxu0 0
      %1689 = vmatpush1.bf16.msra.mxu0 %v776
      %1690 = vmatprep.subr.bf16.mxu0 0
      %1691 = vmatpush1.bf16.msra.mxu0 %v777
      %1692 = vmatprep.subr.bf16.mxu0 0
      %1693 = vmatpush1.bf16.msra.mxu0 %v778
      %1694 = vmatprep.subr.bf16.mxu0 0
      %1695 = vmatpush1.bf16.msra.mxu0 %v779
      %1696 = vmatprep.subr.bf16.mxu0 0
      %1697 = vmatpush1.bf16.msra.mxu0 %v780
      %1698 = vmatprep.subr.bf16.mxu0 0
      %1699 = vmatpush1.bf16.msra.mxu0 %v781
      %1700 = vmatprep.subr.bf16.mxu0 0
      %1701 = vmatpush1.bf16.msra.mxu0 %v782
      %1702 = vmatprep.subr.bf16.mxu0 0
      %1703 = vmatpush1.bf16.msra.mxu0 %v783
      %1704 = vmatprep.subr.bf16.mxu0 0
      %1705 = vmatpush1.bf16.msra.mxu0 %v784
      %1706 = vmatprep.subr.bf16.mxu0 0
      %1707 = vmatpush1.bf16.msra.mxu0 %v785
      %1708 = vmatprep.subr.bf16.mxu0 0
      %1709 = vmatpush1.bf16.msra.mxu0 %v786
      %1710 = vmatprep.subr.bf16.mxu0 0
      %1711 = vmatpush1.bf16.msra.mxu0 %v787
      %1712 = vmatprep.subr.bf16.mxu0 0
      %1713 = vmatpush1.bf16.msra.mxu0 %v788
      %1714 = vmatprep.subr.bf16.mxu0 0
      %1715 = vmatpush1.bf16.msra.mxu0 %v789
      %1716 = vmatprep.subr.bf16.mxu0 0
      %1717 = vmatpush1.bf16.msra.mxu0 %v790
      %1718 = vmatprep.subr.bf16.mxu0 0
      %1719 = vmatpush1.bf16.msra.mxu0 %v791
      %1720 = vmatprep.mubr.bf16.mxu0 %v1641
      %1721 = vmatmul.mubr.bf16.gmra.mrb[0].mxu0 %v1640
      %v1722 = vpop.f32.mrb[0].mxu0
      %v1723 = vadd.f32 %v410, %v1722
      %v1724 = vpop.f32.mrb[0].mxu0
      %v1725 = vpop.f32.mrb[0].mxu0
      %v1726 = vadd.f32 %v410, %v1725
      %v1727 = vpop.f32.mrb[0].mxu0
      %1728 = vmatprep.mubr.bf16.mxu0 %v1649
      %1729 = vmatmul.mubr.bf16.gmra.mrb[0].mxu0 %v1648
      %v1730 = vpop.f32.mrb[0].mxu0
      %v1731 = vadd.f32 %v410, %v1730
      %v1732 = vpop.f32.mrb[0].mxu0
      %v1733 = vpop.f32.mrb[0].mxu0
      %v1734 = vadd.f32 %v410, %v1733
      %v1735 = vpop.f32.mrb[0].mxu0
      %1736 = vmatprep.mubr.bf16.mxu0 %v1657
      %1737 = vmatmul.mubr.bf16.gmra.mrb[0].mxu0 %v1656
      %v1738 = vpop.f32.mrb[0].mxu0
      %v1739 = vadd.f32 %v410, %v1738
      %v1740 = vpop.f32.mrb[0].mxu0
      %v1741 = vpop.f32.mrb[0].mxu0
      %v1742 = vpop.f32.mrb[0].mxu0
      %1743 = vdwg.mxu0
      %1744 = vmatprep.subr.bf16.mxu0 0
      %1745 = vmatpush1.bf16.msra.mxu0 %v792
      %1746 = vmatprep.subr.bf16.mxu0 0
      %1747 = vmatpush1.bf16.msra.mxu0 %v793
      %1748 = vmatprep.subr.bf16.mxu0 0
      %1749 = vmatpush1.bf16.msra.mxu0 %v794
      %1750 = vmatprep.subr.bf16.mxu0 0
      %1751 = vmatpush1.bf16.msra.mxu0 %v795
      %1752 = vmatprep.subr.bf16.mxu0 0
      %1753 = vmatpush1.bf16.msra.mxu0 %v796
      %1754 = vmatprep.subr.bf16.mxu0 0
      %1755 = vmatpush1.bf16.msra.mxu0 %v797
      %1756 = vmatprep.subr.bf16.mxu0 0
      %1757 = vmatpush1.bf16.msra.mxu0 %v798
      %1758 = vmatprep.subr.bf16.mxu0 0
      %1759 = vmatpush1.bf16.msra.mxu0 %v799
      %1760 = vmatprep.subr.bf16.mxu0 0
      %1761 = vmatpush1.bf16.msra.mxu0 %v800
      %1762 = vmatprep.subr.bf16.mxu0 0
      %1763 = vmatpush1.bf16.msra.mxu0 %v801
      %1764 = vmatprep.subr.bf16.mxu0 0
      %1765 = vmatpush1.bf16.msra.mxu0 %v802
      %1766 = vmatprep.subr.bf16.mxu0 0
      %1767 = vmatpush1.bf16.msra.mxu0 %v803
      %1768 = vmatprep.subr.bf16.mxu0 0
      %1769 = vmatpush1.bf16.msra.mxu0 %v804
      %1770 = vmatprep.subr.bf16.mxu0 0
      %1771 = vmatpush1.bf16.msra.mxu0 %v805
      %1772 = vmatprep.subr.bf16.mxu0 0
      %1773 = vmatpush1.bf16.msra.mxu0 %v806
      %1774 = vmatprep.subr.bf16.mxu0 0
      %1775 = vmatpush1.bf16.msra.mxu0 %v807
      %1776 = vmatprep.mubr.bf16.mxu0 %v1643
      %1777 = vmatmul.mubr.bf16.gmra.mrb[0].mxu0 %v1642
      %v1778 = vpop.f32.mrb[0].mxu0
      %v1779 = vadd.f32 %v1723, %v1778
      %v1780 = vpop.f32.mrb[0].mxu0
      %v1781 = vpop.f32.mrb[0].mxu0
      %v1782 = vadd.f32 %v1726, %v1781
      %v1783 = vpop.f32.mrb[0].mxu0
      %1784 = vmatprep.mubr.bf16.mxu0 %v1651
      %1785 = vmatmul.mubr.bf16.gmra.mrb[0].mxu0 %v1650
      %v1786 = vpop.f32.mrb[0].mxu0
      %v1787 = vadd.f32 %v1731, %v1786
      %v1788 = vpop.f32.mrb[0].mxu0
      %v1789 = vpop.f32.mrb[0].mxu0
      %v1790 = vadd.f32 %v1734, %v1789
      %v1791 = vpop.f32.mrb[0].mxu0
      %1792 = vmatprep.mubr.bf16.mxu0 %v1659
      %1793 = vmatmul.mubr.bf16.gmra.mrb[0].mxu0 %v1658
      %v1794 = vpop.f32.mrb[0].mxu0
      %v1795 = vadd.f32 %v1739, %v1794
      %v1796 = vpop.f32.mrb[0].mxu0
      %v1797 = vpop.f32.mrb[0].mxu0
      %v1798 = vpop.f32.mrb[0].mxu0
      %1799 = vdwg.mxu0
      %1800 = vmatprep.subr.bf16.mxu0 0
      %1801 = vmatpush1.bf16.msra.mxu0 %v808
      %1802 = vmatprep.subr.bf16.mxu0 0
      %1803 = vmatpush1.bf16.msra.mxu0 %v809
      %1804 = vmatprep.subr.bf16.mxu0 0
      %1805 = vmatpush1.bf16.msra.mxu0 %v810
      %1806 = vmatprep.subr.bf16.mxu0 0
      %1807 = vmatpush1.bf16.msra.mxu0 %v811
      %1808 = vmatprep.subr.bf16.mxu0 0
      %1809 = vmatpush1.bf16.msra.mxu0 %v812
      %1810 = vmatprep.subr.bf16.mxu0 0
      %1811 = vmatpush1.bf16.msra.mxu0 %v813
      %1812 = vmatprep.subr.bf16.mxu0 0
      %1813 = vmatpush1.bf16.msra.mxu0 %v814
      %1814 = vmatprep.subr.bf16.mxu0 0
      %1815 = vmatpush1.bf16.msra.mxu0 %v815
      %1816 = vmatprep.subr.bf16.mxu0 0
      %1817 = vmatpush1.bf16.msra.mxu0 %v816
      %1818 = vmatprep.subr.bf16.mxu0 0
      %1819 = vmatpush1.bf16.msra.mxu0 %v817
      %1820 = vmatprep.subr.bf16.mxu0 0
      %1821 = vmatpush1.bf16.msra.mxu0 %v818
      %1822 = vmatprep.subr.bf16.mxu0 0
      %1823 = vmatpush1.bf16.msra.mxu0 %v819
      %1824 = vmatprep.subr.bf16.mxu0 0
      %1825 = vmatpush1.bf16.msra.mxu0 %v820
      %1826 = vmatprep.subr.bf16.mxu0 0
      %1827 = vmatpush1.bf16.msra.mxu0 %v821
      %1828 = vmatprep.subr.bf16.mxu0 0
      %1829 = vmatpush1.bf16.msra.mxu0 %v822
      %1830 = vmatprep.subr.bf16.mxu0 0
      %1831 = vmatpush1.bf16.msra.mxu0 %v823
      %1832 = vmatprep.mubr.bf16.mxu0 %v1645
      %1833 = vmatmul.mubr.bf16.gmra.mrb[0].mxu0 %v1644
      %v1834 = vpop.f32.mrb[0].mxu0
      %v1835 = vadd.f32 %v1779, %v1834
      %v1836 = vpop.f32.mrb[0].mxu0
      %v1837 = vpop.f32.mrb[0].mxu0
      %v1838 = vadd.f32 %v1782, %v1837
      %v1839 = vpop.f32.mrb[0].mxu0
      %1840 = vmatprep.mubr.bf16.mxu0 %v1653
      %1841 = vmatmul.mubr.bf16.gmra.mrb[0].mxu0 %v1652
      %v1842 = vpop.f32.mrb[0].mxu0
      %v1843 = vadd.f32 %v1787, %v1842
      %v1844 = vpop.f32.mrb[0].mxu0
      %v1845 = vpop.f32.mrb[0].mxu0
      %v1846 = vadd.f32 %v1790, %v1845
      %v1847 = vpop.f32.mrb[0].mxu0
      %1848 = vmatprep.mubr.bf16.mxu0 %v1661
      %1849 = vmatmul.mubr.bf16.gmra.mrb[0].mxu0 %v1660
      %v1850 = vpop.f32.mrb[0].mxu0
      %v1851 = vadd.f32 %v1795, %v1850
      %v1852 = vpop.f32.mrb[0].mxu0
      %v1853 = vpop.f32.mrb[0].mxu0
      %v1854 = vpop.f32.mrb[0].mxu0
      %1855 = vdwg.mxu0
      %1856 = vmatprep.subr.bf16.mxu0 0
      %1857 = vmatpush1.bf16.msra.mxu0 %v824
      %1858 = vmatprep.subr.bf16.mxu0 0
      %1859 = vmatpush1.bf16.msra.mxu0 %v825
      %1860 = vmatprep.subr.bf16.mxu0 0
      %1861 = vmatpush1.bf16.msra.mxu0 %v826
      %1862 = vmatprep.subr.bf16.mxu0 0
      %1863 = vmatpush1.bf16.msra.mxu0 %v827
      %1864 = vmatprep.subr.bf16.mxu0 0
      %1865 = vmatpush1.bf16.msra.mxu0 %v828
      %1866 = vmatprep.subr.bf16.mxu0 0
      %1867 = vmatpush1.bf16.msra.mxu0 %v829
      %1868 = vmatprep.subr.bf16.mxu0 0
      %1869 = vmatpush1.bf16.msra.mxu0 %v830
      %1870 = vmatprep.subr.bf16.mxu0 0
      %1871 = vmatpush1.bf16.msra.mxu0 %v831
      %1872 = vmatprep.subr.bf16.mxu0 0
      %1873 = vmatpush1.bf16.msra.mxu0 %v832
      %1874 = vmatprep.subr.bf16.mxu0 0
      %1875 = vmatpush1.bf16.msra.mxu0 %v833
      %1876 = vmatprep.subr.bf16.mxu0 0
      %1877 = vmatpush1.bf16.msra.mxu0 %v834
      %1878 = vmatprep.subr.bf16.mxu0 0
      %1879 = vmatpush1.bf16.msra.mxu0 %v835
      %1880 = vmatprep.subr.bf16.mxu0 0
      %1881 = vmatpush1.bf16.msra.mxu0 %v836
      %1882 = vmatprep.subr.bf16.mxu0 0
      %1883 = vmatpush1.bf16.msra.mxu0 %v837
      %1884 = vmatprep.subr.bf16.mxu0 0
      %1885 = vmatpush1.bf16.msra.mxu0 %v838
      %1886 = vmatprep.subr.bf16.mxu0 0
      %1887 = vmatpush1.bf16.msra.mxu0 %v839
      %1888 = vmatprep.mubr.bf16.mxu0 %v1647
      %1889 = vmatmul.mubr.bf16.gmra.mrb[0].mxu0 %v1646
      %v1890 = vpop.f32.mrb[0].mxu0
      %v1891 = vadd.f32 %v1835, %v1890
      %v1892 = vpop.f32.mrb[0].mxu0
      %v1893 = vpop.f32.mrb[0].mxu0
      %v1894 = vadd.f32 %v1838, %v1893
      %v1895 = vpop.f32.mrb[0].mxu0
      %1896 = vmatprep.mubr.bf16.mxu0 %v1655
      %1897 = vmatmul.mubr.bf16.gmra.mrb[0].mxu0 %v1654
      %v1898 = vpop.f32.mrb[0].mxu0
      %v1899 = vadd.f32 %v1843, %v1898
      %v1900 = vpop.f32.mrb[0].mxu0
      %v1901 = vpop.f32.mrb[0].mxu0
      %v1902 = vadd.f32 %v1846, %v1901
      %v1903 = vpop.f32.mrb[0].mxu0
      %1904 = vmatprep.mubr.bf16.mxu0 %v1663
      %1905 = vmatmul.mubr.bf16.gmra.mrb[0].mxu0 %v1662
      %v1906 = vpop.f32.mrb[0].mxu0
      %v1907 = vadd.f32 %v1851, %v1906
      %v1908 = vpop.f32.mrb[0].mxu0
      %v1909 = vpop.f32.mrb[0].mxu0
      %v1910 = vpop.f32.mrb[0].mxu0
      %1911 = vdwg.mxu0
      %v1912 = vmax.f32 %v1891, 0.0
      %v1913 = vmax.f32 %v1894, 0.0
      %v1914 = vmax.f32 %v1899, 0.0
      %v1915 = vmax.f32 %v1902, 0.0
      %v1916 = vmax.f32 %v1907, 0.0
      %v1917 = vmin.f32 %v1891, 0.0
      %v1918 = vmin.f32 %v1894, 0.0
      %v1919 = vmin.f32 %v1899, 0.0
      %v1920 = vmin.f32 %v1902, 0.0
      %v1921 = vmin.f32 %v1907, 0.0
      %v1922 = vmul.f32 %v1138, %v1917
      %v1923 = vmul.f32 %v1138, %v1918
      %v1924 = vmul.f32 %v1138, %v1919
      %v1925 = vmul.f32 %v1138, %v1920
      %v1926 = vmul.f32 %v1138, %v1921
      %v1927 = vadd.f32 %v1912, %v1922
      %v1928 = vadd.f32 %v1913, %v1923
      %v1929 = vadd.f32 %v1914, %v1924
      %v1930 = vadd.f32 %v1915, %v1925
      %v1931 = vadd.f32 %v1916, %v1926
      %v1932 = vmul.f32 %v1927, %v1153
      %v1933 = vmul.f32 %v1928, %v1153
      %v1934 = vmul.f32 %v1929, %v1153
      %v1935 = vmul.f32 %v1930, %v1153
      %v1936 = vmul.f32 %v1931, %v1153
      %v1937 = vadd.f32 %v1932, %v1164
      %v1938 = vadd.f32 %v1933, %v1164
      %v1939 = vadd.f32 %v1934, %v1164
      %v1940 = vadd.f32 %v1935, %v1164
      %v1941 = vadd.f32 %v1936, %v1164
      %v1942 = vmax.f32 %v1554, %v1937
      %v1943 = vmax.f32 %v1555, %v1938
      %v1944 = vmax.f32 %v1556, %v1939
      %v1945 = vmax.f32 %v1557, %v1940
      %v1946 = vmax.f32 %v1558, %v1941
      %s1947 = scalar_lea.vmem %s247, 480
      %v1948 = vld [vmem:[%s1947] sm:$0xff]
      %v1949 = vld [vmem:[%s1947 + $0x8] sm:$0xff]
      %v1950 = vld [vmem:[%s1947 + $0x10] sm:$0xff]
      %v1951 = vld [vmem:[%s1947 + $0x18] sm:$0xff]
      %v1952 = vld [vmem:[%s1947 + $0x20] sm:$0xff]
      %v1953 = vld [vmem:[%s1947 + $0x28] sm:$0xff]
      %v1954 = vld [vmem:[%s1947 + $0x30] sm:$0xff]
      %v1955 = vld [vmem:[%s1947 + $0x38] sm:$0xff]
      %v1956 = vld [vmem:[%s1947 + $0x40] sm:$0xff]
      %v1957 = vld [vmem:[%s1947 + $0x48] sm:$0xff]
      %v1958 = vld [vmem:[%s1947 + $0x50] sm:$0xff]
      %v1959 = vld [vmem:[%s1947 + $0x58] sm:$0xff]
      %v1960 = vld [vmem:[%s1947 + $0x60] sm:$0xff]
      %v1961 = vld [vmem:[%s1947 + $0x68] sm:$0xff]
      %v1962 = vld [vmem:[%s1947 + $0x70] sm:$0xff]
      %v1963 = vld [vmem:[%s1947 + $0x78] sm:$0xff]
      %v1964 = vld [vmem:[%s1947 + $0x80] sm:$0x33]
      %v1965 = vld [vmem:[%s1947 + $0x88] sm:$0x33]
      %v1966 = vld [vmem:[%s1947 + $0x90] sm:$0x33]
      %v1967 = vld [vmem:[%s1947 + $0x98] sm:$0x33]
      %v1988 = vunpack.c.l.b16 %v1948
      %v1989 = vunpack.c.h.b16 %v1948
      %v1990 = vunpack.c.l.b16 %v1949
      %v1991 = vunpack.c.h.b16 %v1949
      %v1992 = vunpack.c.l.b16 %v1950
      %v1993 = vunpack.c.h.b16 %v1950
      %v1994 = vunpack.c.l.b16 %v1951
      %v1995 = vunpack.c.h.b16 %v1951
      %v1996 = vunpack.c.l.b16 %v1952
      %v1997 = vunpack.c.h.b16 %v1952
      %v1998 = vunpack.c.l.b16 %v1953
      %v1999 = vunpack.c.h.b16 %v1953
      %v2000 = vunpack.c.l.b16 %v1954
      %v2001 = vunpack.c.h.b16 %v1954
      %v2002 = vunpack.c.l.b16 %v1955
      %v2003 = vunpack.c.h.b16 %v1955
      %v2004 = vunpack.c.l.b16 %v1956
      %v2005 = vunpack.c.h.b16 %v1956
      %v2006 = vunpack.c.l.b16 %v1957
      %v2007 = vunpack.c.h.b16 %v1957
      %v2008 = vunpack.c.l.b16 %v1958
      %v2009 = vunpack.c.h.b16 %v1958
      %v2010 = vunpack.c.l.b16 %v1959
      %v2011 = vunpack.c.h.b16 %v1959
      %v2012 = vunpack.c.l.b16 %v1960
      %v2013 = vunpack.c.h.b16 %v1960
      %v2014 = vunpack.c.l.b16 %v1961
      %v2015 = vunpack.c.h.b16 %v1961
      %v2016 = vunpack.c.l.b16 %v1962
      %v2017 = vunpack.c.h.b16 %v1962
      %v2018 = vunpack.c.l.b16 %v1963
      %v2019 = vunpack.c.h.b16 %v1963
      %v2020 = vunpack.c.l.b16 %v1964
      %v2021 = vunpack.c.h.b16 %v1964
      %v2022 = vunpack.c.l.b16 %v1965
      %v2023 = vunpack.c.h.b16 %v1965
      %v2024 = vunpack.c.l.b16 %v1966
      %v2025 = vunpack.c.h.b16 %v1966
      %v2026 = vunpack.c.l.b16 %v1967
      %v2027 = vunpack.c.h.b16 %v1967
      %v2028 = vpack.c.b16 %v1996, %v1988
      %v2029 = vpack.c.b16 %v1997, %v1989
      %v2030 = vpack.c.b16 %v1998, %v1990
      %v2031 = vpack.c.b16 %v1999, %v1991
      %v2032 = vpack.c.b16 %v2000, %v1992
      %v2033 = vpack.c.b16 %v2001, %v1993
      %v2034 = vpack.c.b16 %v2002, %v1994
      %v2035 = vpack.c.b16 %v2003, %v1995
      %v2036 = vpack.c.b16 %v2012, %v2004
      %v2037 = vpack.c.b16 %v2013, %v2005
      %v2038 = vpack.c.b16 %v2014, %v2006
      %v2039 = vpack.c.b16 %v2015, %v2007
      %v2040 = vpack.c.b16 %v2016, %v2008
      %v2041 = vpack.c.b16 %v2017, %v2009
      %v2042 = vpack.c.b16 %v2018, %v2010
      %v2043 = vpack.c.b16 %v2019, %v2011
      %v2044 = vpack.c.b16 %v2020, %v2020
      %v2045 = vpack.c.b16 %v2021, %v2021
      %v2046 = vpack.c.b16 %v2022, %v2022
      %v2047 = vpack.c.b16 %v2023, %v2023
      %v2048 = vpack.c.b16 %v2024, %v2024
      %v2049 = vpack.c.b16 %v2025, %v2025
      %v2050 = vpack.c.b16 %v2026, %v2026
      %v2051 = vpack.c.b16 %v2027, %v2027
      %2076 = vmatprep.subr.bf16.mxu0 0
      %2077 = vmatpush1.bf16.msra.mxu0 %v776
      %2078 = vmatprep.subr.bf16.mxu0 0
      %2079 = vmatpush1.bf16.msra.mxu0 %v777
      %2080 = vmatprep.subr.bf16.mxu0 0
      %2081 = vmatpush1.bf16.msra.mxu0 %v778
      %2082 = vmatprep.subr.bf16.mxu0 0
      %2083 = vmatpush1.bf16.msra.mxu0 %v779
      %2084 = vmatprep.subr.bf16.mxu0 0
      %2085 = vmatpush1.bf16.msra.mxu0 %v780
      %2086 = vmatprep.subr.bf16.mxu0 0
      %2087 = vmatpush1.bf16.msra.mxu0 %v781
      %2088 = vmatprep.subr.bf16.mxu0 0
      %2089 = vmatpush1.bf16.msra.mxu0 %v782
      %2090 = vmatprep.subr.bf16.mxu0 0
      %2091 = vmatpush1.bf16.msra.mxu0 %v783
      %2092 = vmatprep.subr.bf16.mxu0 0
      %2093 = vmatpush1.bf16.msra.mxu0 %v784
      %2094 = vmatprep.subr.bf16.mxu0 0
      %2095 = vmatpush1.bf16.msra.mxu0 %v785
      %2096 = vmatprep.subr.bf16.mxu0 0
      %2097 = vmatpush1.bf16.msra.mxu0 %v786
      %2098 = vmatprep.subr.bf16.mxu0 0
      %2099 = vmatpush1.bf16.msra.mxu0 %v787
      %2100 = vmatprep.subr.bf16.mxu0 0
      %2101 = vmatpush1.bf16.msra.mxu0 %v788
      %2102 = vmatprep.subr.bf16.mxu0 0
      %2103 = vmatpush1.bf16.msra.mxu0 %v789
      %2104 = vmatprep.subr.bf16.mxu0 0
      %2105 = vmatpush1.bf16.msra.mxu0 %v790
      %2106 = vmatprep.subr.bf16.mxu0 0
      %2107 = vmatpush1.bf16.msra.mxu0 %v791
      %2108 = vmatprep.mubr.bf16.mxu0 %v2029
      %2109 = vmatmul.mubr.bf16.gmra.mrb[0].mxu0 %v2028
      %v2110 = vpop.f32.mrb[0].mxu0
      %v2111 = vadd.f32 %v410, %v2110
      %v2112 = vpop.f32.mrb[0].mxu0
      %v2113 = vpop.f32.mrb[0].mxu0
      %v2114 = vadd.f32 %v410, %v2113
      %v2115 = vpop.f32.mrb[0].mxu0
      %2116 = vmatprep.mubr.bf16.mxu0 %v2037
      %2117 = vmatmul.mubr.bf16.gmra.mrb[0].mxu0 %v2036
      %v2118 = vpop.f32.mrb[0].mxu0
      %v2119 = vadd.f32 %v410, %v2118
      %v2120 = vpop.f32.mrb[0].mxu0
      %v2121 = vpop.f32.mrb[0].mxu0
      %v2122 = vadd.f32 %v410, %v2121
      %v2123 = vpop.f32.mrb[0].mxu0
      %2124 = vmatprep.mubr.bf16.mxu0 %v2045
      %2125 = vmatmul.mubr.bf16.gmra.mrb[0].mxu0 %v2044
      %v2126 = vpop.f32.mrb[0].mxu0
      %v2127 = vadd.f32 %v410, %v2126
      %v2128 = vpop.f32.mrb[0].mxu0
      %v2129 = vpop.f32.mrb[0].mxu0
      %v2130 = vpop.f32.mrb[0].mxu0
      %2131 = vdwg.mxu0
      %2132 = vmatprep.subr.bf16.mxu0 0
      %2133 = vmatpush1.bf16.msra.mxu0 %v792
      %2134 = vmatprep.subr.bf16.mxu0 0
      %2135 = vmatpush1.bf16.msra.mxu0 %v793
      %2136 = vmatprep.subr.bf16.mxu0 0
      %2137 = vmatpush1.bf16.msra.mxu0 %v794
      %2138 = vmatprep.subr.bf16.mxu0 0
      %2139 = vmatpush1.bf16.msra.mxu0 %v795
      %2140 = vmatprep.subr.bf16.mxu0 0
      %2141 = vmatpush1.bf16.msra.mxu0 %v796
      %2142 = vmatprep.subr.bf16.mxu0 0
      %2143 = vmatpush1.bf16.msra.mxu0 %v797
      %2144 = vmatprep.subr.bf16.mxu0 0
      %2145 = vmatpush1.bf16.msra.mxu0 %v798
      %2146 = vmatprep.subr.bf16.mxu0 0
      %2147 = vmatpush1.bf16.msra.mxu0 %v799
      %2148 = vmatprep.subr.bf16.mxu0 0
      %2149 = vmatpush1.bf16.msra.mxu0 %v800
      %2150 = vmatprep.subr.bf16.mxu0 0
      %2151 = vmatpush1.bf16.msra.mxu0 %v801
      %2152 = vmatprep.subr.bf16.mxu0 0
      %2153 = vmatpush1.bf16.msra.mxu0 %v802
      %2154 = vmatprep.subr.bf16.mxu0 0
      %2155 = vmatpush1.bf16.msra.mxu0 %v803
      %2156 = vmatprep.subr.bf16.mxu0 0
      %2157 = vmatpush1.bf16.msra.mxu0 %v804
      %2158 = vmatprep.subr.bf16.mxu0 0
      %2159 = vmatpush1.bf16.msra.mxu0 %v805
      %2160 = vmatprep.subr.bf16.mxu0 0
      %2161 = vmatpush1.bf16.msra.mxu0 %v806
      %2162 = vmatprep.subr.bf16.mxu0 0
      %2163 = vmatpush1.bf16.msra.mxu0 %v807
      %2164 = vmatprep.mubr.bf16.mxu0 %v2031
      %2165 = vmatmul.mubr.bf16.gmra.mrb[0].mxu0 %v2030
      %v2166 = vpop.f32.mrb[0].mxu0
      %v2167 = vadd.f32 %v2111, %v2166
      %v2168 = vpop.f32.mrb[0].mxu0
      %v2169 = vpop.f32.mrb[0].mxu0
      %v2170 = vadd.f32 %v2114, %v2169
      %v2171 = vpop.f32.mrb[0].mxu0
      %2172 = vmatprep.mubr.bf16.mxu0 %v2039
      %2173 = vmatmul.mubr.bf16.gmra.mrb[0].mxu0 %v2038
      %v2174 = vpop.f32.mrb[0].mxu0
      %v2175 = vadd.f32 %v2119, %v2174
      %v2176 = vpop.f32.mrb[0].mxu0
      %v2177 = vpop.f32.mrb[0].mxu0
      %v2178 = vadd.f32 %v2122, %v2177
      %v2179 = vpop.f32.mrb[0].mxu0
      %2180 = vmatprep.mubr.bf16.mxu0 %v2047
      %2181 = vmatmul.mubr.bf16.gmra.mrb[0].mxu0 %v2046
      %v2182 = vpop.f32.mrb[0].mxu0
      %v2183 = vadd.f32 %v2127, %v2182
      %v2184 = vpop.f32.mrb[0].mxu0
      %v2185 = vpop.f32.mrb[0].mxu0
      %v2186 = vpop.f32.mrb[0].mxu0
      %2187 = vdwg.mxu0
      %2188 = vmatprep.subr.bf16.mxu0 0
      %2189 = vmatpush1.bf16.msra.mxu0 %v808
      %2190 = vmatprep.subr.bf16.mxu0 0
      %2191 = vmatpush1.bf16.msra.mxu0 %v809
      %2192 = vmatprep.subr.bf16.mxu0 0
      %2193 = vmatpush1.bf16.msra.mxu0 %v810
      %2194 = vmatprep.subr.bf16.mxu0 0
      %2195 = vmatpush1.bf16.msra.mxu0 %v811
      %2196 = vmatprep.subr.bf16.mxu0 0
      %2197 = vmatpush1.bf16.msra.mxu0 %v812
      %2198 = vmatprep.subr.bf16.mxu0 0
      %2199 = vmatpush1.bf16.msra.mxu0 %v813
      %2200 = vmatprep.subr.bf16.mxu0 0
      %2201 = vmatpush1.bf16.msra.mxu0 %v814
      %2202 = vmatprep.subr.bf16.mxu0 0
      %2203 = vmatpush1.bf16.msra.mxu0 %v815
      %2204 = vmatprep.subr.bf16.mxu0 0
      %2205 = vmatpush1.bf16.msra.mxu0 %v816
      %2206 = vmatprep.subr.bf16.mxu0 0
      %2207 = vmatpush1.bf16.msra.mxu0 %v817
      %2208 = vmatprep.subr.bf16.mxu0 0
      %2209 = vmatpush1.bf16.msra.mxu0 %v818
      %2210 = vmatprep.subr.bf16.mxu0 0
      %2211 = vmatpush1.bf16.msra.mxu0 %v819
      %2212 = vmatprep.subr.bf16.mxu0 0
      %2213 = vmatpush1.bf16.msra.mxu0 %v820
      %2214 = vmatprep.subr.bf16.mxu0 0
      %2215 = vmatpush1.bf16.msra.mxu0 %v821
      %2216 = vmatprep.subr.bf16.mxu0 0
      %2217 = vmatpush1.bf16.msra.mxu0 %v822
      %2218 = vmatprep.subr.bf16.mxu0 0
      %2219 = vmatpush1.bf16.msra.mxu0 %v823
      %2220 = vmatprep.mubr.bf16.mxu0 %v2033
      %2221 = vmatmul.mubr.bf16.gmra.mrb[0].mxu0 %v2032
      %v2222 = vpop.f32.mrb[0].mxu0
      %v2223 = vadd.f32 %v2167, %v2222
      %v2224 = vpop.f32.mrb[0].mxu0
      %v2225 = vpop.f32.mrb[0].mxu0
      %v2226 = vadd.f32 %v2170, %v2225
      %v2227 = vpop.f32.mrb[0].mxu0
      %2228 = vmatprep.mubr.bf16.mxu0 %v2041
      %2229 = vmatmul.mubr.bf16.gmra.mrb[0].mxu0 %v2040
      %v2230 = vpop.f32.mrb[0].mxu0
      %v2231 = vadd.f32 %v2175, %v2230
      %v2232 = vpop.f32.mrb[0].mxu0
      %v2233 = vpop.f32.mrb[0].mxu0
      %v2234 = vadd.f32 %v2178, %v2233
      %v2235 = vpop.f32.mrb[0].mxu0
      %2236 = vmatprep.mubr.bf16.mxu0 %v2049
      %2237 = vmatmul.mubr.bf16.gmra.mrb[0].mxu0 %v2048
      %v2238 = vpop.f32.mrb[0].mxu0
      %v2239 = vadd.f32 %v2183, %v2238
      %v2240 = vpop.f32.mrb[0].mxu0
      %v2241 = vpop.f32.mrb[0].mxu0
      %v2242 = vpop.f32.mrb[0].mxu0
      %2243 = vdwg.mxu0
      %2244 = vmatprep.subr.bf16.mxu0 0
      %2245 = vmatpush1.bf16.msra.mxu0 %v824
      %2246 = vmatprep.subr.bf16.mxu0 0
      %2247 = vmatpush1.bf16.msra.mxu0 %v825
      %2248 = vmatprep.subr.bf16.mxu0 0
      %2249 = vmatpush1.bf16.msra.mxu0 %v826
      %2250 = vmatprep.subr.bf16.mxu0 0
      %2251 = vmatpush1.bf16.msra.mxu0 %v827
      %2252 = vmatprep.subr.bf16.mxu0 0
      %2253 = vmatpush1.bf16.msra.mxu0 %v828
      %2254 = vmatprep.subr.bf16.mxu0 0
      %2255 = vmatpush1.bf16.msra.mxu0 %v829
      %2256 = vmatprep.subr.bf16.mxu0 0
      %2257 = vmatpush1.bf16.msra.mxu0 %v830
      %2258 = vmatprep.subr.bf16.mxu0 0
      %2259 = vmatpush1.bf16.msra.mxu0 %v831
      %2260 = vmatprep.subr.bf16.mxu0 0
      %2261 = vmatpush1.bf16.msra.mxu0 %v832
      %2262 = vmatprep.subr.bf16.mxu0 0
      %2263 = vmatpush1.bf16.msra.mxu0 %v833
      %2264 = vmatprep.subr.bf16.mxu0 0
      %2265 = vmatpush1.bf16.msra.mxu0 %v834
      %2266 = vmatprep.subr.bf16.mxu0 0
      %2267 = vmatpush1.bf16.msra.mxu0 %v835
      %2268 = vmatprep.subr.bf16.mxu0 0
      %2269 = vmatpush1.bf16.msra.mxu0 %v836
      %2270 = vmatprep.subr.bf16.mxu0 0
      %2271 = vmatpush1.bf16.msra.mxu0 %v837
      %2272 = vmatprep.subr.bf16.mxu0 0
      %2273 = vmatpush1.bf16.msra.mxu0 %v838
      %2274 = vmatprep.subr.bf16.mxu0 0
      %2275 = vmatpush1.bf16.msra.mxu0 %v839
      %2276 = vmatprep.mubr.bf16.mxu0 %v2035
      %2277 = vmatmul.mubr.bf16.gmra.mrb[0].mxu0 %v2034
      %v2278 = vpop.f32.mrb[0].mxu0
      %v2279 = vadd.f32 %v2223, %v2278
      %v2280 = vpop.f32.mrb[0].mxu0
      %v2281 = vpop.f32.mrb[0].mxu0
      %v2282 = vadd.f32 %v2226, %v2281
      %v2283 = vpop.f32.mrb[0].mxu0
      %2284 = vmatprep.mubr.bf16.mxu0 %v2043
      %2285 = vmatmul.mubr.bf16.gmra.mrb[0].mxu0 %v2042
      %v2286 = vpop.f32.mrb[0].mxu0
      %v2287 = vadd.f32 %v2231, %v2286
      %v2288 = vpop.f32.mrb[0].mxu0
      %v2289 = vpop.f32.mrb[0].mxu0
      %v2290 = vadd.f32 %v2234, %v2289
      %v2291 = vpop.f32.mrb[0].mxu0
      %2292 = vmatprep.mubr.bf16.mxu0 %v2051
      %2293 = vmatmul.mubr.bf16.gmra.mrb[0].mxu0 %v2050
      %v2294 = vpop.f32.mrb[0].mxu0
      %v2295 = vadd.f32 %v2239, %v2294
      %v2296 = vpop.f32.mrb[0].mxu0
      %v2297 = vpop.f32.mrb[0].mxu0
      %v2298 = vpop.f32.mrb[0].mxu0
      %2299 = vdwg.mxu0
      %v2300 = vmax.f32 %v2279, 0.0
      %v2301 = vmax.f32 %v2282, 0.0
      %v2302 = vmax.f32 %v2287, 0.0
      %v2303 = vmax.f32 %v2290, 0.0
      %v2304 = vmax.f32 %v2295, 0.0
      %v2305 = vmin.f32 %v2279, 0.0
      %v2306 = vmin.f32 %v2282, 0.0
      %v2307 = vmin.f32 %v2287, 0.0
      %v2308 = vmin.f32 %v2290, 0.0
      %v2309 = vmin.f32 %v2295, 0.0
      %v2310 = vmul.f32 %v1138, %v2305
      %v2311 = vmul.f32 %v1138, %v2306
      %v2312 = vmul.f32 %v1138, %v2307
      %v2313 = vmul.f32 %v1138, %v2308
      %v2314 = vmul.f32 %v1138, %v2309
      %v2315 = vadd.f32 %v2300, %v2310
      %v2316 = vadd.f32 %v2301, %v2311
      %v2317 = vadd.f32 %v2302, %v2312
      %v2318 = vadd.f32 %v2303, %v2313
      %v2319 = vadd.f32 %v2304, %v2314
      %v2320 = vmul.f32 %v2315, %v1153
      %v2321 = vmul.f32 %v2316, %v1153
      %v2322 = vmul.f32 %v2317, %v1153
      %v2323 = vmul.f32 %v2318, %v1153
      %v2324 = vmul.f32 %v2319, %v1153
      %v2325 = vadd.f32 %v2320, %v1164
      %v2326 = vadd.f32 %v2321, %v1164
      %v2327 = vadd.f32 %v2322, %v1164
      %v2328 = vadd.f32 %v2323, %v1164
      %v2329 = vadd.f32 %v2324, %v1164
      %v2330 = vmax.f32 %v1942, %v2325
      %v2331 = vmax.f32 %v1943, %v2326
      %v2332 = vmax.f32 %v1944, %v2327
      %v2333 = vmax.f32 %v1945, %v2328
      %v2334 = vmax.f32 %v1946, %v2329
      %v2335 = vpack.c.bf16 %v2331, %v2330
      %v2336 = vpack.c.bf16 %v2333, %v2332
      %v2337 = vpack.c.bf16 %v2334, %v2334
      %v2341 = vunpack.c.l.b16 %v2335
      %v2342 = vunpack.c.h.b16 %v2335
      %v2343 = vunpack.c.l.b16 %v2336
      %v2344 = vunpack.c.h.b16 %v2336
      %v2345 = vunpack.c.l.b16 %v2337
      %v2346 = vpack.c.b16 %v2341, %v2341
      %v2347 = vpack.c.b16 %v2342, %v2342
      %v2348 = vpack.c.b16 %v2343, %v2343
      %v2349 = vpack.c.b16 %v2344, %v2344
      %v2350 = vpack.c.b16 %v2345, %v2345
      %vm2356 = vcmask 519168
      %2357 = vst.msk [vmem:[%s252] sm:$0xf] %vm2356, %v2346
      %2358 = vst.msk [vmem:[%s252 + $0x4] sm:$0xf] %vm2356, %v2347
      %2359 = vst.msk [vmem:[%s252 + $0x8] sm:$0xf] %vm2356, %v2348
      %2360 = vst.msk [vmem:[%s252 + $0xc] sm:$0xf] %vm2356, %v2349
      %vm2361 = vcmask 517120
      %2362 = vst.msk [vmem:[%s252 + $0x10] sm:$0x3] %vm2361, %v2350
      %p2363 = scmp.lt.s32.totalorder %s18, 1
      %s2364 = scalar_select %p2363, %s18, 1
      %s2365 = smul.addr %s2364, 5
      %s2366 = smul.addr %s2365, 4
      %s2367 = scalar_lea.vmem %s6, %s2366
      // Predicated region
      $region45: #{fenet1_forward.4} parent=43 // pred_check
        %p2368 = pneg %p167
      $region46: #{fenet1_forward.4} parent=43 // pred_check_branch
        %2370 = sbr.rel (%p2368) target = $region48
      $region47: #{fenet1_forward.4} parent=43 // pred_region
        _
      $region48: #{fenet1_forward.4} parent=43 // pred_fallthru
        _
    $region44: #{fenet1_forward.4} parent=5 // pred_fallthru
      _
    %p2371 = scmp.le.s32.totalorder 2, %s13
    // Predicated region
    $region49: #{fenet1_forward.4} parent=5 // pred_check
      %p2372 = pneg %p2371
    $region50: #{fenet1_forward.4} parent=5 // pred_check_branch
      %2374 = sbr.rel (%p2372) target = $region52
    $region51: #{fenet1_forward.4} parent=5 // pred_region
      %s2375 = ssub.s32 %s13, 2
      // Predicated region
      $region53: #{fenet1_forward.4} parent=51 // pred_check
        %p2376 = pneg %p173
      $region54: #{fenet1_forward.4} parent=51 // pred_check_branch
        %2378 = sbr.rel (%p2376) target = $region56
      $region55: #{fenet1_forward.4} parent=51 // pred_region
        %p2379 = scmp.lt.s32.totalorder %s19, 1
        %s2380 = scalar_select %p2379, %s19, 1
        %s2381 = smul.addr %s2380, 5
        %s2382 = smul.addr %s2381, 4
        %s2383 = scalar_lea.vmem %s6, %s2382
      $region56: #{fenet1_forward.4} parent=51 // pred_fallthru
        _
    $region52: #{fenet1_forward.4} parent=5 // pred_fallthru
      _
  $region6: #{fenet1_forward.4} parent=0 // loop_footer
    %s17 = sadd.s32 1, %s13
  $region7: #{fenet1_forward.4} parent=0 // loop_footer_branch
    %12 = sbr.rel target = $region3
  $region8: #{fenet1_forward.4} parent=0 // loop_exit
    _

// kernel: fenet1_forward.5
$region0: #{fenet1_forward.5}
  #allocation0 [shape = 'u32[]', space=smem, size = 0x4, offset = 0x4, fixed_abs, tag = 'smem constant byte address 0x4 - core index']
  #allocation1 [shape = 'u32[144,128]{1,0:T(1,128)}', space=vmem, size = 0x12000, scoped, tag = 'internal scratch']
  %s0 = inlined_call_operand.vmem [shape: bf16[2,2304], index: 0, kind: input, shape index: {}]
  %s1 = inlined_call_operand.vmem [shape: bf16[2304,128], index: 1, kind: input, shape index: {}]
  %s2 = inlined_call_operand.vmem [shape: f32[1,128], index: 2, kind: input, shape index: {}]
  %s3 = inlined_call_operand.hbm [shape: f32[2,128], index: 3, kind: output, shape index: {}]
  %s4 = sld [smem:[#allocation0]]
  $region22: #{fenet1_forward.5} parent=0
    _
  %s6 = ssub.s32 1, %s4
  %s7 = scalar_select 0, %s6, %s4
  $region1: #{fenet1_forward.5} parent=0
    #allocation2 [shape = 'u8[1024]{0}', space=vmem, size = 0x400, scoped, tag = 'output window, operand 0, single buffered']
    #allocation3 [shape = 's32[1]{0}', space=sflag, size = 0x4, scoped, tag = 'scoped memory for fenet1_forward.5']
    %8 = vsyncpa [#allocation3], 0
    // Predicated region
    $region2: #{fenet1_forward.5} parent=1 // pred_check
      _
    $region3: #{fenet1_forward.5} parent=1 // pred_check_branch
      %10 = sbr.rel (0) target = $region5
    $region4: #{fenet1_forward.5} parent=1 // pred_region
      _
    $region5: #{fenet1_forward.5} parent=1 // pred_fallthru
      _
    // Predicated region
    $region6: #{fenet1_forward.5} parent=1 // pred_check
      _
    $region7: #{fenet1_forward.5} parent=1 // pred_check_branch
      %12 = sbr.rel (0) target = $region9
    $region8: #{fenet1_forward.5} parent=1 // pred_region
      _
    $region9: #{fenet1_forward.5} parent=1 // pred_fallthru
      _
    // Predicated region
    $region10: #{fenet1_forward.5} parent=1 // pred_check
      _
    $region11: #{fenet1_forward.5} parent=1 // pred_check_branch
      %14 = sbr.rel (0) target = $region13
    $region12: #{fenet1_forward.5} parent=1 // pred_region
      _
    $region13: #{fenet1_forward.5} parent=1 // pred_fallthru
      _
    %v16 = vld [vmem:[%s0] sm:$0xff]
    %v17 = vld [vmem:[%s0 + $0x8] sm:$0xff]
    %v18 = vld [vmem:[%s0 + $0x10] sm:$0x3]
    %v19 = vld [vmem:[%s1] sm:$0xf]
    %v20 = vld [vmem:[%s1 + $0x4] sm:$0xf]
    %v21 = vld [vmem:[%s1 + $0x8] sm:$0xf]
    %v22 = vld [vmem:[%s1 + $0xc] sm:$0xf]
    %v23 = vld [vmem:[%s1 + $0x10] sm:$0xf]
    %v24 = vld [vmem:[%s1 + $0x14] sm:$0xf]
    %v25 = vld [vmem:[%s1 + $0x18] sm:$0xf]
    %v26 = vld [vmem:[%s1 + $0x1c] sm:$0xf]
    %v27 = vld [vmem:[%s1 + $0x20] sm:$0xf]
    %v28 = vld [vmem:[%s1 + $0x24] sm:$0xf]
    %v29 = vld [vmem:[%s1 + $0x28] sm:$0xf]
    %v30 = vld [vmem:[%s1 + $0x2c] sm:$0xf]
    %v31 = vld [vmem:[%s1 + $0x30] sm:$0xf]
    %v32 = vld [vmem:[%s1 + $0x34] sm:$0xf]
    %v33 = vld [vmem:[%s1 + $0x38] sm:$0xf]
    %v34 = vld [vmem:[%s1 + $0x3c] sm:$0xf]
    %v35 = vld [vmem:[%s1 + $0x40] sm:$0xf]
    %v36 = vld [vmem:[%s1 + $0x44] sm:$0xf]
    %v37 = vld [vmem:[%s1 + $0x48] sm:$0xf]
    %v38 = vld [vmem:[%s1 + $0x4c] sm:$0xf]
    %v39 = vld [vmem:[%s1 + $0x50] sm:$0xf]
    %v40 = vld [vmem:[%s1 + $0x54] sm:$0xf]
    %v41 = vld [vmem:[%s1 + $0x58] sm:$0xf]
    %v42 = vld [vmem:[%s1 + $0x5c] sm:$0xf]
    %v43 = vld [vmem:[%s1 + $0x60] sm:$0xf]
    %v44 = vld [vmem:[%s1 + $0x64] sm:$0xf]
    %v45 = vld [vmem:[%s1 + $0x68] sm:$0xf]
    %v46 = vld [vmem:[%s1 + $0x6c] sm:$0xf]
    %v47 = vld [vmem:[%s1 + $0x70] sm:$0xf]
    %v48 = vld [vmem:[%s1 + $0x74] sm:$0xf]
    %v49 = vld [vmem:[%s1 + $0x78] sm:$0xf]
    %v50 = vld [vmem:[%s1 + $0x7c] sm:$0xf]
    %v51 = vld [vmem:[%s1 + $0x80] sm:$0xf]
    %v52 = vld [vmem:[%s1 + $0x84] sm:$0xf]
    %v53 = vld [vmem:[%s1 + $0x88] sm:$0xf]
    %v54 = vld [vmem:[%s1 + $0x8c] sm:$0xf]
    %v55 = vld [vmem:[%s1 + $0x90] sm:$0xf]
    %v56 = vld [vmem:[%s1 + $0x94] sm:$0xf]
    %v57 = vld [vmem:[%s1 + $0x98] sm:$0xf]
    %v58 = vld [vmem:[%s1 + $0x9c] sm:$0xf]
    %v59 = vld [vmem:[%s1 + $0xa0] sm:$0xf]
    %v60 = vld [vmem:[%s1 + $0xa4] sm:$0xf]
    %v61 = vld [vmem:[%s1 + $0xa8] sm:$0xf]
    %v62 = vld [vmem:[%s1 + $0xac] sm:$0xf]
    %v63 = vld [vmem:[%s1 + $0xb0] sm:$0xf]
    %v64 = vld [vmem:[%s1 + $0xb4] sm:$0xf]
    %v65 = vld [vmem:[%s1 + $0xb8] sm:$0xf]
    %v66 = vld [vmem:[%s1 + $0xbc] sm:$0xf]
    %v67 = vld [vmem:[%s1 + $0xc0] sm:$0xf]
    %v68 = vld [vmem:[%s1 + $0xc4] sm:$0xf]
    %v69 = vld [vmem:[%s1 + $0xc8] sm:$0xf]
    %v70 = vld [vmem:[%s1 + $0xcc] sm:$0xf]
    %v71 = vld [vmem:[%s1 + $0xd0] sm:$0xf]
    %v72 = vld [vmem:[%s1 + $0xd4] sm:$0xf]
    %v73 = vld [vmem:[%s1 + $0xd8] sm:$0xf]
    %v74 = vld [vmem:[%s1 + $0xdc] sm:$0xf]
    %v75 = vld [vmem:[%s1 + $0xe0] sm:$0xf]
    %v76 = vld [vmem:[%s1 + $0xe4] sm:$0xf]
    %v77 = vld [vmem:[%s1 + $0xe8] sm:$0xf]
    %v78 = vld [vmem:[%s1 + $0xec] sm:$0xf]
    %v79 = vld [vmem:[%s1 + $0xf0] sm:$0xf]
    %v80 = vld [vmem:[%s1 + $0xf4] sm:$0xf]
    %v81 = vld [vmem:[%s1 + $0xf8] sm:$0xf]
    %v82 = vld [vmem:[%s1 + $0xfc] sm:$0xf]
    %v83 = vld [vmem:[%s1 + $0x100] sm:$0xf]
    %v84 = vld [vmem:[%s1 + $0x104] sm:$0xf]
    %v85 = vld [vmem:[%s1 + $0x108] sm:$0xf]
    %v86 = vld [vmem:[%s1 + $0x10c] sm:$0xf]
    %v87 = vld [vmem:[%s1 + $0x110] sm:$0xf]
    %v88 = vld [vmem:[%s1 + $0x114] sm:$0xf]
    %v89 = vld [vmem:[%s1 + $0x118] sm:$0xf]
    %v90 = vld [vmem:[%s1 + $0x11c] sm:$0xf]
    %v91 = vld [vmem:[%s1 + $0x120] sm:$0xf]
    %v92 = vld [vmem:[%s1 + $0x124] sm:$0xf]
    %v93 = vld [vmem:[%s1 + $0x128] sm:$0xf]
    %v94 = vld [vmem:[%s1 + $0x12c] sm:$0xf]
    %v95 = vld [vmem:[%s1 + $0x130] sm:$0xf]
    %v96 = vld [vmem:[%s1 + $0x134] sm:$0xf]
    %v97 = vld [vmem:[%s1 + $0x138] sm:$0xf]
    %v98 = vld [vmem:[%s1 + $0x13c] sm:$0xf]
    %v99 = vld [vmem:[%s1 + $0x140] sm:$0xf]
    %v100 = vld [vmem:[%s1 + $0x144] sm:$0xf]
    %v101 = vld [vmem:[%s1 + $0x148] sm:$0xf]
    %v102 = vld [vmem:[%s1 + $0x14c] sm:$0xf]
    %v103 = vld [vmem:[%s1 + $0x150] sm:$0xf]
    %v104 = vld [vmem:[%s1 + $0x154] sm:$0xf]
    %v105 = vld [vmem:[%s1 + $0x158] sm:$0xf]
    %v106 = vld [vmem:[%s1 + $0x15c] sm:$0xf]
    %v107 = vld [vmem:[%s1 + $0x160] sm:$0xf]
    %v108 = vld [vmem:[%s1 + $0x164] sm:$0xf]
    %v109 = vld [vmem:[%s1 + $0x168] sm:$0xf]
    %v110 = vld [vmem:[%s1 + $0x16c] sm:$0xf]
    %v111 = vld [vmem:[%s1 + $0x170] sm:$0xf]
    %v112 = vld [vmem:[%s1 + $0x174] sm:$0xf]
    %v113 = vld [vmem:[%s1 + $0x178] sm:$0xf]
    %v114 = vld [vmem:[%s1 + $0x17c] sm:$0xf]
    %v115 = vld [vmem:[%s1 + $0x180] sm:$0xf]
    %v116 = vld [vmem:[%s1 + $0x184] sm:$0xf]
    %v117 = vld [vmem:[%s1 + $0x188] sm:$0xf]
    %v118 = vld [vmem:[%s1 + $0x18c] sm:$0xf]
    %v119 = vld [vmem:[%s1 + $0x190] sm:$0xf]
    %v120 = vld [vmem:[%s1 + $0x194] sm:$0xf]
    %v121 = vld [vmem:[%s1 + $0x198] sm:$0xf]
    %v122 = vld [vmem:[%s1 + $0x19c] sm:$0xf]
    %v123 = vld [vmem:[%s1 + $0x1a0] sm:$0xf]
    %v124 = vld [vmem:[%s1 + $0x1a4] sm:$0xf]
    %v125 = vld [vmem:[%s1 + $0x1a8] sm:$0xf]
    %v126 = vld [vmem:[%s1 + $0x1ac] sm:$0xf]
    %v127 = vld [vmem:[%s1 + $0x1b0] sm:$0xf]
    %v128 = vld [vmem:[%s1 + $0x1b4] sm:$0xf]
    %v129 = vld [vmem:[%s1 + $0x1b8] sm:$0xf]
    %v130 = vld [vmem:[%s1 + $0x1bc] sm:$0xf]
    %v131 = vld [vmem:[%s1 + $0x1c0] sm:$0xf]
    %v132 = vld [vmem:[%s1 + $0x1c4] sm:$0xf]
    %v133 = vld [vmem:[%s1 + $0x1c8] sm:$0xf]
    %v134 = vld [vmem:[%s1 + $0x1cc] sm:$0xf]
    %v135 = vld [vmem:[%s1 + $0x1d0] sm:$0xf]
    %v136 = vld [vmem:[%s1 + $0x1d4] sm:$0xf]
    %v137 = vld [vmem:[%s1 + $0x1d8] sm:$0xf]
    %v138 = vld [vmem:[%s1 + $0x1dc] sm:$0xf]
    %v139 = vld [vmem:[%s1 + $0x1e0] sm:$0xf]
    %v140 = vld [vmem:[%s1 + $0x1e4] sm:$0xf]
    %v141 = vld [vmem:[%s1 + $0x1e8] sm:$0xf]
    %v142 = vld [vmem:[%s1 + $0x1ec] sm:$0xf]
    %v143 = vld [vmem:[%s1 + $0x1f0] sm:$0xf]
    %v144 = vld [vmem:[%s1 + $0x1f4] sm:$0xf]
    %v145 = vld [vmem:[%s1 + $0x1f8] sm:$0xf]
    %v146 = vld [vmem:[%s1 + $0x1fc] sm:$0xf]
    %v147 = vld [vmem:[%s1 + $0x200] sm:$0xf]
    %v148 = vld [vmem:[%s1 + $0x204] sm:$0xf]
    %v149 = vld [vmem:[%s1 + $0x208] sm:$0xf]
    %v150 = vld [vmem:[%s1 + $0x20c] sm:$0xf]
    %v151 = vld [vmem:[%s1 + $0x210] sm:$0xf]
    %v152 = vld [vmem:[%s1 + $0x214] sm:$0xf]
    %v153 = vld [vmem:[%s1 + $0x218] sm:$0xf]
    %v154 = vld [vmem:[%s1 + $0x21c] sm:$0xf]
    %v155 = vld [vmem:[%s1 + $0x220] sm:$0xf]
    %v156 = vld [vmem:[%s1 + $0x224] sm:$0xf]
    %v157 = vld [vmem:[%s1 + $0x228] sm:$0xf]
    %v158 = vld [vmem:[%s1 + $0x22c] sm:$0xf]
    %v159 = vld [vmem:[%s1 + $0x230] sm:$0xf]
    %v160 = vld [vmem:[%s1 + $0x234] sm:$0xf]
    %v161 = vld [vmem:[%s1 + $0x238] sm:$0xf]
    %v162 = vld [vmem:[%s1 + $0x23c] sm:$0xf]
    %v163 = vld [vmem:[%s1 + $0x240] sm:$0xf]
    %v164 = vld [vmem:[%s1 + $0x244] sm:$0xf]
    %v165 = vld [vmem:[%s1 + $0x248] sm:$0xf]
    %v166 = vld [vmem:[%s1 + $0x24c] sm:$0xf]
    %v167 = vld [vmem:[%s1 + $0x250] sm:$0xf]
    %v168 = vld [vmem:[%s1 + $0x254] sm:$0xf]
    %v169 = vld [vmem:[%s1 + $0x258] sm:$0xf]
    %v170 = vld [vmem:[%s1 + $0x25c] sm:$0xf]
    %v171 = vld [vmem:[%s1 + $0x260] sm:$0xf]
    %v172 = vld [vmem:[%s1 + $0x264] sm:$0xf]
    %v173 = vld [vmem:[%s1 + $0x268] sm:$0xf]
    %v174 = vld [vmem:[%s1 + $0x26c] sm:$0xf]
    %v175 = vld [vmem:[%s1 + $0x270] sm:$0xf]
    %v176 = vld [vmem:[%s1 + $0x274] sm:$0xf]
    %v177 = vld [vmem:[%s1 + $0x278] sm:$0xf]
    %v178 = vld [vmem:[%s1 + $0x27c] sm:$0xf]
    %v179 = vld [vmem:[%s1 + $0x280] sm:$0xf]
    %v180 = vld [vmem:[%s1 + $0x284] sm:$0xf]
    %v181 = vld [vmem:[%s1 + $0x288] sm:$0xf]
    %v182 = vld [vmem:[%s1 + $0x28c] sm:$0xf]
    %v183 = vld [vmem:[%s1 + $0x290] sm:$0xf]
    %v184 = vld [vmem:[%s1 + $0x294] sm:$0xf]
    %v185 = vld [vmem:[%s1 + $0x298] sm:$0xf]
    %v186 = vld [vmem:[%s1 + $0x29c] sm:$0xf]
    %v187 = vld [vmem:[%s1 + $0x2a0] sm:$0xf]
    %v188 = vld [vmem:[%s1 + $0x2a4] sm:$0xf]
    %v189 = vld [vmem:[%s1 + $0x2a8] sm:$0xf]
    %v190 = vld [vmem:[%s1 + $0x2ac] sm:$0xf]
    %v191 = vld [vmem:[%s1 + $0x2b0] sm:$0xf]
    %v192 = vld [vmem:[%s1 + $0x2b4] sm:$0xf]
    %v193 = vld [vmem:[%s1 + $0x2b8] sm:$0xf]
    %v194 = vld [vmem:[%s1 + $0x2bc] sm:$0xf]
    %v195 = vld [vmem:[%s1 + $0x2c0] sm:$0xf]
    %v196 = vld [vmem:[%s1 + $0x2c4] sm:$0xf]
    %v197 = vld [vmem:[%s1 + $0x2c8] sm:$0xf]
    %v198 = vld [vmem:[%s1 + $0x2cc] sm:$0xf]
    %v199 = vld [vmem:[%s1 + $0x2d0] sm:$0xf]
    %v200 = vld [vmem:[%s1 + $0x2d4] sm:$0xf]
    %v201 = vld [vmem:[%s1 + $0x2d8] sm:$0xf]
    %v202 = vld [vmem:[%s1 + $0x2dc] sm:$0xf]
    %v203 = vld [vmem:[%s1 + $0x2e0] sm:$0xf]
    %v204 = vld [vmem:[%s1 + $0x2e4] sm:$0xf]
    %v205 = vld [vmem:[%s1 + $0x2e8] sm:$0xf]
    %v206 = vld [vmem:[%s1 + $0x2ec] sm:$0xf]
    %v207 = vld [vmem:[%s1 + $0x2f0] sm:$0xf]
    %v208 = vld [vmem:[%s1 + $0x2f4] sm:$0xf]
    %v209 = vld [vmem:[%s1 + $0x2f8] sm:$0xf]
    %v210 = vld [vmem:[%s1 + $0x2fc] sm:$0xf]
    %v211 = vld [vmem:[%s1 + $0x300] sm:$0xf]
    %v212 = vld [vmem:[%s1 + $0x304] sm:$0xf]
    %v213 = vld [vmem:[%s1 + $0x308] sm:$0xf]
    %v214 = vld [vmem:[%s1 + $0x30c] sm:$0xf]
    %v215 = vld [vmem:[%s1 + $0x310] sm:$0xf]
    %v216 = vld [vmem:[%s1 + $0x314] sm:$0xf]
    %v217 = vld [vmem:[%s1 + $0x318] sm:$0xf]
    %v218 = vld [vmem:[%s1 + $0x31c] sm:$0xf]
    %v219 = vld [vmem:[%s1 + $0x320] sm:$0xf]
    %v220 = vld [vmem:[%s1 + $0x324] sm:$0xf]
    %v221 = vld [vmem:[%s1 + $0x328] sm:$0xf]
    %v222 = vld [vmem:[%s1 + $0x32c] sm:$0xf]
    %v223 = vld [vmem:[%s1 + $0x330] sm:$0xf]
    %v224 = vld [vmem:[%s1 + $0x334] sm:$0xf]
    %v225 = vld [vmem:[%s1 + $0x338] sm:$0xf]
    %v226 = vld [vmem:[%s1 + $0x33c] sm:$0xf]
    %v227 = vld [vmem:[%s1 + $0x340] sm:$0xf]
    %v228 = vld [vmem:[%s1 + $0x344] sm:$0xf]
    %v229 = vld [vmem:[%s1 + $0x348] sm:$0xf]
    %v230 = vld [vmem:[%s1 + $0x34c] sm:$0xf]
    %v231 = vld [vmem:[%s1 + $0x350] sm:$0xf]
    %v232 = vld [vmem:[%s1 + $0x354] sm:$0xf]
    %v233 = vld [vmem:[%s1 + $0x358] sm:$0xf]
    %v234 = vld [vmem:[%s1 + $0x35c] sm:$0xf]
    %v235 = vld [vmem:[%s1 + $0x360] sm:$0xf]
    %v236 = vld [vmem:[%s1 + $0x364] sm:$0xf]
    %v237 = vld [vmem:[%s1 + $0x368] sm:$0xf]
    %v238 = vld [vmem:[%s1 + $0x36c] sm:$0xf]
    %v239 = vld [vmem:[%s1 + $0x370] sm:$0xf]
    %v240 = vld [vmem:[%s1 + $0x374] sm:$0xf]
    %v241 = vld [vmem:[%s1 + $0x378] sm:$0xf]
    %v242 = vld [vmem:[%s1 + $0x37c] sm:$0xf]
    %v243 = vld [vmem:[%s1 + $0x380] sm:$0xf]
    %v244 = vld [vmem:[%s1 + $0x384] sm:$0xf]
    %v245 = vld [vmem:[%s1 + $0x388] sm:$0xf]
    %v246 = vld [vmem:[%s1 + $0x38c] sm:$0xf]
    %v247 = vld [vmem:[%s1 + $0x390] sm:$0xf]
    %v248 = vld [vmem:[%s1 + $0x394] sm:$0xf]
    %v249 = vld [vmem:[%s1 + $0x398] sm:$0xf]
    %v250 = vld [vmem:[%s1 + $0x39c] sm:$0xf]
    %v251 = vld [vmem:[%s1 + $0x3a0] sm:$0xf]
    %v252 = vld [vmem:[%s1 + $0x3a4] sm:$0xf]
    %v253 = vld [vmem:[%s1 + $0x3a8] sm:$0xf]
    %v254 = vld [vmem:[%s1 + $0x3ac] sm:$0xf]
    %v255 = vld [vmem:[%s1 + $0x3b0] sm:$0xf]
    %v256 = vld [vmem:[%s1 + $0x3b4] sm:$0xf]
    %v257 = vld [vmem:[%s1 + $0x3b8] sm:$0xf]
    %v258 = vld [vmem:[%s1 + $0x3bc] sm:$0xf]
    %v259 = vld [vmem:[%s1 + $0x3c0] sm:$0xf]
    %v260 = vld [vmem:[%s1 + $0x3c4] sm:$0xf]
    %v261 = vld [vmem:[%s1 + $0x3c8] sm:$0xf]
    %v262 = vld [vmem:[%s1 + $0x3cc] sm:$0xf]
    %v263 = vld [vmem:[%s1 + $0x3d0] sm:$0xf]
    %v264 = vld [vmem:[%s1 + $0x3d4] sm:$0xf]
    %v265 = vld [vmem:[%s1 + $0x3d8] sm:$0xf]
    %v266 = vld [vmem:[%s1 + $0x3dc] sm:$0xf]
    %v267 = vld [vmem:[%s1 + $0x3e0] sm:$0xf]
    %v268 = vld [vmem:[%s1 + $0x3e4] sm:$0xf]
    %v269 = vld [vmem:[%s1 + $0x3e8] sm:$0xf]
    %v270 = vld [vmem:[%s1 + $0x3ec] sm:$0xf]
    %v271 = vld [vmem:[%s1 + $0x3f0] sm:$0xf]
    %v272 = vld [vmem:[%s1 + $0x3f4] sm:$0xf]
    %v273 = vld [vmem:[%s1 + $0x3f8] sm:$0xf]
    %v274 = vld [vmem:[%s1 + $0x3fc] sm:$0xf]
    %v275 = vld [vmem:[%s1 + $0x400] sm:$0xf]
    %v276 = vld [vmem:[%s1 + $0x404] sm:$0xf]
    %v277 = vld [vmem:[%s1 + $0x408] sm:$0xf]
    %v278 = vld [vmem:[%s1 + $0x40c] sm:$0xf]
    %v279 = vld [vmem:[%s1 + $0x410] sm:$0xf]
    %v280 = vld [vmem:[%s1 + $0x414] sm:$0xf]
    %v281 = vld [vmem:[%s1 + $0x418] sm:$0xf]
    %v282 = vld [vmem:[%s1 + $0x41c] sm:$0xf]
    %v283 = vld [vmem:[%s1 + $0x420] sm:$0xf]
    %v284 = vld [vmem:[%s1 + $0x424] sm:$0xf]
    %v285 = vld [vmem:[%s1 + $0x428] sm:$0xf]
    %v286 = vld [vmem:[%s1 + $0x42c] sm:$0xf]
    %v287 = vld [vmem:[%s1 + $0x430] sm:$0xf]
    %v288 = vld [vmem:[%s1 + $0x434] sm:$0xf]
    %v289 = vld [vmem:[%s1 + $0x438] sm:$0xf]
    %v290 = vld [vmem:[%s1 + $0x43c] sm:$0xf]
    %v291 = vld [vmem:[%s1 + $0x440] sm:$0xf]
    %v292 = vld [vmem:[%s1 + $0x444] sm:$0xf]
    %v293 = vld [vmem:[%s1 + $0x448] sm:$0xf]
    %v294 = vld [vmem:[%s1 + $0x44c] sm:$0xf]
    %v295 = vld [vmem:[%s1 + $0x450] sm:$0xf]
    %v296 = vld [vmem:[%s1 + $0x454] sm:$0xf]
    %v297 = vld [vmem:[%s1 + $0x458] sm:$0xf]
    %v298 = vld [vmem:[%s1 + $0x45c] sm:$0xf]
    %v299 = vld [vmem:[%s1 + $0x460] sm:$0xf]
    %v300 = vld [vmem:[%s1 + $0x464] sm:$0xf]
    %v301 = vld [vmem:[%s1 + $0x468] sm:$0xf]
    %v302 = vld [vmem:[%s1 + $0x46c] sm:$0xf]
    %v303 = vld [vmem:[%s1 + $0x470] sm:$0xf]
    %v304 = vld [vmem:[%s1 + $0x474] sm:$0xf]
    %v305 = vld [vmem:[%s1 + $0x478] sm:$0xf]
    %v306 = vld [vmem:[%s1 + $0x47c] sm:$0xf]
    %v307 = vld [vmem:[%s2] sm:$0x1]
    %v309 = vlaneseq
    %v310 = vshrl.u32 %v309, 7
    %v311 = vsub.s32 0, %v310
    %v312 = vrot.slane %v307, %v311
    %v317 = vcombine.high %v16, %v16
    %v319 = vunpack.c.l.s4 1966171168
    %v320 = vunpack.c.0.s8 %v319
    %v321 = vlaneseq
    %v322 = vshrl.u32 %v321, 7
    %v323 = vsub.s32 %v320, %v322
    %v324 = vrot.slane %v16, %v323
    %v326 = vunpack.c.l.s4 1966171168
    %v327 = vunpack.c.0.s8 %v326
    %v328 = vlaneseq
    %v329 = vshrl.u32 %v328, 7
    %v330 = vsub.s32 %v327, %v329
    %v331 = vrot.slane %v317, %v330
    %v332 = vcombine.high %v324, %v324
    %v333 = vcombine.high %v331, %v331
    %v335 = vunpack.c.l.s4 1966171168
    %v336 = vunpack.c.0.s8 %v335
    %v337 = vlaneseq
    %v338 = vshrl.u32 %v337, 7
    %v339 = vsub.s32 %v336, %v338
    %v340 = vrot.slane %v324, %v339
    %v342 = vunpack.c.l.s4 1966171168
    %v343 = vunpack.c.0.s8 %v342
    %v344 = vlaneseq
    %v345 = vshrl.u32 %v344, 7
    %v346 = vsub.s32 %v343, %v345
    %v347 = vrot.slane %v331, %v346
    %v349 = vunpack.c.l.s4 1966171168
    %v350 = vunpack.c.0.s8 %v349
    %v351 = vlaneseq
    %v352 = vshrl.u32 %v351, 7
    %v353 = vsub.s32 %v350, %v352
    %v354 = vrot.slane %v332, %v353
    %v356 = vunpack.c.l.s4 1966171168
    %v357 = vunpack.c.0.s8 %v356
    %v358 = vlaneseq
    %v359 = vshrl.u32 %v358, 7
    %v360 = vsub.s32 %v357, %v359
    %v361 = vrot.slane %v333, %v360
    %v362 = vcombine.high %v340, %v340
    %v363 = vcombine.high %v347, %v347
    %v364 = vcombine.high %v354, %v354
    %v365 = vcombine.high %v361, %v361
    %v366 = vcombine.high %v17, %v17
    %v368 = vunpack.c.l.s4 1966171168
    %v369 = vunpack.c.0.s8 %v368
    %v370 = vlaneseq
    %v371 = vshrl.u32 %v370, 7
    %v372 = vsub.s32 %v369, %v371
    %v373 = vrot.slane %v17, %v372
    %v375 = vunpack.c.l.s4 1966171168
    %v376 = vunpack.c.0.s8 %v375
    %v377 = vlaneseq
    %v378 = vshrl.u32 %v377, 7
    %v379 = vsub.s32 %v376, %v378
    %v380 = vrot.slane %v366, %v379
    %v381 = vcombine.high %v373, %v373
    %v382 = vcombine.high %v380, %v380
    %v384 = vunpack.c.l.s4 1966171168
    %v385 = vunpack.c.0.s8 %v384
    %v386 = vlaneseq
    %v387 = vshrl.u32 %v386, 7
    %v388 = vsub.s32 %v385, %v387
    %v389 = vrot.slane %v373, %v388
    %v391 = vunpack.c.l.s4 1966171168
    %v392 = vunpack.c.0.s8 %v391
    %v393 = vlaneseq
    %v394 = vshrl.u32 %v393, 7
    %v395 = vsub.s32 %v392, %v394
    %v396 = vrot.slane %v380, %v395
    %v398 = vunpack.c.l.s4 1966171168
    %v399 = vunpack.c.0.s8 %v398
    %v400 = vlaneseq
    %v401 = vshrl.u32 %v400, 7
    %v402 = vsub.s32 %v399, %v401
    %v403 = vrot.slane %v381, %v402
    %v405 = vunpack.c.l.s4 1966171168
    %v406 = vunpack.c.0.s8 %v405
    %v407 = vlaneseq
    %v408 = vshrl.u32 %v407, 7
    %v409 = vsub.s32 %v406, %v408
    %v410 = vrot.slane %v382, %v409
    %v411 = vcombine.high %v389, %v389
    %v412 = vcombine.high %v396, %v396
    %v413 = vcombine.high %v403, %v403
    %v414 = vcombine.high %v410, %v410
    %v416 = vunpack.c.l.s4 1966171168
    %v417 = vunpack.c.0.s8 %v416
    %v418 = vlaneseq
    %v419 = vshrl.u32 %v418, 7
    %v420 = vsub.s32 %v417, %v419
    %v421 = vrot.slane %v18, %v420
    %v422 = vcombine.high %v421, %v421
    %v424 = vunpack.c.l.s4 1966171168
    %v425 = vunpack.c.0.s8 %v424
    %v426 = vlaneseq
    %v427 = vshrl.u32 %v426, 7
    %v428 = vsub.s32 %v425, %v427
    %v429 = vrot.slane %v421, %v428
    %v431 = vunpack.c.l.s4 1966171168
    %v432 = vunpack.c.0.s8 %v431
    %v433 = vlaneseq
    %v434 = vshrl.u32 %v433, 7
    %v435 = vsub.s32 %v432, %v434
    %v436 = vrot.slane %v422, %v435
    %v743 = vunpack.c.l.b16 %v19
    %v744 = vunpack.c.l.b16 %v20
    %v745 = vunpack.c.l.b16 %v21
    %v746 = vunpack.c.l.b16 %v22
    %v747 = vunpack.c.l.b16 %v23
    %v748 = vunpack.c.l.b16 %v24
    %v749 = vunpack.c.l.b16 %v25
    %v750 = vunpack.c.l.b16 %v26
    %v751 = vunpack.c.l.b16 %v27
    %v752 = vunpack.c.l.b16 %v28
    %v753 = vunpack.c.l.b16 %v29
    %v754 = vunpack.c.l.b16 %v30
    %v755 = vunpack.c.l.b16 %v31
    %v756 = vunpack.c.l.b16 %v32
    %v757 = vunpack.c.l.b16 %v33
    %v758 = vunpack.c.l.b16 %v34
    %v759 = vunpack.c.l.b16 %v35
    %v760 = vunpack.c.l.b16 %v36
    %v761 = vunpack.c.l.b16 %v37
    %v762 = vunpack.c.l.b16 %v38
    %v763 = vunpack.c.l.b16 %v39
    %v764 = vunpack.c.l.b16 %v40
    %v765 = vunpack.c.l.b16 %v41
    %v766 = vunpack.c.l.b16 %v42
    %v767 = vunpack.c.l.b16 %v43
    %v768 = vunpack.c.l.b16 %v44
    %v769 = vunpack.c.l.b16 %v45
    %v770 = vunpack.c.l.b16 %v46
    %v771 = vunpack.c.l.b16 %v47
    %v772 = vunpack.c.l.b16 %v48
    %v773 = vunpack.c.l.b16 %v49
    %v774 = vunpack.c.l.b16 %v50
    %v775 = vunpack.c.l.b16 %v51
    %v776 = vunpack.c.l.b16 %v52
    %v777 = vunpack.c.l.b16 %v53
    %v778 = vunpack.c.l.b16 %v54
    %v779 = vunpack.c.l.b16 %v55
    %v780 = vunpack.c.l.b16 %v56
    %v781 = vunpack.c.l.b16 %v57
    %v782 = vunpack.c.l.b16 %v58
    %v783 = vunpack.c.l.b16 %v59
    %v784 = vunpack.c.l.b16 %v60
    %v785 = vunpack.c.l.b16 %v61
    %v786 = vunpack.c.l.b16 %v62
    %v787 = vunpack.c.l.b16 %v63
    %v788 = vunpack.c.l.b16 %v64
    %v789 = vunpack.c.l.b16 %v65
    %v790 = vunpack.c.l.b16 %v66
    %v791 = vunpack.c.l.b16 %v67
    %v792 = vunpack.c.l.b16 %v68
    %v793 = vunpack.c.l.b16 %v69
    %v794 = vunpack.c.l.b16 %v70
    %v795 = vunpack.c.l.b16 %v71
    %v796 = vunpack.c.l.b16 %v72
    %v797 = vunpack.c.l.b16 %v73
    %v798 = vunpack.c.l.b16 %v74
    %v799 = vunpack.c.l.b16 %v75
    %v800 = vunpack.c.l.b16 %v76
    %v801 = vunpack.c.l.b16 %v77
    %v802 = vunpack.c.l.b16 %v78
    %v803 = vunpack.c.l.b16 %v79
    %v804 = vunpack.c.l.b16 %v80
    %v805 = vunpack.c.l.b16 %v81
    %v806 = vunpack.c.l.b16 %v82
    %v807 = vunpack.c.l.b16 %v83
    %v808 = vunpack.c.l.b16 %v84
    %v809 = vunpack.c.l.b16 %v85
    %v810 = vunpack.c.l.b16 %v86
    %v811 = vunpack.c.l.b16 %v87
    %v812 = vunpack.c.l.b16 %v88
    %v813 = vunpack.c.l.b16 %v89
    %v814 = vunpack.c.l.b16 %v90
    %v815 = vunpack.c.l.b16 %v91
    %v816 = vunpack.c.l.b16 %v92
    %v817 = vunpack.c.l.b16 %v93
    %v818 = vunpack.c.l.b16 %v94
    %v819 = vunpack.c.l.b16 %v95
    %v820 = vunpack.c.l.b16 %v96
    %v821 = vunpack.c.l.b16 %v97
    %v822 = vunpack.c.l.b16 %v98
    %v823 = vunpack.c.l.b16 %v99
    %v824 = vunpack.c.l.b16 %v100
    %v825 = vunpack.c.l.b16 %v101
    %v826 = vunpack.c.l.b16 %v102
    %v827 = vunpack.c.l.b16 %v103
    %v828 = vunpack.c.l.b16 %v104
    %v829 = vunpack.c.l.b16 %v105
    %v830 = vunpack.c.l.b16 %v106
    %v831 = vunpack.c.l.b16 %v107
    %v832 = vunpack.c.l.b16 %v108
    %v833 = vunpack.c.l.b16 %v109
    %v834 = vunpack.c.l.b16 %v110
    %v835 = vunpack.c.l.b16 %v111
    %v836 = vunpack.c.l.b16 %v112
    %v837 = vunpack.c.l.b16 %v113
    %v838 = vunpack.c.l.b16 %v114
    %v839 = vunpack.c.l.b16 %v115
    %v840 = vunpack.c.l.b16 %v116
    %v841 = vunpack.c.l.b16 %v117
    %v842 = vunpack.c.l.b16 %v118
    %v843 = vunpack.c.l.b16 %v119
    %v844 = vunpack.c.l.b16 %v120
    %v845 = vunpack.c.l.b16 %v121
    %v846 = vunpack.c.l.b16 %v122
    %v847 = vunpack.c.l.b16 %v123
    %v848 = vunpack.c.l.b16 %v124
    %v849 = vunpack.c.l.b16 %v125
    %v850 = vunpack.c.l.b16 %v126
    %v851 = vunpack.c.l.b16 %v127
    %v852 = vunpack.c.l.b16 %v128
    %v853 = vunpack.c.l.b16 %v129
    %v854 = vunpack.c.l.b16 %v130
    %v855 = vunpack.c.l.b16 %v131
    %v856 = vunpack.c.l.b16 %v132
    %v857 = vunpack.c.l.b16 %v133
    %v858 = vunpack.c.l.b16 %v134
    %v859 = vunpack.c.l.b16 %v135
    %v860 = vunpack.c.l.b16 %v136
    %v861 = vunpack.c.l.b16 %v137
    %v862 = vunpack.c.l.b16 %v138
    %v863 = vunpack.c.l.b16 %v139
    %v864 = vunpack.c.l.b16 %v140
    %v865 = vunpack.c.l.b16 %v141
    %v866 = vunpack.c.l.b16 %v142
    %v867 = vunpack.c.l.b16 %v143
    %v868 = vunpack.c.l.b16 %v144
    %v869 = vunpack.c.l.b16 %v145
    %v870 = vunpack.c.l.b16 %v146
    %v871 = vunpack.c.l.b16 %v147
    %v872 = vunpack.c.l.b16 %v148
    %v873 = vunpack.c.l.b16 %v149
    %v874 = vunpack.c.l.b16 %v150
    %v875 = vunpack.c.l.b16 %v151
    %v876 = vunpack.c.l.b16 %v152
    %v877 = vunpack.c.l.b16 %v153
    %v878 = vunpack.c.l.b16 %v154
    %v879 = vunpack.c.l.b16 %v155
    %v880 = vunpack.c.l.b16 %v156
    %v881 = vunpack.c.l.b16 %v157
    %v882 = vunpack.c.l.b16 %v158
    %v883 = vunpack.c.l.b16 %v159
    %v884 = vunpack.c.l.b16 %v160
    %v885 = vunpack.c.l.b16 %v161
    %v886 = vunpack.c.l.b16 %v162
    %v887 = vunpack.c.l.b16 %v163
    %v888 = vunpack.c.l.b16 %v164
    %v889 = vunpack.c.l.b16 %v165
    %v890 = vunpack.c.l.b16 %v166
    %v891 = vunpack.c.l.b16 %v167
    %v892 = vunpack.c.l.b16 %v168
    %v893 = vunpack.c.l.b16 %v169
    %v894 = vunpack.c.l.b16 %v170
    %v895 = vunpack.c.l.b16 %v171
    %v896 = vunpack.c.l.b16 %v172
    %v897 = vunpack.c.l.b16 %v173
    %v898 = vunpack.c.l.b16 %v174
    %v899 = vunpack.c.l.b16 %v175
    %v900 = vunpack.c.l.b16 %v176
    %v901 = vunpack.c.l.b16 %v177
    %v902 = vunpack.c.l.b16 %v178
    %v903 = vunpack.c.l.b16 %v179
    %v904 = vunpack.c.l.b16 %v180
    %v905 = vunpack.c.l.b16 %v181
    %v906 = vunpack.c.l.b16 %v182
    %v907 = vunpack.c.l.b16 %v183
    %v908 = vunpack.c.l.b16 %v184
    %v909 = vunpack.c.l.b16 %v185
    %v910 = vunpack.c.l.b16 %v186
    %v911 = vunpack.c.l.b16 %v187
    %v912 = vunpack.c.l.b16 %v188
    %v913 = vunpack.c.l.b16 %v189
    %v914 = vunpack.c.l.b16 %v190
    %v915 = vunpack.c.l.b16 %v191
    %v916 = vunpack.c.l.b16 %v192
    %v917 = vunpack.c.l.b16 %v193
    %v918 = vunpack.c.l.b16 %v194
    %v919 = vunpack.c.l.b16 %v195
    %v920 = vunpack.c.l.b16 %v196
    %v921 = vunpack.c.l.b16 %v197
    %v922 = vunpack.c.l.b16 %v198
    %v923 = vunpack.c.l.b16 %v199
    %v924 = vunpack.c.l.b16 %v200
    %v925 = vunpack.c.l.b16 %v201
    %v926 = vunpack.c.l.b16 %v202
    %v927 = vunpack.c.l.b16 %v203
    %v928 = vunpack.c.l.b16 %v204
    %v929 = vunpack.c.l.b16 %v205
    %v930 = vunpack.c.l.b16 %v206
    %v931 = vunpack.c.l.b16 %v207
    %v932 = vunpack.c.l.b16 %v208
    %v933 = vunpack.c.l.b16 %v209
    %v934 = vunpack.c.l.b16 %v210
    %v935 = vunpack.c.l.b16 %v211
    %v936 = vunpack.c.l.b16 %v212
    %v937 = vunpack.c.l.b16 %v213
    %v938 = vunpack.c.l.b16 %v214
    %v939 = vunpack.c.l.b16 %v215
    %v940 = vunpack.c.l.b16 %v216
    %v941 = vunpack.c.l.b16 %v217
    %v942 = vunpack.c.l.b16 %v218
    %v943 = vunpack.c.l.b16 %v219
    %v944 = vunpack.c.l.b16 %v220
    %v945 = vunpack.c.l.b16 %v221
    %v946 = vunpack.c.l.b16 %v222
    %v947 = vunpack.c.l.b16 %v223
    %v948 = vunpack.c.l.b16 %v224
    %v949 = vunpack.c.l.b16 %v225
    %v950 = vunpack.c.l.b16 %v226
    %v951 = vunpack.c.l.b16 %v227
    %v952 = vunpack.c.l.b16 %v228
    %v953 = vunpack.c.l.b16 %v229
    %v954 = vunpack.c.l.b16 %v230
    %v955 = vunpack.c.l.b16 %v231
    %v956 = vunpack.c.l.b16 %v232
    %v957 = vunpack.c.l.b16 %v233
    %v958 = vunpack.c.l.b16 %v234
    %v959 = vunpack.c.l.b16 %v235
    %v960 = vunpack.c.l.b16 %v236
    %v961 = vunpack.c.l.b16 %v237
    %v962 = vunpack.c.l.b16 %v238
    %v963 = vunpack.c.l.b16 %v239
    %v964 = vunpack.c.l.b16 %v240
    %v965 = vunpack.c.l.b16 %v241
    %v966 = vunpack.c.l.b16 %v242
    %v967 = vunpack.c.l.b16 %v243
    %v968 = vunpack.c.l.b16 %v244
    %v969 = vunpack.c.l.b16 %v245
    %v970 = vunpack.c.l.b16 %v246
    %v971 = vunpack.c.l.b16 %v247
    %v972 = vunpack.c.l.b16 %v248
    %v973 = vunpack.c.l.b16 %v249
    %v974 = vunpack.c.l.b16 %v250
    %v975 = vunpack.c.l.b16 %v251
    %v976 = vunpack.c.l.b16 %v252
    %v977 = vunpack.c.l.b16 %v253
    %v978 = vunpack.c.l.b16 %v254
    %v979 = vunpack.c.l.b16 %v255
    %v980 = vunpack.c.l.b16 %v256
    %v981 = vunpack.c.l.b16 %v257
    %v982 = vunpack.c.l.b16 %v258
    %v983 = vunpack.c.l.b16 %v259
    %v984 = vunpack.c.l.b16 %v260
    %v985 = vunpack.c.l.b16 %v261
    %v986 = vunpack.c.l.b16 %v262
    %v987 = vunpack.c.l.b16 %v263
    %v988 = vunpack.c.l.b16 %v264
    %v989 = vunpack.c.l.b16 %v265
    %v990 = vunpack.c.l.b16 %v266
    %v991 = vunpack.c.l.b16 %v267
    %v992 = vunpack.c.l.b16 %v268
    %v993 = vunpack.c.l.b16 %v269
    %v994 = vunpack.c.l.b16 %v270
    %v995 = vunpack.c.l.b16 %v271
    %v996 = vunpack.c.l.b16 %v272
    %v997 = vunpack.c.l.b16 %v273
    %v998 = vunpack.c.l.b16 %v274
    %v999 = vunpack.c.l.b16 %v275
    %v1000 = vunpack.c.l.b16 %v276
    %v1001 = vunpack.c.l.b16 %v277
    %v1002 = vunpack.c.l.b16 %v278
    %v1003 = vunpack.c.l.b16 %v279
    %v1004 = vunpack.c.l.b16 %v280
    %v1005 = vunpack.c.l.b16 %v281
    %v1006 = vunpack.c.l.b16 %v282
    %v1007 = vunpack.c.l.b16 %v283
    %v1008 = vunpack.c.l.b16 %v284
    %v1009 = vunpack.c.l.b16 %v285
    %v1010 = vunpack.c.l.b16 %v286
    %v1011 = vunpack.c.l.b16 %v287
    %v1012 = vunpack.c.l.b16 %v288
    %v1013 = vunpack.c.l.b16 %v289
    %v1014 = vunpack.c.l.b16 %v290
    %v1015 = vunpack.c.l.b16 %v291
    %v1016 = vunpack.c.l.b16 %v292
    %v1017 = vunpack.c.l.b16 %v293
    %v1018 = vunpack.c.l.b16 %v294
    %v1019 = vunpack.c.l.b16 %v295
    %v1020 = vunpack.c.l.b16 %v296
    %v1021 = vunpack.c.l.b16 %v297
    %v1022 = vunpack.c.l.b16 %v298
    %v1023 = vunpack.c.l.b16 %v299
    %v1024 = vunpack.c.l.b16 %v300
    %v1025 = vunpack.c.l.b16 %v301
    %v1026 = vunpack.c.l.b16 %v302
    %v1027 = vunpack.c.l.b16 %v303
    %v1028 = vunpack.c.l.b16 %v304
    %v1029 = vunpack.c.l.b16 %v305
    %v1030 = vunpack.c.l.b16 %v306
    %v1031 = vpack.c.b16 %v744, %v743
    %v1032 = vpack.c.b16 %v746, %v745
    %v1033 = vpack.c.b16 %v748, %v747
    %v1034 = vpack.c.b16 %v750, %v749
    %v1035 = vpack.c.b16 %v752, %v751
    %v1036 = vpack.c.b16 %v754, %v753
    %v1037 = vpack.c.b16 %v756, %v755
    %v1038 = vpack.c.b16 %v758, %v757
    %v1039 = vpack.c.b16 %v760, %v759
    %v1040 = vpack.c.b16 %v762, %v761
    %v1041 = vpack.c.b16 %v764, %v763
    %v1042 = vpack.c.b16 %v766, %v765
    %v1043 = vpack.c.b16 %v768, %v767
    %v1044 = vpack.c.b16 %v770, %v769
    %v1045 = vpack.c.b16 %v772, %v771
    %v1046 = vpack.c.b16 %v774, %v773
    %v1047 = vpack.c.b16 %v776, %v775
    %v1048 = vpack.c.b16 %v778, %v777
    %v1049 = vpack.c.b16 %v780, %v779
    %v1050 = vpack.c.b16 %v782, %v781
    %v1051 = vpack.c.b16 %v784, %v783
    %v1052 = vpack.c.b16 %v786, %v785
    %v1053 = vpack.c.b16 %v788, %v787
    %v1054 = vpack.c.b16 %v790, %v789
    %v1055 = vpack.c.b16 %v792, %v791
    %v1056 = vpack.c.b16 %v794, %v793
    %v1057 = vpack.c.b16 %v796, %v795
    %v1058 = vpack.c.b16 %v798, %v797
    %v1059 = vpack.c.b16 %v800, %v799
    %v1060 = vpack.c.b16 %v802, %v801
    %v1061 = vpack.c.b16 %v804, %v803
    %v1062 = vpack.c.b16 %v806, %v805
    %v1063 = vpack.c.b16 %v808, %v807
    %v1064 = vpack.c.b16 %v810, %v809
    %v1065 = vpack.c.b16 %v812, %v811
    %v1066 = vpack.c.b16 %v814, %v813
    %v1067 = vpack.c.b16 %v816, %v815
    %v1068 = vpack.c.b16 %v818, %v817
    %v1069 = vpack.c.b16 %v820, %v819
    %v1070 = vpack.c.b16 %v822, %v821
    %v1071 = vpack.c.b16 %v824, %v823
    %v1072 = vpack.c.b16 %v826, %v825
    %v1073 = vpack.c.b16 %v828, %v827
    %v1074 = vpack.c.b16 %v830, %v829
    %v1075 = vpack.c.b16 %v832, %v831
    %v1076 = vpack.c.b16 %v834, %v833
    %v1077 = vpack.c.b16 %v836, %v835
    %v1078 = vpack.c.b16 %v838, %v837
    %v1079 = vpack.c.b16 %v840, %v839
    %v1080 = vpack.c.b16 %v842, %v841
    %v1081 = vpack.c.b16 %v844, %v843
    %v1082 = vpack.c.b16 %v846, %v845
    %v1083 = vpack.c.b16 %v848, %v847
    %v1084 = vpack.c.b16 %v850, %v849
    %v1085 = vpack.c.b16 %v852, %v851
    %v1086 = vpack.c.b16 %v854, %v853
    %v1087 = vpack.c.b16 %v856, %v855
    %v1088 = vpack.c.b16 %v858, %v857
    %v1089 = vpack.c.b16 %v860, %v859
    %v1090 = vpack.c.b16 %v862, %v861
    %v1091 = vpack.c.b16 %v864, %v863
    %v1092 = vpack.c.b16 %v866, %v865
    %v1093 = vpack.c.b16 %v868, %v867
    %v1094 = vpack.c.b16 %v870, %v869
    %v1095 = vpack.c.b16 %v872, %v871
    %v1096 = vpack.c.b16 %v874, %v873
    %v1097 = vpack.c.b16 %v876, %v875
    %v1098 = vpack.c.b16 %v878, %v877
    %v1099 = vpack.c.b16 %v880, %v879
    %v1100 = vpack.c.b16 %v882, %v881
    %v1101 = vpack.c.b16 %v884, %v883
    %v1102 = vpack.c.b16 %v886, %v885
    %v1103 = vpack.c.b16 %v888, %v887
    %v1104 = vpack.c.b16 %v890, %v889
    %v1105 = vpack.c.b16 %v892, %v891
    %v1106 = vpack.c.b16 %v894, %v893
    %v1107 = vpack.c.b16 %v896, %v895
    %v1108 = vpack.c.b16 %v898, %v897
    %v1109 = vpack.c.b16 %v900, %v899
    %v1110 = vpack.c.b16 %v902, %v901
    %v1111 = vpack.c.b16 %v904, %v903
    %v1112 = vpack.c.b16 %v906, %v905
    %v1113 = vpack.c.b16 %v908, %v907
    %v1114 = vpack.c.b16 %v910, %v909
    %v1115 = vpack.c.b16 %v912, %v911
    %v1116 = vpack.c.b16 %v914, %v913
    %v1117 = vpack.c.b16 %v916, %v915
    %v1118 = vpack.c.b16 %v918, %v917
    %v1119 = vpack.c.b16 %v920, %v919
    %v1120 = vpack.c.b16 %v922, %v921
    %v1121 = vpack.c.b16 %v924, %v923
    %v1122 = vpack.c.b16 %v926, %v925
    %v1123 = vpack.c.b16 %v928, %v927
    %v1124 = vpack.c.b16 %v930, %v929
    %v1125 = vpack.c.b16 %v932, %v931
    %v1126 = vpack.c.b16 %v934, %v933
    %v1127 = vpack.c.b16 %v936, %v935
    %v1128 = vpack.c.b16 %v938, %v937
    %v1129 = vpack.c.b16 %v940, %v939
    %v1130 = vpack.c.b16 %v942, %v941
    %v1131 = vpack.c.b16 %v944, %v943
    %v1132 = vpack.c.b16 %v946, %v945
    %v1133 = vpack.c.b16 %v948, %v947
    %v1134 = vpack.c.b16 %v950, %v949
    %v1135 = vpack.c.b16 %v952, %v951
    %v1136 = vpack.c.b16 %v954, %v953
    %v1137 = vpack.c.b16 %v956, %v955
    %v1138 = vpack.c.b16 %v958, %v957
    %v1139 = vpack.c.b16 %v960, %v959
    %v1140 = vpack.c.b16 %v962, %v961
    %v1141 = vpack.c.b16 %v964, %v963
    %v1142 = vpack.c.b16 %v966, %v965
    %v1143 = vpack.c.b16 %v968, %v967
    %v1144 = vpack.c.b16 %v970, %v969
    %v1145 = vpack.c.b16 %v972, %v971
    %v1146 = vpack.c.b16 %v974, %v973
    %v1147 = vpack.c.b16 %v976, %v975
    %v1148 = vpack.c.b16 %v978, %v977
    %v1149 = vpack.c.b16 %v980, %v979
    %v1150 = vpack.c.b16 %v982, %v981
    %v1151 = vpack.c.b16 %v984, %v983
    %v1152 = vpack.c.b16 %v986, %v985
    %v1153 = vpack.c.b16 %v988, %v987
    %v1154 = vpack.c.b16 %v990, %v989
    %v1155 = vpack.c.b16 %v992, %v991
    %v1156 = vpack.c.b16 %v994, %v993
    %v1157 = vpack.c.b16 %v996, %v995
    %v1158 = vpack.c.b16 %v998, %v997
    %v1159 = vpack.c.b16 %v1000, %v999
    %v1160 = vpack.c.b16 %v1002, %v1001
    %v1161 = vpack.c.b16 %v1004, %v1003
    %v1162 = vpack.c.b16 %v1006, %v1005
    %v1163 = vpack.c.b16 %v1008, %v1007
    %v1164 = vpack.c.b16 %v1010, %v1009
    %v1165 = vpack.c.b16 %v1012, %v1011
    %v1166 = vpack.c.b16 %v1014, %v1013
    %v1167 = vpack.c.b16 %v1016, %v1015
    %v1168 = vpack.c.b16 %v1018, %v1017
    %v1169 = vpack.c.b16 %v1020, %v1019
    %v1170 = vpack.c.b16 %v1022, %v1021
    %v1171 = vpack.c.b16 %v1024, %v1023
    %v1172 = vpack.c.b16 %v1026, %v1025
    %v1173 = vpack.c.b16 %v1028, %v1027
    %v1174 = vpack.c.b16 %v1030, %v1029
    %1319 = vmatprep.subr.bf16.mxu0 0
    %1320 = vmatpush1.bf16.msra.mxu0 %v1031
    %1321 = vmatprep.subr.bf16.mxu0 0
    %1322 = vmatpush1.bf16.msra.mxu0 %v1032
    %1323 = vmatprep.subr.bf16.mxu0 0
    %1324 = vmatpush1.bf16.msra.mxu0 %v1033
    %1325 = vmatprep.subr.bf16.mxu0 0
    %1326 = vmatpush1.bf16.msra.mxu0 %v1034
    %1327 = vmatprep.subr.bf16.mxu0 0
    %1328 = vmatpush1.bf16.msra.mxu0 %v1035
    %1329 = vmatprep.subr.bf16.mxu0 0
    %1330 = vmatpush1.bf16.msra.mxu0 %v1036
    %1331 = vmatprep.subr.bf16.mxu0 0
    %1332 = vmatpush1.bf16.msra.mxu0 %v1037
    %1333 = vmatprep.subr.bf16.mxu0 0
    %1334 = vmatpush1.bf16.msra.mxu0 %v1038
    %1335 = vmatprep.subr.bf16.mxu0 0
    %1336 = vmatpush1.bf16.msra.mxu0 %v1039
    %1337 = vmatprep.subr.bf16.mxu0 0
    %1338 = vmatpush1.bf16.msra.mxu0 %v1040
    %1339 = vmatprep.subr.bf16.mxu0 0
    %1340 = vmatpush1.bf16.msra.mxu0 %v1041
    %1341 = vmatprep.subr.bf16.mxu0 0
    %1342 = vmatpush1.bf16.msra.mxu0 %v1042
    %1343 = vmatprep.subr.bf16.mxu0 0
    %1344 = vmatpush1.bf16.msra.mxu0 %v1043
    %1345 = vmatprep.subr.bf16.mxu0 0
    %1346 = vmatpush1.bf16.msra.mxu0 %v1044
    %1347 = vmatprep.subr.bf16.mxu0 0
    %1348 = vmatpush1.bf16.msra.mxu0 %v1045
    %1349 = vmatprep.subr.bf16.mxu0 0
    %1350 = vmatpush1.bf16.msra.mxu0 %v1046
    %1351 = vmatprep.mubr.bf16.mxu0 %v354
    %1352 = vmatmul.mubr.bf16.gmra.mrb[0].mxu0 %v340
    %v1353 = vpop.f32.mrb[0].mxu0
    %v1354 = vadd.f32 %v312, %v1353
    %v1355 = vpop.f32.mrb[0].mxu0
    %v1356 = vpop.f32.mrb[0].mxu0
    %v1357 = vpop.f32.mrb[0].mxu0
    %1358 = vdwg.mxu0
    %1359 = vmatprep.subr.bf16.mxu0 0
    %1360 = vmatpush1.bf16.msra.mxu0 %v1047
    %1361 = vmatprep.subr.bf16.mxu0 0
    %1362 = vmatpush1.bf16.msra.mxu0 %v1048
    %1363 = vmatprep.subr.bf16.mxu0 0
    %1364 = vmatpush1.bf16.msra.mxu0 %v1049
    %1365 = vmatprep.subr.bf16.mxu0 0
    %1366 = vmatpush1.bf16.msra.mxu0 %v1050
    %1367 = vmatprep.subr.bf16.mxu0 0
    %1368 = vmatpush1.bf16.msra.mxu0 %v1051
    %1369 = vmatprep.subr.bf16.mxu0 0
    %1370 = vmatpush1.bf16.msra.mxu0 %v1052
    %1371 = vmatprep.subr.bf16.mxu0 0
    %1372 = vmatpush1.bf16.msra.mxu0 %v1053
    %1373 = vmatprep.subr.bf16.mxu0 0
    %1374 = vmatpush1.bf16.msra.mxu0 %v1054
    %1375 = vmatprep.subr.bf16.mxu0 0
    %1376 = vmatpush1.bf16.msra.mxu0 %v1055
    %1377 = vmatprep.subr.bf16.mxu0 0
    %1378 = vmatpush1.bf16.msra.mxu0 %v1056
    %1379 = vmatprep.subr.bf16.mxu0 0
    %1380 = vmatpush1.bf16.msra.mxu0 %v1057
    %1381 = vmatprep.subr.bf16.mxu0 0
    %1382 = vmatpush1.bf16.msra.mxu0 %v1058
    %1383 = vmatprep.subr.bf16.mxu0 0
    %1384 = vmatpush1.bf16.msra.mxu0 %v1059
    %1385 = vmatprep.subr.bf16.mxu0 0
    %1386 = vmatpush1.bf16.msra.mxu0 %v1060
    %1387 = vmatprep.subr.bf16.mxu0 0
    %1388 = vmatpush1.bf16.msra.mxu0 %v1061
    %1389 = vmatprep.subr.bf16.mxu0 0
    %1390 = vmatpush1.bf16.msra.mxu0 %v1062
    %1391 = vmatprep.mubr.bf16.mxu0 %v364
    %1392 = vmatmul.mubr.bf16.gmra.mrb[0].mxu0 %v362
    %v1393 = vpop.f32.mrb[0].mxu0
    %v1394 = vadd.f32 %v1354, %v1393
    %v1395 = vpop.f32.mrb[0].mxu0
    %v1396 = vpop.f32.mrb[0].mxu0
    %v1397 = vpop.f32.mrb[0].mxu0
    %1398 = vdwg.mxu0
    %1399 = vmatprep.subr.bf16.mxu0 0
    %1400 = vmatpush1.bf16.msra.mxu0 %v1063
    %1401 = vmatprep.subr.bf16.mxu0 0
    %1402 = vmatpush1.bf16.msra.mxu0 %v1064
    %1403 = vmatprep.subr.bf16.mxu0 0
    %1404 = vmatpush1.bf16.msra.mxu0 %v1065
    %1405 = vmatprep.subr.bf16.mxu0 0
    %1406 = vmatpush1.bf16.msra.mxu0 %v1066
    %1407 = vmatprep.subr.bf16.mxu0 0
    %1408 = vmatpush1.bf16.msra.mxu0 %v1067
    %1409 = vmatprep.subr.bf16.mxu0 0
    %1410 = vmatpush1.bf16.msra.mxu0 %v1068
    %1411 = vmatprep.subr.bf16.mxu0 0
    %1412 = vmatpush1.bf16.msra.mxu0 %v1069
    %1413 = vmatprep.subr.bf16.mxu0 0
    %1414 = vmatpush1.bf16.msra.mxu0 %v1070
    %1415 = vmatprep.subr.bf16.mxu0 0
    %1416 = vmatpush1.bf16.msra.mxu0 %v1071
    %1417 = vmatprep.subr.bf16.mxu0 0
    %1418 = vmatpush1.bf16.msra.mxu0 %v1072
    %1419 = vmatprep.subr.bf16.mxu0 0
    %1420 = vmatpush1.bf16.msra.mxu0 %v1073
    %1421 = vmatprep.subr.bf16.mxu0 0
    %1422 = vmatpush1.bf16.msra.mxu0 %v1074
    %1423 = vmatprep.subr.bf16.mxu0 0
    %1424 = vmatpush1.bf16.msra.mxu0 %v1075
    %1425 = vmatprep.subr.bf16.mxu0 0
    %1426 = vmatpush1.bf16.msra.mxu0 %v1076
    %1427 = vmatprep.subr.bf16.mxu0 0
    %1428 = vmatpush1.bf16.msra.mxu0 %v1077
    %1429 = vmatprep.subr.bf16.mxu0 0
    %1430 = vmatpush1.bf16.msra.mxu0 %v1078
    %1431 = vmatprep.mubr.bf16.mxu0 %v361
    %1432 = vmatmul.mubr.bf16.gmra.mrb[0].mxu0 %v347
    %v1433 = vpop.f32.mrb[0].mxu0
    %v1434 = vadd.f32 %v1394, %v1433
    %v1435 = vpop.f32.mrb[0].mxu0
    %v1436 = vpop.f32.mrb[0].mxu0
    %v1437 = vpop.f32.mrb[0].mxu0
    %1438 = vdwg.mxu0
    %1439 = vmatprep.subr.bf16.mxu0 0
    %1440 = vmatpush1.bf16.msra.mxu0 %v1079
    %1441 = vmatprep.subr.bf16.mxu0 0
    %1442 = vmatpush1.bf16.msra.mxu0 %v1080
    %1443 = vmatprep.subr.bf16.mxu0 0
    %1444 = vmatpush1.bf16.msra.mxu0 %v1081
    %1445 = vmatprep.subr.bf16.mxu0 0
    %1446 = vmatpush1.bf16.msra.mxu0 %v1082
    %1447 = vmatprep.subr.bf16.mxu0 0
    %1448 = vmatpush1.bf16.msra.mxu0 %v1083
    %1449 = vmatprep.subr.bf16.mxu0 0
    %1450 = vmatpush1.bf16.msra.mxu0 %v1084
    %1451 = vmatprep.subr.bf16.mxu0 0
    %1452 = vmatpush1.bf16.msra.mxu0 %v1085
    %1453 = vmatprep.subr.bf16.mxu0 0
    %1454 = vmatpush1.bf16.msra.mxu0 %v1086
    %1455 = vmatprep.subr.bf16.mxu0 0
    %1456 = vmatpush1.bf16.msra.mxu0 %v1087
    %1457 = vmatprep.subr.bf16.mxu0 0
    %1458 = vmatpush1.bf16.msra.mxu0 %v1088
    %1459 = vmatprep.subr.bf16.mxu0 0
    %1460 = vmatpush1.bf16.msra.mxu0 %v1089
    %1461 = vmatprep.subr.bf16.mxu0 0
    %1462 = vmatpush1.bf16.msra.mxu0 %v1090
    %1463 = vmatprep.subr.bf16.mxu0 0
    %1464 = vmatpush1.bf16.msra.mxu0 %v1091
    %1465 = vmatprep.subr.bf16.mxu0 0
    %1466 = vmatpush1.bf16.msra.mxu0 %v1092
    %1467 = vmatprep.subr.bf16.mxu0 0
    %1468 = vmatpush1.bf16.msra.mxu0 %v1093
    %1469 = vmatprep.subr.bf16.mxu0 0
    %1470 = vmatpush1.bf16.msra.mxu0 %v1094
    %1471 = vmatprep.mubr.bf16.mxu0 %v365
    %1472 = vmatmul.mubr.bf16.gmra.mrb[0].mxu0 %v363
    %v1473 = vpop.f32.mrb[0].mxu0
    %v1474 = vadd.f32 %v1434, %v1473
    %v1475 = vpop.f32.mrb[0].mxu0
    %v1476 = vpop.f32.mrb[0].mxu0
    %v1477 = vpop.f32.mrb[0].mxu0
    %1478 = vdwg.mxu0
    %1479 = vmatprep.subr.bf16.mxu0 0
    %1480 = vmatpush1.bf16.msra.mxu0 %v1095
    %1481 = vmatprep.subr.bf16.mxu0 0
    %1482 = vmatpush1.bf16.msra.mxu0 %v1096
    %1483 = vmatprep.subr.bf16.mxu0 0
    %1484 = vmatpush1.bf16.msra.mxu0 %v1097
    %1485 = vmatprep.subr.bf16.mxu0 0
    %1486 = vmatpush1.bf16.msra.mxu0 %v1098
    %1487 = vmatprep.subr.bf16.mxu0 0
    %1488 = vmatpush1.bf16.msra.mxu0 %v1099
    %1489 = vmatprep.subr.bf16.mxu0 0
    %1490 = vmatpush1.bf16.msra.mxu0 %v1100
    %1491 = vmatprep.subr.bf16.mxu0 0
    %1492 = vmatpush1.bf16.msra.mxu0 %v1101
    %1493 = vmatprep.subr.bf16.mxu0 0
    %1494 = vmatpush1.bf16.msra.mxu0 %v1102
    %1495 = vmatprep.subr.bf16.mxu0 0
    %1496 = vmatpush1.bf16.msra.mxu0 %v1103
    %1497 = vmatprep.subr.bf16.mxu0 0
    %1498 = vmatpush1.bf16.msra.mxu0 %v1104
    %1499 = vmatprep.subr.bf16.mxu0 0
    %1500 = vmatpush1.bf16.msra.mxu0 %v1105
    %1501 = vmatprep.subr.bf16.mxu0 0
    %1502 = vmatpush1.bf16.msra.mxu0 %v1106
    %1503 = vmatprep.subr.bf16.mxu0 0
    %1504 = vmatpush1.bf16.msra.mxu0 %v1107
    %1505 = vmatprep.subr.bf16.mxu0 0
    %1506 = vmatpush1.bf16.msra.mxu0 %v1108
    %1507 = vmatprep.subr.bf16.mxu0 0
    %1508 = vmatpush1.bf16.msra.mxu0 %v1109
    %1509 = vmatprep.subr.bf16.mxu0 0
    %1510 = vmatpush1.bf16.msra.mxu0 %v1110
    %1511 = vmatprep.mubr.bf16.mxu0 %v403
    %1512 = vmatmul.mubr.bf16.gmra.mrb[0].mxu0 %v389
    %v1513 = vpop.f32.mrb[0].mxu0
    %v1514 = vadd.f32 %v1474, %v1513
    %v1515 = vpop.f32.mrb[0].mxu0
    %v1516 = vpop.f32.mrb[0].mxu0
    %v1517 = vpop.f32.mrb[0].mxu0
    %1518 = vdwg.mxu0
    %1519 = vmatprep.subr.bf16.mxu0 0
    %1520 = vmatpush1.bf16.msra.mxu0 %v1111
    %1521 = vmatprep.subr.bf16.mxu0 0
    %1522 = vmatpush1.bf16.msra.mxu0 %v1112
    %1523 = vmatprep.subr.bf16.mxu0 0
    %1524 = vmatpush1.bf16.msra.mxu0 %v1113
    %1525 = vmatprep.subr.bf16.mxu0 0
    %1526 = vmatpush1.bf16.msra.mxu0 %v1114
    %1527 = vmatprep.subr.bf16.mxu0 0
    %1528 = vmatpush1.bf16.msra.mxu0 %v1115
    %1529 = vmatprep.subr.bf16.mxu0 0
    %1530 = vmatpush1.bf16.msra.mxu0 %v1116
    %1531 = vmatprep.subr.bf16.mxu0 0
    %1532 = vmatpush1.bf16.msra.mxu0 %v1117
    %1533 = vmatprep.subr.bf16.mxu0 0
    %1534 = vmatpush1.bf16.msra.mxu0 %v1118
    %1535 = vmatprep.subr.bf16.mxu0 0
    %1536 = vmatpush1.bf16.msra.mxu0 %v1119
    %1537 = vmatprep.subr.bf16.mxu0 0
    %1538 = vmatpush1.bf16.msra.mxu0 %v1120
    %1539 = vmatprep.subr.bf16.mxu0 0
    %1540 = vmatpush1.bf16.msra.mxu0 %v1121
    %1541 = vmatprep.subr.bf16.mxu0 0
    %1542 = vmatpush1.bf16.msra.mxu0 %v1122
    %1543 = vmatprep.subr.bf16.mxu0 0
    %1544 = vmatpush1.bf16.msra.mxu0 %v1123
    %1545 = vmatprep.subr.bf16.mxu0 0
    %1546 = vmatpush1.bf16.msra.mxu0 %v1124
    %1547 = vmatprep.subr.bf16.mxu0 0
    %1548 = vmatpush1.bf16.msra.mxu0 %v1125
    %1549 = vmatprep.subr.bf16.mxu0 0
    %1550 = vmatpush1.bf16.msra.mxu0 %v1126
    %1551 = vmatprep.mubr.bf16.mxu0 %v413
    %1552 = vmatmul.mubr.bf16.gmra.mrb[0].mxu0 %v411
    %v1553 = vpop.f32.mrb[0].mxu0
    %v1554 = vadd.f32 %v1514, %v1553
    %v1555 = vpop.f32.mrb[0].mxu0
    %v1556 = vpop.f32.mrb[0].mxu0
    %v1557 = vpop.f32.mrb[0].mxu0
    %1558 = vdwg.mxu0
    %1559 = vmatprep.subr.bf16.mxu0 0
    %1560 = vmatpush1.bf16.msra.mxu0 %v1127
    %1561 = vmatprep.subr.bf16.mxu0 0
    %1562 = vmatpush1.bf16.msra.mxu0 %v1128
    %1563 = vmatprep.subr.bf16.mxu0 0
    %1564 = vmatpush1.bf16.msra.mxu0 %v1129
    %1565 = vmatprep.subr.bf16.mxu0 0
    %1566 = vmatpush1.bf16.msra.mxu0 %v1130
    %1567 = vmatprep.subr.bf16.mxu0 0
    %1568 = vmatpush1.bf16.msra.mxu0 %v1131
    %1569 = vmatprep.subr.bf16.mxu0 0
    %1570 = vmatpush1.bf16.msra.mxu0 %v1132
    %1571 = vmatprep.subr.bf16.mxu0 0
    %1572 = vmatpush1.bf16.msra.mxu0 %v1133
    %1573 = vmatprep.subr.bf16.mxu0 0
    %1574 = vmatpush1.bf16.msra.mxu0 %v1134
    %1575 = vmatprep.subr.bf16.mxu0 0
    %1576 = vmatpush1.bf16.msra.mxu0 %v1135
    %1577 = vmatprep.subr.bf16.mxu0 0
    %1578 = vmatpush1.bf16.msra.mxu0 %v1136
    %1579 = vmatprep.subr.bf16.mxu0 0
    %1580 = vmatpush1.bf16.msra.mxu0 %v1137
    %1581 = vmatprep.subr.bf16.mxu0 0
    %1582 = vmatpush1.bf16.msra.mxu0 %v1138
    %1583 = vmatprep.subr.bf16.mxu0 0
    %1584 = vmatpush1.bf16.msra.mxu0 %v1139
    %1585 = vmatprep.subr.bf16.mxu0 0
    %1586 = vmatpush1.bf16.msra.mxu0 %v1140
    %1587 = vmatprep.subr.bf16.mxu0 0
    %1588 = vmatpush1.bf16.msra.mxu0 %v1141
    %1589 = vmatprep.subr.bf16.mxu0 0
    %1590 = vmatpush1.bf16.msra.mxu0 %v1142
    %1591 = vmatprep.mubr.bf16.mxu0 %v410
    %1592 = vmatmul.mubr.bf16.gmra.mrb[0].mxu0 %v396
    %v1593 = vpop.f32.mrb[0].mxu0
    %v1594 = vadd.f32 %v1554, %v1593
    %v1595 = vpop.f32.mrb[0].mxu0
    %v1596 = vpop.f32.mrb[0].mxu0
    %v1597 = vpop.f32.mrb[0].mxu0
    %1598 = vdwg.mxu0
    %1599 = vmatprep.subr.bf16.mxu0 0
    %1600 = vmatpush1.bf16.msra.mxu0 %v1143
    %1601 = vmatprep.subr.bf16.mxu0 0
    %1602 = vmatpush1.bf16.msra.mxu0 %v1144
    %1603 = vmatprep.subr.bf16.mxu0 0
    %1604 = vmatpush1.bf16.msra.mxu0 %v1145
    %1605 = vmatprep.subr.bf16.mxu0 0
    %1606 = vmatpush1.bf16.msra.mxu0 %v1146
    %1607 = vmatprep.subr.bf16.mxu0 0
    %1608 = vmatpush1.bf16.msra.mxu0 %v1147
    %1609 = vmatprep.subr.bf16.mxu0 0
    %1610 = vmatpush1.bf16.msra.mxu0 %v1148
    %1611 = vmatprep.subr.bf16.mxu0 0
    %1612 = vmatpush1.bf16.msra.mxu0 %v1149
    %1613 = vmatprep.subr.bf16.mxu0 0
    %1614 = vmatpush1.bf16.msra.mxu0 %v1150
    %1615 = vmatprep.subr.bf16.mxu0 0
    %1616 = vmatpush1.bf16.msra.mxu0 %v1151
    %1617 = vmatprep.subr.bf16.mxu0 0
    %1618 = vmatpush1.bf16.msra.mxu0 %v1152
    %1619 = vmatprep.subr.bf16.mxu0 0
    %1620 = vmatpush1.bf16.msra.mxu0 %v1153
    %1621 = vmatprep.subr.bf16.mxu0 0
    %1622 = vmatpush1.bf16.msra.mxu0 %v1154
    %1623 = vmatprep.subr.bf16.mxu0 0
    %1624 = vmatpush1.bf16.msra.mxu0 %v1155
    %1625 = vmatprep.subr.bf16.mxu0 0
    %1626 = vmatpush1.bf16.msra.mxu0 %v1156
    %1627 = vmatprep.subr.bf16.mxu0 0
    %1628 = vmatpush1.bf16.msra.mxu0 %v1157
    %1629 = vmatprep.subr.bf16.mxu0 0
    %1630 = vmatpush1.bf16.msra.mxu0 %v1158
    %1631 = vmatprep.mubr.bf16.mxu0 %v414
    %1632 = vmatmul.mubr.bf16.gmra.mrb[0].mxu0 %v412
    %v1633 = vpop.f32.mrb[0].mxu0
    %v1634 = vadd.f32 %v1594, %v1633
    %v1635 = vpop.f32.mrb[0].mxu0
    %v1636 = vpop.f32.mrb[0].mxu0
    %v1637 = vpop.f32.mrb[0].mxu0
    %1638 = vdwg.mxu0
    %1639 = vmatprep.subr.bf16.mxu0 0
    %1640 = vmatpush1.bf16.msra.mxu0 %v1159
    %1641 = vmatprep.subr.bf16.mxu0 0
    %1642 = vmatpush1.bf16.msra.mxu0 %v1160
    %1643 = vmatprep.subr.bf16.mxu0 0
    %1644 = vmatpush1.bf16.msra.mxu0 %v1161
    %1645 = vmatprep.subr.bf16.mxu0 0
    %1646 = vmatpush1.bf16.msra.mxu0 %v1162
    %1647 = vmatprep.subr.bf16.mxu0 0
    %1648 = vmatpush1.bf16.msra.mxu0 %v1163
    %1649 = vmatprep.subr.bf16.mxu0 0
    %1650 = vmatpush1.bf16.msra.mxu0 %v1164
    %1651 = vmatprep.subr.bf16.mxu0 0
    %1652 = vmatpush1.bf16.msra.mxu0 %v1165
    %1653 = vmatprep.subr.bf16.mxu0 0
    %1654 = vmatpush1.bf16.msra.mxu0 %v1166
    %1655 = vmatprep.subr.bf16.mxu0 0
    %1656 = vmatpush1.bf16.msra.mxu0 %v1167
    %1657 = vmatprep.subr.bf16.mxu0 0
    %1658 = vmatpush1.bf16.msra.mxu0 %v1168
    %1659 = vmatprep.subr.bf16.mxu0 0
    %1660 = vmatpush1.bf16.msra.mxu0 %v1169
    %1661 = vmatprep.subr.bf16.mxu0 0
    %1662 = vmatpush1.bf16.msra.mxu0 %v1170
    %1663 = vmatprep.subr.bf16.mxu0 0
    %1664 = vmatpush1.bf16.msra.mxu0 %v1171
    %1665 = vmatprep.subr.bf16.mxu0 0
    %1666 = vmatpush1.bf16.msra.mxu0 %v1172
    %1667 = vmatprep.subr.bf16.mxu0 0
    %1668 = vmatpush1.bf16.msra.mxu0 %v1173
    %1669 = vmatprep.subr.bf16.mxu0 0
    %1670 = vmatpush1.bf16.msra.mxu0 %v1174
    %1671 = vmatprep.mubr.bf16.mxu0 %v436
    %1672 = vmatmul.mubr.bf16.gmra.mrb[0].mxu0 %v429
    %v1673 = vpop.f32.mrb[0].mxu0
    %v1674 = vadd.f32 %v1634, %v1673
    %v1675 = vpop.f32.mrb[0].mxu0
    %v1676 = vpop.f32.mrb[0].mxu0
    %v1677 = vpop.f32.mrb[0].mxu0
    %1678 = vdwg.mxu0
    %v1679 = vmul.f32 %v1674, %v1674
    %vm1680 = vcmask 1041408
    %v1681 = vsel %vm1680, %v1679, 0.0
    %1682 = vadd.xlane.f32.xlu0 %v1681
    %v1683 = vpop.xlane.xlu0 %1682
    %v1684 = vrsqrt.pop %v1683
    %v1685 = vmul.f32 %v1683, %v1684
    %vm1686 = vcmp.eq.f32.partialorder %v1683, inf
    %v1687 = vsel %vm1686, %v1683, %v1685
    %vm1688 = vcmp.eq.f32.partialorder %v1683, 0.0
    %v1689 = vand.u32 %v1683, 2147483648
    %v1690 = vsel %vm1688, %v1689, %v1687
    %v1691 = vmax.f32 %v1690, 1e-12
    %v1692 = vrcp.pop %v1691
    %v1693 = vmul.f32 %v1674, %v1692
    %1694 = vst [vmem:[#allocation2] sm:$0x3] %v1693
    // Predicated region
    $region14: #{fenet1_forward.5} parent=1 // pred_check
      _
    $region15: #{fenet1_forward.5} parent=1 // pred_check_branch
      %1696 = sbr.rel (0) target = $region17
    $region16: #{fenet1_forward.5} parent=1 // pred_region
      %s1698 = ssub.s32 32, 32
      %1699 = vsyncadd [#allocation3], %s1698
      %s1701 = sshll.u32 [#allocation2], 4
      %s1702 = int_to_ptr.vmem [resolvable:$true] %s1701
      %1704 = dma.vmem_to_hbm [thread:$0]  %s1702, 32, %s3, [#allocation3]
    $region17: #{fenet1_forward.5} parent=1 // pred_fallthru
      _
    // Predicated region
    $region18: #{fenet1_forward.5} parent=1 // pred_check
      _
    $region19: #{fenet1_forward.5} parent=1 // pred_check_branch
      %1706 = sbr.rel (0) target = $region21
    $region20: #{fenet1_forward.5} parent=1 // pred_region
      %1707 = dma.done [#allocation3], 32
    $region21: #{fenet1_forward.5} parent=1 // pred_fallthru
      _
    %1708 = vsyncpa [#allocation3], 1

</llo_original>
